<compile_context>
chip_gen: v7x
topology: tpu7x:2x2x1
jax: 0.10.0
libtpu: 0.0.40
codegen_flags: <defaults>
</compile_context>

<pallas_src>
import functools

import jax
import jax.numpy as jnp
from jax.experimental import pallas as pl
from jax.experimental.pallas import tpu as pltpu

LN_EPS = 1e-5  # PyTorch nn.LayerNorm default


def _layernorm(x, gamma, beta):
    mu = jnp.mean(x, axis=-1, keepdims=True)
    var = jnp.mean((x - mu) ** 2, axis=-1, keepdims=True)
    return (x - mu) * jax.lax.rsqrt(var + LN_EPS) * gamma + beta


def _erf_poly(x):
    # Abramowitz & Stegun 7.1.26 (max abs error ~1.5e-7): only mul/add/div/exp, so it
    # lowers on Mosaic unconditionally and matches PyTorch's exact-erf GELU far below
    # bf16 resolution.
    a1, a2, a3, a4, a5 = 0.254829592, -0.284496736, 1.421413741, -1.453152027, 1.061405429
    r = 0.3275911
    sgn = jnp.where(x >= 0.0, 1.0, -1.0)
    ax = jnp.abs(x)
    t = 1.0 / (1.0 + r * ax)
    poly = ((((a5 * t + a4) * t + a3) * t + a2) * t + a1) * t
    return sgn * (1.0 - poly * jnp.exp(-ax * ax))


def _gelu_exact(x):
    return 0.5 * x * (1.0 + _erf_poly(x * 0.7071067811865476))


def block_kernel(x_ref, ln1g_ref, ln1b_ref, wqkv_ref, wproj_ref, bproj_ref,
                 ln2g_ref, ln2b_ref, w1_ref, b1_ref, w2_ref, b2_ref,
                 out_ref, orth_ref, *, num_heads):
    f32, bf16 = jnp.float32, jnp.bfloat16
    Bt, N, C = x_ref.shape
    H = num_heads
    hd = C // H

    x2d = x_ref[...].reshape(Bt * N, C)                                   # (Bt*N, C) f32

    # ---- norm1 (f32 stats) + single lane-dense QKV projection (bf16 MXU, f32 acc) ----
    xn = _layernorm(x2d, ln1g_ref[0], ln1b_ref[0]).astype(bf16)
    qkv = jnp.dot(xn, wqkv_ref[...], preferred_element_type=f32)          # (Bt*N, 3C)

    # Head split using only leading-dim reshapes + minor-two-dims transposes (both have
    # guaranteed Mosaic lowering).  K is left as (z, hd, N) so the score matmul is NN.
    def to_heads(m2d, transpose_back):
        m = jnp.swapaxes(m2d.reshape(Bt, N, C), -1, -2)                   # (Bt, C, N)
        m = m.reshape(Bt * H, hd, N)                                      # (Bt*H, hd, N)
        return jnp.swapaxes(m, -1, -2) if transpose_back else m

    q_h = to_heads(qkv[:, 0 * C:1 * C], True)     # (Bt*H, N, hd); softmax scale folded in Wq
    kt_h = to_heads(qkv[:, 1 * C:2 * C], False)   # (Bt*H, hd, N)
    v_h = to_heads(qkv[:, 2 * C:3 * C], True)     # (Bt*H, N, hd)

    # ---- scores + pre-softmax orth row (lane-dense (Bt, H, N) store) ----
    s = jnp.einsum('znd,zdm->znm', q_h.astype(bf16), kt_h.astype(bf16),
                   preferred_element_type=f32)                            # (Bt*H, N, N)
    orth_ref[...] = s[:, 0, :].reshape(Bt, H, N)

    # ---- softmax (f32 stats) ----
    s = s - jnp.max(s, axis=-1, keepdims=True)
    p = jnp.exp(s)
    denom = jnp.sum(p, axis=-1, keepdims=True)
    # exact reciprocal keeps bit-parity with the reference; approx=True (EUP) is the
    # production choice when bit-exactness is not required.
    p = p * pl.reciprocal(denom, approx=False)

    # ---- attention output; fused head-merge + output projection (one (Bt*N,C)@(C,C)) ----
    o = jnp.einsum('znm,zmd->znd', p.astype(bf16), v_h.astype(bf16),
                   preferred_element_type=f32)                            # (Bt*H, N, hd)
    o = jnp.swapaxes(o, -1, -2).reshape(Bt, C, N)                         # merge heads (lanes h-major)
    o2d = jnp.swapaxes(o, -1, -2).reshape(Bt * N, C)                      # (Bt*N, C)
    proj = jnp.dot(o2d.astype(bf16), wproj_ref[...],
                   preferred_element_type=f32) + bproj_ref[0]
    x1 = x2d + proj                                                       # residual 1 (DropPath = id)

    # ---- norm2 + MLP (exact-erf GELU) ----
    xn2 = _layernorm(x1, ln2g_ref[0], ln2b_ref[0]).astype(bf16)
    h1 = jnp.dot(xn2, w1_ref[...], preferred_element_type=f32) + b1_ref[0]
    h1 = _gelu_exact(h1)
    h2 = jnp.dot(h1.astype(bf16), w2_ref[...], preferred_element_type=f32) + b2_ref[0]
    out_ref[...] = (x1 + h2).reshape(Bt, N, C)                            # residual 2


def _const_spec(shape):
    """Constant-index (resident) block; single-buffered where the jax version allows."""
    index_map = lambda *_: (0,) * len(shape)
    try:
        return pl.BlockSpec(shape, index_map, pipeline_mode=pl.Buffered(1))
    except (AttributeError, TypeError):       # graceful fallback on older jax
        return pl.BlockSpec(shape, index_map)


def _vmem_limit_bytes(Bt, N, C, H, Hm):
    """Scoped-VMEM request sized to the working set; capped at 48 MiB for v7x (64 MiB part)."""
    bf16, f32 = 2, 4
    weights = (3 * C * C + C * C + 2 * C * Hm) * bf16 + (6 * C + Hm) * f32   # Buffered(1)
    io = 2 * (2 * Bt * N * C * f32)                       # x + out, double-buffered
    acts = Bt * N * (6 * C + 2 * Hm) * f32                # qkv, head copies, mlp hidden
    scores = 3 * Bt * H * N * N * f32                     # s, p (+ relayout slack)
    est = weights + io + acts + scores
    return int(min(max(2 * est, 32 * 1024 * 1024), 48 * 1024 * 1024))


def vit_block(x, prep, num_heads, batch_tile=None):
    B, N, C = x.shape
    H = num_heads
    assert C % H == 0
    Hm = prep["w_fc1"].shape[1]
    if batch_tile is None:
        batch_tile = 2 if B % 2 == 0 else 1
    Bt = batch_tile
    assert B % Bt == 0

    x_map = lambda b: (b, 0, 0)
    kernel = functools.partial(block_kernel, num_heads=H)

    out, orth = pl.pallas_call(
        kernel,
        out_shape=(jax.ShapeDtypeStruct((B, N, C), jnp.float32),
                   jax.ShapeDtypeStruct((B, H, N), jnp.float32)),   # lane-dense orth rows
        grid_spec=pltpu.PrefetchScalarGridSpec(
            num_scalar_prefetch=0,
            grid=(B // Bt,),
            in_specs=[
                pl.BlockSpec((Bt, N, C), x_map),   # x (f32)
                _const_spec((1, C)),               # norm1 gamma (f32)
                _const_spec((1, C)),               # norm1 beta  (f32)
                _const_spec((C, 3 * C)),           # W_qkv (bf16, scale folded into q cols)
                _const_spec((C, C)),               # W_proj (bf16)
                _const_spec((1, C)),               # proj bias (f32)
                _const_spec((1, C)),               # norm2 gamma
                _const_spec((1, C)),               # norm2 beta
                _const_spec((C, Hm)),              # fc1 weight (bf16)
                _const_spec((1, Hm)),              # fc1 bias (f32)
                _const_spec((Hm, C)),              # fc2 weight (bf16)
                _const_spec((1, C)),               # fc2 bias (f32)
            ],
            out_specs=[
                pl.BlockSpec((Bt, N, C), x_map),
                pl.BlockSpec((Bt, H, N), x_map),
            ],
        ),
        compiler_params=pltpu.CompilerParams(
            dimension_semantics=("parallel",),
            vmem_limit_bytes=_vmem_limit_bytes(Bt, N, C, H, Hm),
        ),
    )(x, prep["ln1_g"], prep["ln1_b"], prep["w_qkv"], prep["w_proj"], prep["b_proj"],
      prep["ln2_g"], prep["ln2_b"], prep["w_fc1"], prep["b_fc1"], prep["w_fc2"], prep["b_fc2"])

    # orth_proto = pre-softmax attn[:, :, 0, 1:]  (the slice is free layout plumbing in JAX)
    return out, orth[:, :, 1:]


# --------------------------------------------------------------------------------------
# Parameter construction / preparation and pure-JAX references for verification.
# --------------------------------------------------------------------------------------

def init_params(key, dim, num_heads, mlp_ratio=4.0):
    hidden = int(dim * mlp_ratio)
    ks = jax.random.split(key, 7)
    std = 0.02
    return {
        "ln1_g": jnp.ones((1, dim), jnp.float32),
        "ln1_b": jnp.zeros((1, dim), jnp.float32),
        # weights stored already transposed ((in, out)) for x @ W ; qkv_bias=False
        "w_qkv": std * jax.random.normal(ks[0], (dim, 3 * dim), jnp.float32),
        "w_proj": std * jax.random.normal(ks[1], (dim, dim), jnp.float32),
        "b_proj": std * jax.random.normal(ks[2], (1, dim), jnp.float32),
        "ln2_g": jnp.ones((1, dim), jnp.float32),
        "ln2_b": jnp.zeros((1, dim), jnp.float32),
        "w_fc1": std * jax.random.normal(ks[3], (dim, hidden), jnp.float32),
        "b_fc1": std * jax.random.normal(ks[4], (1, hidden), jnp.float32),
        "w_fc2": std * jax.random.normal(ks[5], (hidden, dim), jnp.float32),
        "b_fc2": std * jax.random.normal(ks[6], (1, dim), jnp.float32),
    }


def prepare_kernel_params(params, num_heads):
    """bf16 weights with the softmax scale folded into the Wq columns (wrapper-side plumbing)."""
    C = params["w_qkv"].shape[0]
    hd = C // num_heads
    scale = hd ** (-0.5)
    bf16 = jnp.bfloat16
    prep = dict(params)
    prep["w_qkv"] = params["w_qkv"].at[:, :C].multiply(scale).astype(bf16)
    prep["w_proj"] = params["w_proj"].astype(bf16)
    prep["w_fc1"] = params["w_fc1"].astype(bf16)
    prep["w_fc2"] = params["w_fc2"].astype(bf16)
    return prep


def vit_block_reference_bf16(x, prep, num_heads):
    """Pure-JAX reference mirroring the kernel math (bf16 matmul inputs, f32 accumulation)."""
    f32, bf16 = jnp.float32, jnp.bfloat16
    B, N, C = x.shape
    H = num_heads
    hd = C // H
    xn = _layernorm(x, prep["ln1_g"][0], prep["ln1_b"][0]).astype(bf16)
    qkv = jnp.einsum('bnc,ck->bnk', xn, prep["w_qkv"], preferred_element_type=f32)
    q = qkv[..., 0 * C:1 * C].reshape(B, N, H, hd).transpose(0, 2, 1, 3)
    k = qkv[..., 1 * C:2 * C].reshape(B, N, H, hd).transpose(0, 2, 1, 3)
    v = qkv[..., 2 * C:3 * C].reshape(B, N, H, hd).transpose(0, 2, 1, 3)
    s = jnp.einsum('bhnd,bhmd->bhnm', q.astype(bf16), k.astype(bf16), preferred_element_type=f32)
    orth = s[:, :, 0, 1:]
    p = jnp.exp(s - jnp.max(s, -1, keepdims=True))
    p = p / jnp.sum(p, -1, keepdims=True)
    o = jnp.einsum('bhnm,bhmd->bhnd', p.astype(bf16), v.astype(bf16), preferred_element_type=f32)
    o = o.transpose(0, 2, 1, 3).reshape(B, N, C)
    x1 = x + jnp.einsum('bnc,cd->bnd', o.astype(bf16), prep["w_proj"],
                        preferred_element_type=f32) + prep["b_proj"][0]
    xn2 = _layernorm(x1, prep["ln2_g"][0], prep["ln2_b"][0]).astype(bf16)
    h1 = jnp.einsum('bnc,ch->bnh', xn2, prep["w_fc1"], preferred_element_type=f32) + prep["b_fc1"][0]
    h1 = jax.nn.gelu(h1, approximate=False)
    h2 = jnp.einsum('bnh,hc->bnc', h1.astype(bf16), prep["w_fc2"], preferred_element_type=f32) + prep["b_fc2"][0]
    return x1 + h2, orth


def vit_block_reference_f32(x, params, num_heads):
    """Full-f32 reference mirroring the PyTorch forward (loose-tolerance sanity check)."""
    B, N, C = x.shape
    hd = C // num_heads
    scale = hd ** (-0.5)
    xn = _layernorm(x, params["ln1_g"][0], params["ln1_b"][0])
    qkv = xn @ params["w_qkv"]
    qkv = qkv.reshape(B, N, 3, num_heads, hd).transpose(2, 0, 3, 1, 4)
    q, k, v = qkv[0], qkv[1], qkv[2]
    attn = jnp.einsum("bhnd,bhmd->bhnm", q, k) * scale
    orth_proto = attn[:, :, 0, 1:]
    attn = jax.nn.softmax(attn, axis=-1)
    o = jnp.einsum("bhnm,bhmd->bhnd", attn, v).transpose(0, 2, 1, 3).reshape(B, N, C)
    x1 = x + (o @ params["w_proj"] + params["b_proj"][0])
    xn2 = _layernorm(x1, params["ln2_g"][0], params["ln2_b"][0])
    h = jax.nn.gelu(xn2 @ params["w_fc1"] + params["b_fc1"][0], approximate=False)
    return x1 + (h @ params["w_fc2"] + params["b_fc2"][0]), orth_proto


if __name__ == "__main__":
    B, N, C, H = 4, 8, 32, 4          # batch, tokens, dim, heads (head_dim = 8, mlp hidden = 128)
    key = jax.random.PRNGKey(0)
    kx, kp = jax.random.split(key)
    x = jax.random.normal(kx, (B, N, C), jnp.float32)
    params = init_params(kp, C, H)
    prep = prepare_kernel_params(params, H)

    out, orth = vit_block(x, prep, H, batch_tile=2)
    out = jax.block_until_ready(out)
    orth = jax.block_until_ready(orth)

    assert out.shape == (B, N, C) and orth.shape == (B, H, N - 1)

    # Tight check vs. a reference using the same bf16 matmul inputs / f32 accumulation.
    ref_out, ref_orth = vit_block_reference_bf16(x, prep, H)
    assert jnp.allclose(out, ref_out, atol=3e-3, rtol=3e-3), float(jnp.max(jnp.abs(out - ref_out)))
    assert jnp.allclose(orth, ref_orth, atol=3e-3, rtol=3e-3)

    # Loose semantic check vs. the full-f32 PyTorch-equivalent math (bf16 rounding only).
    f32_out, f32_orth = vit_block_reference_f32(x, params, H)
    assert jnp.allclose(out, f32_out, atol=5e-2, rtol=5e-2)
    assert jnp.allclose(orth, f32_orth, atol=5e-2, rtol=5e-2)

    print("KERNEL_OK")
</pallas_src>

<mosaic_0001>
module attributes {stable_mosaic.version = 11 : i64} {
  func.func @block_kernel(%arg0: i32, %arg1: memref<2x8x32xf32, #tpu.memory_space<vmem>>, %arg2: memref<1x32xf32, #tpu.memory_space<vmem>>, %arg3: memref<1x32xf32, #tpu.memory_space<vmem>>, %arg4: memref<32x96xbf16, #tpu.memory_space<vmem>>, %arg5: memref<32x32xbf16, #tpu.memory_space<vmem>>, %arg6: memref<1x32xf32, #tpu.memory_space<vmem>>, %arg7: memref<1x32xf32, #tpu.memory_space<vmem>>, %arg8: memref<1x32xf32, #tpu.memory_space<vmem>>, %arg9: memref<32x128xbf16, #tpu.memory_space<vmem>>, %arg10: memref<1x128xf32, #tpu.memory_space<vmem>>, %arg11: memref<128x32xbf16, #tpu.memory_space<vmem>>, %arg12: memref<1x32xf32, #tpu.memory_space<vmem>>, %arg13: memref<2x8x32xf32, #tpu.memory_space<vmem>>, %arg14: memref<2x4x8xf32, #tpu.memory_space<vmem>>) attributes {dimension_semantics = [#tpu.dimension_semantics<parallel>], iteration_bounds = array<i64: 2>, scalar_prefetch = 0 : i64, scratch_operands = 0 : i64, tpu.core_type = #tpu.core_type<tc>, window_params = [{transform_indices = @transform_0, window_bounds = array<i64: 2, 8, 32>}, {pipeline_mode = #tpu.pipeline_mode<synchronous>, transform_indices = @transform_1, window_bounds = array<i64: 1, 32>}, {pipeline_mode = #tpu.pipeline_mode<synchronous>, transform_indices = @transform_2, window_bounds = array<i64: 1, 32>}, {pipeline_mode = #tpu.pipeline_mode<synchronous>, transform_indices = @transform_3, window_bounds = array<i64: 32, 96>}, {pipeline_mode = #tpu.pipeline_mode<synchronous>, transform_indices = @transform_4, window_bounds = array<i64: 32, 32>}, {pipeline_mode = #tpu.pipeline_mode<synchronous>, transform_indices = @transform_5, window_bounds = array<i64: 1, 32>}, {pipeline_mode = #tpu.pipeline_mode<synchronous>, transform_indices = @transform_6, window_bounds = array<i64: 1, 32>}, {pipeline_mode = #tpu.pipeline_mode<synchronous>, transform_indices = @transform_7, window_bounds = array<i64: 1, 32>}, {pipeline_mode = #tpu.pipeline_mode<synchronous>, transform_indices = @transform_8, window_bounds = array<i64: 32, 128>}, {pipeline_mode = #tpu.pipeline_mode<synchronous>, transform_indices = @transform_9, window_bounds = array<i64: 1, 128>}, {pipeline_mode = #tpu.pipeline_mode<synchronous>, transform_indices = @transform_10, window_bounds = array<i64: 128, 32>}, {pipeline_mode = #tpu.pipeline_mode<synchronous>, transform_indices = @transform_11, window_bounds = array<i64: 1, 32>}, {transform_indices = @transform_12, window_bounds = array<i64: 2, 8, 32>}, {transform_indices = @transform_13, window_bounds = array<i64: 2, 4, 8>}]} {
    %c0 = arith.constant 0 : index
    %c0_0 = arith.constant 0 : index
    %c0_1 = arith.constant 0 : index
    %0 = vector.load %arg1[%c0, %c0_0, %c0_1] : memref<2x8x32xf32, #tpu.memory_space<vmem>>, vector<2x8x32xf32>
    %1 = vector.shape_cast %0 : vector<2x8x32xf32> to vector<16x32xf32>
    %c0_2 = arith.constant 0 : index
    %c0_3 = arith.constant 0 : index
    %2 = vector.load %arg2[%c0_2, %c0_3] : memref<1x32xf32, #tpu.memory_space<vmem>>, vector<1x32xf32>
    %3 = vector.shape_cast %2 : vector<1x32xf32> to vector<32xf32>
    %c0_4 = arith.constant 0 : index
    %c0_5 = arith.constant 0 : index
    %4 = vector.load %arg3[%c0_4, %c0_5] : memref<1x32xf32, #tpu.memory_space<vmem>>, vector<1x32xf32>
    %5 = vector.shape_cast %4 : vector<1x32xf32> to vector<32xf32>
    %cst = arith.constant dense<0.000000e+00> : vector<16xf32>
    %6 = vector.multi_reduction <add>, %1, %cst [1] : vector<16x32xf32> to vector<16xf32>
    %7 = vector.shape_cast %6 : vector<16xf32> to vector<16x1xf32>
    %cst_6 = arith.constant 3.200000e+01 : f32
    %8 = vector.broadcast %cst_6 : f32 to vector<16x1xf32>
    %9 = arith.divf %7, %8 : vector<16x1xf32>
    %10 = vector.broadcast %9 : vector<16x1xf32> to vector<16x32xf32>
    %11 = arith.subf %1, %10 : vector<16x32xf32>
    %12 = arith.mulf %11, %11 : vector<16x32xf32>
    %cst_7 = arith.constant dense<0.000000e+00> : vector<16xf32>
    %13 = vector.multi_reduction <add>, %12, %cst_7 [1] : vector<16x32xf32> to vector<16xf32>
    %14 = vector.shape_cast %13 : vector<16xf32> to vector<16x1xf32>
    %cst_8 = arith.constant 3.200000e+01 : f32
    %15 = vector.broadcast %cst_8 : f32 to vector<16x1xf32>
    %16 = arith.divf %14, %15 : vector<16x1xf32>
    %17 = vector.broadcast %9 : vector<16x1xf32> to vector<16x32xf32>
    %18 = arith.subf %1, %17 : vector<16x32xf32>
    %cst_9 = arith.constant 9.99999974E-6 : f32
    %19 = vector.broadcast %cst_9 : f32 to vector<16x1xf32>
    %20 = arith.addf %16, %19 : vector<16x1xf32>
    %21 = math.rsqrt %20 : vector<16x1xf32>
    %22 = vector.broadcast %21 : vector<16x1xf32> to vector<16x32xf32>
    %23 = arith.mulf %18, %22 : vector<16x32xf32>
    %24 = vector.shape_cast %3 : vector<32xf32> to vector<1x32xf32>
    %25 = vector.broadcast %24 : vector<1x32xf32> to vector<16x32xf32>
    %26 = arith.mulf %23, %25 : vector<16x32xf32>
    %27 = vector.shape_cast %5 : vector<32xf32> to vector<1x32xf32>
    %28 = vector.broadcast %27 : vector<1x32xf32> to vector<16x32xf32>
    %29 = arith.addf %26, %28 : vector<16x32xf32>
    %30 = arith.truncf %29 : vector<16x32xf32> to vector<16x32xbf16>
    %c0_10 = arith.constant 0 : index
    %c0_11 = arith.constant 0 : index
    %31 = vector.load %arg4[%c0_10, %c0_11] : memref<32x96xbf16, #tpu.memory_space<vmem>>, vector<32x96xbf16>
    %cst_12 = arith.constant dense<0.000000e+00> : vector<16x96xf32>
    %32 = tpu.matmul %30, %31, %cst_12 {dimension_numbers = #tpu.dot_dimension_numbers<[1], [0], [0], [1], [0, 0, 1, 1], [], []>} : vector<16x32xbf16>, vector<32x96xbf16>, vector<16x96xf32> -> vector<16x96xf32>
    %33 = vector.extract_strided_slice %32 {offsets = [0, 0], sizes = [16, 32], strides = [1, 1]} : vector<16x96xf32> to vector<16x32xf32>
    %34 = vector.shape_cast %33 : vector<16x32xf32> to vector<2x8x32xf32>
    %35 = tpu.transpose %34, [0, 2, 1] : vector<2x8x32xf32> -> vector<2x32x8xf32>
    %36 = vector.shape_cast %35 : vector<2x32x8xf32> to vector<8x8x8xf32>
    %37 = tpu.transpose %36, [0, 2, 1] : vector<8x8x8xf32> -> vector<8x8x8xf32>
    %38 = vector.extract_strided_slice %32 {offsets = [0, 32], sizes = [16, 32], strides = [1, 1]} : vector<16x96xf32> to vector<16x32xf32>
    %39 = vector.shape_cast %38 : vector<16x32xf32> to vector<2x8x32xf32>
    %40 = tpu.transpose %39, [0, 2, 1] : vector<2x8x32xf32> -> vector<2x32x8xf32>
    %41 = vector.shape_cast %40 : vector<2x32x8xf32> to vector<8x8x8xf32>
    %42 = vector.extract_strided_slice %32 {offsets = [0, 64], sizes = [16, 32], strides = [1, 1]} : vector<16x96xf32> to vector<16x32xf32>
    %43 = vector.shape_cast %42 : vector<16x32xf32> to vector<2x8x32xf32>
    %44 = tpu.transpose %43, [0, 2, 1] : vector<2x8x32xf32> -> vector<2x32x8xf32>
    %45 = vector.shape_cast %44 : vector<2x32x8xf32> to vector<8x8x8xf32>
    %46 = tpu.transpose %45, [0, 2, 1] : vector<8x8x8xf32> -> vector<8x8x8xf32>
    %47 = arith.truncf %37 : vector<8x8x8xf32> to vector<8x8x8xbf16>
    %48 = arith.truncf %41 : vector<8x8x8xf32> to vector<8x8x8xbf16>
    "tpu.trace_start"() <{level = 10 : i32, message = "znd,zdm->znm"}> : () -> ()
    %cst_13 = arith.constant dense<0.000000e+00> : vector<8x8x8xf32>
    %49 = tpu.matmul %47, %48, %cst_13 {dimension_numbers = #tpu.dot_dimension_numbers<[2], [1], [1], [2], [0, 0, 0, 1, 1, 2], [0], [0]>} : vector<8x8x8xbf16>, vector<8x8x8xbf16>, vector<8x8x8xf32> -> vector<8x8x8xf32>
    "tpu.trace_stop"() : () -> ()
    %50 = vector.extract_strided_slice %49 {offsets = [0, 0, 0], sizes = [8, 1, 8], strides = [1, 1, 1]} : vector<8x8x8xf32> to vector<8x1x8xf32>
    %51 = vector.shape_cast %50 : vector<8x1x8xf32> to vector<8x8xf32>
    %52 = vector.shape_cast %51 : vector<8x8xf32> to vector<2x4x8xf32>
    %c0_14 = arith.constant 0 : index
    %c0_15 = arith.constant 0 : index
    %c0_16 = arith.constant 0 : index
    %53 = vector.load %arg14[%c0_14, %c0_15, %c0_16] : memref<2x4x8xf32, #tpu.memory_space<vmem>>, vector<2x4x8xf32>
    tpu.vector_store %arg14[%c0_14, %c0_15, %c0_16], %52 {strides = array<i32>} : memref<2x4x8xf32, #tpu.memory_space<vmem>>, vector<2x4x8xf32>,
    %cst_17 = arith.constant dense<0xFF800000> : vector<8x8xf32>
    %54 = vector.multi_reduction <maximumf>, %49, %cst_17 [2] : vector<8x8x8xf32> to vector<8x8xf32>
    %55 = vector.shape_cast %54 : vector<8x8xf32> to vector<8x8x1xf32>
    %56 = vector.broadcast %55 : vector<8x8x1xf32> to vector<8x8x8xf32>
    %57 = arith.subf %49, %56 : vector<8x8x8xf32>
    %58 = math.exp %57 : vector<8x8x8xf32>
    %cst_18 = arith.constant dense<0.000000e+00> : vector<8x8xf32>
    %59 = vector.multi_reduction <add>, %58, %cst_18 [2] : vector<8x8x8xf32> to vector<8x8xf32>
    %60 = vector.shape_cast %59 : vector<8x8xf32> to vector<8x8x1xf32>
    %61 = tpu.reciprocal %60 : vector<8x8x1xf32> -> vector<8x8x1xf32>
    %62 = vector.broadcast %61 : vector<8x8x1xf32> to vector<8x8x8xf32>
    %63 = arith.mulf %58, %62 : vector<8x8x8xf32>
    %64 = arith.truncf %63 : vector<8x8x8xf32> to vector<8x8x8xbf16>
    %65 = arith.truncf %46 : vector<8x8x8xf32> to vector<8x8x8xbf16>
    "tpu.trace_start"() <{level = 10 : i32, message = "znm,zmd->znd"}> : () -> ()
    %cst_19 = arith.constant dense<0.000000e+00> : vector<8x8x8xf32>
    %66 = tpu.matmul %64, %65, %cst_19 {dimension_numbers = #tpu.dot_dimension_numbers<[2], [1], [1], [2], [0, 0, 0, 1, 1, 2], [0], [0]>} : vector<8x8x8xbf16>, vector<8x8x8xbf16>, vector<8x8x8xf32> -> vector<8x8x8xf32>
    "tpu.trace_stop"() : () -> ()
    %67 = tpu.transpose %66, [0, 2, 1] : vector<8x8x8xf32> -> vector<8x8x8xf32>
    %68 = vector.shape_cast %67 : vector<8x8x8xf32> to vector<2x32x8xf32>
    %69 = tpu.transpose %68, [0, 2, 1] : vector<2x32x8xf32> -> vector<2x8x32xf32>
    %70 = vector.shape_cast %69 : vector<2x8x32xf32> to vector<16x32xf32>
    %71 = arith.truncf %70 : vector<16x32xf32> to vector<16x32xbf16>
    %c0_20 = arith.constant 0 : index
    %c0_21 = arith.constant 0 : index
    %72 = vector.load %arg5[%c0_20, %c0_21] : memref<32x32xbf16, #tpu.memory_space<vmem>>, vector<32x32xbf16>
    %cst_22 = arith.constant dense<0.000000e+00> : vector<16x32xf32>
    %73 = tpu.matmul %71, %72, %cst_22 {dimension_numbers = #tpu.dot_dimension_numbers<[1], [0], [0], [1], [0, 0, 1, 1], [], []>} : vector<16x32xbf16>, vector<32x32xbf16>, vector<16x32xf32> -> vector<16x32xf32>
    %c0_23 = arith.constant 0 : index
    %c0_24 = arith.constant 0 : index
    %74 = vector.load %arg6[%c0_23, %c0_24] : memref<1x32xf32, #tpu.memory_space<vmem>>, vector<1x32xf32>
    %75 = vector.shape_cast %74 : vector<1x32xf32> to vector<32xf32>
    %76 = vector.shape_cast %75 : vector<32xf32> to vector<1x32xf32>
    %77 = vector.broadcast %76 : vector<1x32xf32> to vector<16x32xf32>
    %78 = arith.addf %73, %77 : vector<16x32xf32>
    %79 = arith.addf %1, %78 : vector<16x32xf32>
    %c0_25 = arith.constant 0 : index
    %c0_26 = arith.constant 0 : index
    %80 = vector.load %arg7[%c0_25, %c0_26] : memref<1x32xf32, #tpu.memory_space<vmem>>, vector<1x32xf32>
    %81 = vector.shape_cast %80 : vector<1x32xf32> to vector<32xf32>
    %c0_27 = arith.constant 0 : index
    %c0_28 = arith.constant 0 : index
    %82 = vector.load %arg8[%c0_27, %c0_28] : memref<1x32xf32, #tpu.memory_space<vmem>>, vector<1x32xf32>
    %83 = vector.shape_cast %82 : vector<1x32xf32> to vector<32xf32>
    %cst_29 = arith.constant dense<0.000000e+00> : vector<16xf32>
    %84 = vector.multi_reduction <add>, %79, %cst_29 [1] : vector<16x32xf32> to vector<16xf32>
    %85 = vector.shape_cast %84 : vector<16xf32> to vector<16x1xf32>
    %cst_30 = arith.constant 3.200000e+01 : f32
    %86 = vector.broadcast %cst_30 : f32 to vector<16x1xf32>
    %87 = arith.divf %85, %86 : vector<16x1xf32>
    %88 = vector.broadcast %87 : vector<16x1xf32> to vector<16x32xf32>
    %89 = arith.subf %79, %88 : vector<16x32xf32>
    %90 = arith.mulf %89, %89 : vector<16x32xf32>
    %cst_31 = arith.constant dense<0.000000e+00> : vector<16xf32>
    %91 = vector.multi_reduction <add>, %90, %cst_31 [1] : vector<16x32xf32> to vector<16xf32>
    %92 = vector.shape_cast %91 : vector<16xf32> to vector<16x1xf32>
    %cst_32 = arith.constant 3.200000e+01 : f32
    %93 = vector.broadcast %cst_32 : f32 to vector<16x1xf32>
    %94 = arith.divf %92, %93 : vector<16x1xf32>
    %95 = vector.broadcast %87 : vector<16x1xf32> to vector<16x32xf32>
    %96 = arith.subf %79, %95 : vector<16x32xf32>
    %cst_33 = arith.constant 9.99999974E-6 : f32
    %97 = vector.broadcast %cst_33 : f32 to vector<16x1xf32>
    %98 = arith.addf %94, %97 : vector<16x1xf32>
    %99 = math.rsqrt %98 : vector<16x1xf32>
    %100 = vector.broadcast %99 : vector<16x1xf32> to vector<16x32xf32>
    %101 = arith.mulf %96, %100 : vector<16x32xf32>
    %102 = vector.shape_cast %81 : vector<32xf32> to vector<1x32xf32>
    %103 = vector.broadcast %102 : vector<1x32xf32> to vector<16x32xf32>
    %104 = arith.mulf %101, %103 : vector<16x32xf32>
    %105 = vector.shape_cast %83 : vector<32xf32> to vector<1x32xf32>
    %106 = vector.broadcast %105 : vector<1x32xf32> to vector<16x32xf32>
    %107 = arith.addf %104, %106 : vector<16x32xf32>
    %108 = arith.truncf %107 : vector<16x32xf32> to vector<16x32xbf16>
    %c0_34 = arith.constant 0 : index
    %c0_35 = arith.constant 0 : index
    %109 = vector.load %arg9[%c0_34, %c0_35] : memref<32x128xbf16, #tpu.memory_space<vmem>>, vector<32x128xbf16>
    %cst_36 = arith.constant dense<0.000000e+00> : vector<16x128xf32>
    %110 = tpu.matmul %108, %109, %cst_36 {dimension_numbers = #tpu.dot_dimension_numbers<[1], [0], [0], [1], [0, 0, 1, 1], [], []>} : vector<16x32xbf16>, vector<32x128xbf16>, vector<16x128xf32> -> vector<16x128xf32>
    %c0_37 = arith.constant 0 : index
    %c0_38 = arith.constant 0 : index
    %111 = vector.load %arg10[%c0_37, %c0_38] : memref<1x128xf32, #tpu.memory_space<vmem>>, vector<1x128xf32>
    %112 = vector.shape_cast %111 : vector<1x128xf32> to vector<128xf32>
    %113 = vector.shape_cast %112 : vector<128xf32> to vector<1x128xf32>
    %114 = vector.broadcast %113 : vector<1x128xf32> to vector<16x128xf32>
    %115 = arith.addf %110, %114 : vector<16x128xf32>
    %cst_39 = arith.constant 5.000000e-01 : f32
    %116 = vector.broadcast %cst_39 : f32 to vector<16x128xf32>
    %117 = arith.mulf %116, %115 : vector<16x128xf32>
    %cst_40 = arith.constant 0.707106769 : f32
    %118 = vector.broadcast %cst_40 : f32 to vector<16x128xf32>
    %119 = arith.mulf %115, %118 : vector<16x128xf32>
    %cst_41 = arith.constant 0.000000e+00 : f32
    %120 = vector.broadcast %cst_41 : f32 to vector<16x128xf32>
    %121 = arith.cmpf oge, %119, %120 : vector<16x128xf32>
    %cst_42 = arith.constant 1.000000e+00 : f32
    %cst_43 = arith.constant -1.000000e+00 : f32
    %122 = vector.broadcast %cst_42 : f32 to vector<16x128xf32>
    %123 = vector.broadcast %cst_43 : f32 to vector<16x128xf32>
    %124 = arith.select %121, %122, %123 : vector<16x128xi1>, vector<16x128xf32>
    %125 = math.absf %119 : vector<16x128xf32>
    %cst_44 = arith.constant 0.327591091 : f32
    %126 = vector.broadcast %cst_44 : f32 to vector<16x128xf32>
    %127 = arith.mulf %126, %125 : vector<16x128xf32>
    %cst_45 = arith.constant 1.000000e+00 : f32
    %128 = vector.broadcast %cst_45 : f32 to vector<16x128xf32>
    %129 = arith.addf %128, %127 : vector<16x128xf32>
    %cst_46 = arith.constant 1.000000e+00 : f32
    %130 = vector.broadcast %cst_46 : f32 to vector<16x128xf32>
    %131 = arith.divf %130, %129 : vector<16x128xf32>
    %cst_47 = arith.constant 1.06140542 : f32
    %132 = vector.broadcast %cst_47 : f32 to vector<16x128xf32>
    %133 = arith.mulf %132, %131 : vector<16x128xf32>
    %cst_48 = arith.constant -1.45315206 : f32
    %134 = vector.broadcast %cst_48 : f32 to vector<16x128xf32>
    %135 = arith.addf %133, %134 : vector<16x128xf32>
    %136 = arith.mulf %135, %131 : vector<16x128xf32>
    %cst_49 = arith.constant 1.42141378 : f32
    %137 = vector.broadcast %cst_49 : f32 to vector<16x128xf32>
    %138 = arith.addf %136, %137 : vector<16x128xf32>
    %139 = arith.mulf %138, %131 : vector<16x128xf32>
    %cst_50 = arith.constant -0.284496725 : f32
    %140 = vector.broadcast %cst_50 : f32 to vector<16x128xf32>
    %141 = arith.addf %139, %140 : vector<16x128xf32>
    %142 = arith.mulf %141, %131 : vector<16x128xf32>
    %cst_51 = arith.constant 0.254829586 : f32
    %143 = vector.broadcast %cst_51 : f32 to vector<16x128xf32>
    %144 = arith.addf %142, %143 : vector<16x128xf32>
    %145 = arith.mulf %144, %131 : vector<16x128xf32>
    %cst_52 = arith.constant 0.000000e+00 : f32
    %146 = vector.broadcast %cst_52 : f32 to vector<16x128xf32>
    %147 = arith.subf %146, %125 : vector<16x128xf32>
    %148 = arith.mulf %147, %125 : vector<16x128xf32>
    %149 = math.exp %148 : vector<16x128xf32>
    %150 = arith.mulf %145, %149 : vector<16x128xf32>
    %cst_53 = arith.constant 1.000000e+00 : f32
    %151 = vector.broadcast %cst_53 : f32 to vector<16x128xf32>
    %152 = arith.subf %151, %150 : vector<16x128xf32>
    %153 = arith.mulf %124, %152 : vector<16x128xf32>
    %cst_54 = arith.constant 1.000000e+00 : f32
    %154 = vector.broadcast %cst_54 : f32 to vector<16x128xf32>
    %155 = arith.addf %154, %153 : vector<16x128xf32>
    %156 = arith.mulf %117, %155 : vector<16x128xf32>
    %157 = arith.truncf %156 : vector<16x128xf32> to vector<16x128xbf16>
    %c0_55 = arith.constant 0 : index
    %c0_56 = arith.constant 0 : index
    %158 = vector.load %arg11[%c0_55, %c0_56] : memref<128x32xbf16, #tpu.memory_space<vmem>>, vector<128x32xbf16>
    %cst_57 = arith.constant dense<0.000000e+00> : vector<16x32xf32>
    %159 = tpu.matmul %157, %158, %cst_57 {dimension_numbers = #tpu.dot_dimension_numbers<[1], [0], [0], [1], [0, 0, 1, 1], [], []>} : vector<16x128xbf16>, vector<128x32xbf16>, vector<16x32xf32> -> vector<16x32xf32>
    %c0_58 = arith.constant 0 : index
    %c0_59 = arith.constant 0 : index
    %160 = vector.load %arg12[%c0_58, %c0_59] : memref<1x32xf32, #tpu.memory_space<vmem>>, vector<1x32xf32>
    %161 = vector.shape_cast %160 : vector<1x32xf32> to vector<32xf32>
    %162 = vector.shape_cast %161 : vector<32xf32> to vector<1x32xf32>
    %163 = vector.broadcast %162 : vector<1x32xf32> to vector<16x32xf32>
    %164 = arith.addf %159, %163 : vector<16x32xf32>
    %165 = arith.addf %79, %164 : vector<16x32xf32>
    %166 = vector.shape_cast %165 : vector<16x32xf32> to vector<2x8x32xf32>
    %c0_60 = arith.constant 0 : index
    %c0_61 = arith.constant 0 : index
    %c0_62 = arith.constant 0 : index
    %167 = vector.load %arg13[%c0_60, %c0_61, %c0_62] : memref<2x8x32xf32, #tpu.memory_space<vmem>>, vector<2x8x32xf32>
    tpu.vector_store %arg13[%c0_60, %c0_61, %c0_62], %166 {strides = array<i32>} : memref<2x8x32xf32, #tpu.memory_space<vmem>>, vector<2x8x32xf32>,
    return
  }
  func.func @transform_0(%arg0: i32) -> (i32, i32, i32) {
    %c0_i32 = arith.constant 0 : i32
    %c0_i32_0 = arith.constant 0 : i32
    %c0_i32_1 = arith.constant 0 : i32
    return %arg0, %c0_i32, %c0_i32_0 : i32, i32, i32
  }
  func.func @transform_1(%arg0: i32) -> (i32, i32) {
    %c0_i32 = arith.constant 0 : i32
    %c0_i32_0 = arith.constant 0 : i32
    %c0_i32_1 = arith.constant 0 : i32
    return %c0_i32, %c0_i32_0 : i32, i32
  }
  func.func @transform_2(%arg0: i32) -> (i32, i32) {
    %c0_i32 = arith.constant 0 : i32
    %c0_i32_0 = arith.constant 0 : i32
    %c0_i32_1 = arith.constant 0 : i32
    return %c0_i32, %c0_i32_0 : i32, i32
  }
  func.func @transform_3(%arg0: i32) -> (i32, i32) {
    %c0_i32 = arith.constant 0 : i32
    %c0_i32_0 = arith.constant 0 : i32
    %c0_i32_1 = arith.constant 0 : i32
    return %c0_i32, %c0_i32_0 : i32, i32
  }
  func.func @transform_4(%arg0: i32) -> (i32, i32) {
    %c0_i32 = arith.constant 0 : i32
    %c0_i32_0 = arith.constant 0 : i32
    %c0_i32_1 = arith.constant 0 : i32
    return %c0_i32, %c0_i32_0 : i32, i32
  }
  func.func @transform_5(%arg0: i32) -> (i32, i32) {
    %c0_i32 = arith.constant 0 : i32
    %c0_i32_0 = arith.constant 0 : i32
    %c0_i32_1 = arith.constant 0 : i32
    return %c0_i32, %c0_i32_0 : i32, i32
  }
  func.func @transform_6(%arg0: i32) -> (i32, i32) {
    %c0_i32 = arith.constant 0 : i32
    %c0_i32_0 = arith.constant 0 : i32
    %c0_i32_1 = arith.constant 0 : i32
    return %c0_i32, %c0_i32_0 : i32, i32
  }
  func.func @transform_7(%arg0: i32) -> (i32, i32) {
    %c0_i32 = arith.constant 0 : i32
    %c0_i32_0 = arith.constant 0 : i32
    %c0_i32_1 = arith.constant 0 : i32
    return %c0_i32, %c0_i32_0 : i32, i32
  }
  func.func @transform_8(%arg0: i32) -> (i32, i32) {
    %c0_i32 = arith.constant 0 : i32
    %c0_i32_0 = arith.constant 0 : i32
    %c0_i32_1 = arith.constant 0 : i32
    return %c0_i32, %c0_i32_0 : i32, i32
  }
  func.func @transform_9(%arg0: i32) -> (i32, i32) {
    %c0_i32 = arith.constant 0 : i32
    %c0_i32_0 = arith.constant 0 : i32
    %c0_i32_1 = arith.constant 0 : i32
    return %c0_i32, %c0_i32_0 : i32, i32
  }
  func.func @transform_10(%arg0: i32) -> (i32, i32) {
    %c0_i32 = arith.constant 0 : i32
    %c0_i32_0 = arith.constant 0 : i32
    %c0_i32_1 = arith.constant 0 : i32
    return %c0_i32, %c0_i32_0 : i32, i32
  }
  func.func @transform_11(%arg0: i32) -> (i32, i32) {
    %c0_i32 = arith.constant 0 : i32
    %c0_i32_0 = arith.constant 0 : i32
    %c0_i32_1 = arith.constant 0 : i32
    return %c0_i32, %c0_i32_0 : i32, i32
  }
  func.func @transform_12(%arg0: i32) -> (i32, i32, i32) {
    %c0_i32 = arith.constant 0 : i32
    %c0_i32_0 = arith.constant 0 : i32
    %c0_i32_1 = arith.constant 0 : i32
    return %arg0, %c0_i32, %c0_i32_0 : i32, i32, i32
  }
  func.func @transform_13(%arg0: i32) -> (i32, i32, i32) {
    %c0_i32 = arith.constant 0 : i32
    %c0_i32_0 = arith.constant 0 : i32
    %c0_i32_1 = arith.constant 0 : i32
    return %arg0, %c0_i32, %c0_i32_0 : i32, i32, i32
  }
}

</mosaic_0001>

<llo_original>
// kernel: tpu_custom_call.1
$region0: #{tpu_custom_call.1}
  #allocation0 [shape = 'u32[]', space=smem, size = 0x4, offset = 0x4, fixed_abs, tag = 'smem constant byte address 0x4 - core index']
  #allocation1 [shape = 'u32[144,128]{1,0:T(1,128)}', space=vmem, size = 0x12000, scoped, tag = 'internal scratch']
  %s0 = inlined_call_operand.vmem [shape: f32[4,8,32], index: 0, kind: input, shape index: {}]
  %s1 = inlined_call_operand.vmem [shape: f32[1,32], index: 1, kind: input, shape index: {}]
  %s2 = inlined_call_operand.vmem [shape: f32[1,32], index: 2, kind: input, shape index: {}]
  %s3 = inlined_call_operand.vmem [shape: bf16[32,96], index: 3, kind: input, shape index: {}]
  %s4 = inlined_call_operand.vmem [shape: bf16[32,32], index: 4, kind: input, shape index: {}]
  %s5 = inlined_call_operand.vmem [shape: f32[1,32], index: 5, kind: input, shape index: {}]
  %s6 = inlined_call_operand.vmem [shape: f32[1,32], index: 6, kind: input, shape index: {}]
  %s7 = inlined_call_operand.vmem [shape: f32[1,32], index: 7, kind: input, shape index: {}]
  %s8 = inlined_call_operand.vmem [shape: bf16[32,128], index: 8, kind: input, shape index: {}]
  %s9 = inlined_call_operand.vmem [shape: f32[1,128], index: 9, kind: input, shape index: {}]
  %s10 = inlined_call_operand.vmem [shape: bf16[128,32], index: 10, kind: input, shape index: {}]
  %s11 = inlined_call_operand.vmem [shape: f32[1,32], index: 11, kind: input, shape index: {}]
  %s12 = inlined_call_operand.hbm [shape: f32[4,8,32], index: 12, kind: output, shape index: {0}]
  %s13 = inlined_call_operand.hbm [shape: f32[4,4,8], index: 13, kind: output, shape index: {1}]
  %14 = xla_tuple %s12, %s13
  %s15 = sld [smem:[#allocation0]]
  $region89: #{tpu_custom_call.1} parent=0
    _
  %s17 = ssub.s32 1, %s15
  %s18 = scalar_select 0, %s17, %s15
  $region1: #{tpu_custom_call.1} parent=0
    #allocation2 [shape = 'u8[16384]{0}', space=vmem, size = 0x4000, scoped, tag = 'output window, operand 0']
    #allocation3 [shape = 's32[2]{0}', space=sflag, size = 0x8, scoped, tag = 'scoped memory for tpu_custom_call.1']
    #allocation4 [shape = 'u8[8192]{0}', space=vmem, size = 0x2000, scoped, tag = 'output window, operand 1']
    #allocation5 [shape = 's32[2]{0}', space=sflag, size = 0x8, scoped, tag = 'scoped memory for tpu_custom_call.1']
    %19 = vsyncpa [#allocation3], 0
    %s20 = scalar_lea.sflag [#allocation3], 1
    %21 = vsyncpa %s20, 0
    %22 = vsyncpa [#allocation5], 0
    %s23 = scalar_lea.sflag [#allocation5], 1
    %24 = vsyncpa %s23, 0
    loop: start=0, step=1, limit=4
    $region2: #{tpu_custom_call.1} parent=1 // loop_pre_header
      _
    $region3: #{tpu_custom_call.1} parent=1 // loop_header
      %s26 = sphi 0, %s30
      %p27 = scmp.ge.s32.totalorder %s26, 4
      %s36 = sphi 0, %s38
      %s39 = sphi 0, %s36
      %s40 = sphi 0, %s39
      %s56 = sphi 0, %s40
      %s60 = sphi 0, %s60
      %s62 = sphi 0, %s60
      %s63 = sphi 0, %s62
      %s77 = sphi 0, %s63
      %s81 = sphi 0, %s81
      %s83 = sphi 0, %s81
      %s84 = sphi 0, %s83
      %s98 = sphi 0, %s84
      %s102 = sphi 0, %s102
      %s104 = sphi 0, %s102
      %s105 = sphi 0, %s104
      %s119 = sphi 0, %s105
      %s123 = sphi 0, %s123
      %s125 = sphi 0, %s123
      %s126 = sphi 0, %s125
      %s140 = sphi 0, %s126
      %s144 = sphi 0, %s144
      %s146 = sphi 0, %s144
      %s147 = sphi 0, %s146
      %s161 = sphi 0, %s147
      %s165 = sphi 0, %s165
      %s167 = sphi 0, %s165
      %s168 = sphi 0, %s167
      %s182 = sphi 0, %s168
      %s186 = sphi 0, %s186
      %s188 = sphi 0, %s186
      %s189 = sphi 0, %s188
      %s203 = sphi 0, %s189
      %s207 = sphi 0, %s207
      %s209 = sphi 0, %s207
      %s210 = sphi 0, %s209
      %s224 = sphi 0, %s210
      %s228 = sphi 0, %s228
      %s230 = sphi 0, %s228
      %s231 = sphi 0, %s230
      %s245 = sphi 0, %s231
      %s249 = sphi 0, %s249
      %s251 = sphi 0, %s249
      %s252 = sphi 0, %s251
      %s266 = sphi 0, %s252
      %s270 = sphi 0, %s270
      %s272 = sphi 0, %s270
      %s273 = sphi 0, %s272
      %s287 = sphi 0, %s273
      %s293 = sphi 0, %s295
      %s296 = sphi 0, %s293
      %s297 = sphi 0, %s296
      %s313 = sphi 0, %s297
      %s319 = sphi 0, %s321
      %s322 = sphi 0, %s319
      %s323 = sphi 0, %s322
      %s339 = sphi 0, %s323
    $region4: #{tpu_custom_call.1} parent=1 // loop_header_branch
      %29 = sbr.rel (%p27) target = $region8
    $region5: #{tpu_custom_call.1} parent=1 // loop_body
      %s31 = ssub.s32 %s26, 1
      %s32 = ssub.s32 %s26, 2
      %s33 = sadd.s32 %s26, 1
      %s34 = ssub.s32 %s26, %s33
      %p35 = scmp.eq.s32.totalorder %s34, 0
      %s37 = sadd.s32 %s36, 1
      %s38 = scalar_select %p35, %s36, %s37
      %p41 = pneg %p35
      %p42 = scmp.eq.s32.totalorder %s26, 1
      %p43 = por %p41, %p42
      %p44 = scmp.ne.s32.totalorder %s36, %s39
      %p45 = scmp.eq.s32.totalorder %s26, 0
      %p46 = por %p44, %p45
      %p47 = scmp.ne.s32.totalorder %s36, %s39
      %p48 = scmp.eq.s32.totalorder %s31, 1
      %p49 = por %p47, %p48
      %p50 = scmp.ne.s32.totalorder %s39, %s40
      %p51 = scmp.eq.s32.totalorder %s31, 0
      %p52 = por %p50, %p51
      %p53 = scmp.ne.s32.totalorder %s39, %s40
      %p54 = scmp.eq.s32.totalorder %s32, 1
      %p55 = por %p53, %p54
      %p57 = scmp.ne.s32.totalorder %s40, %s56
      %p58 = scmp.eq.s32.totalorder %s32, 0
      %p59 = por %p57, %p58
      %s61 = sadd.s32 %s60, 1
      %p64 = scmp.eq.s32.totalorder %s26, 1
      %p65 = scmp.ne.s32.totalorder %s60, %s62
      %p66 = scmp.eq.s32.totalorder %s26, 0
      %p67 = por %p65, %p66
      %p68 = scmp.ne.s32.totalorder %s60, %s62
      %p69 = scmp.eq.s32.totalorder %s31, 1
      %p70 = por %p68, %p69
      %p71 = scmp.ne.s32.totalorder %s62, %s63
      %p72 = scmp.eq.s32.totalorder %s31, 0
      %p73 = por %p71, %p72
      %p74 = scmp.ne.s32.totalorder %s62, %s63
      %p75 = scmp.eq.s32.totalorder %s32, 1
      %p76 = por %p74, %p75
      %p78 = scmp.ne.s32.totalorder %s63, %s77
      %p79 = scmp.eq.s32.totalorder %s32, 0
      %p80 = por %p78, %p79
      %s82 = sadd.s32 %s81, 1
      %p85 = scmp.eq.s32.totalorder %s26, 1
      %p86 = scmp.ne.s32.totalorder %s81, %s83
      %p87 = scmp.eq.s32.totalorder %s26, 0
      %p88 = por %p86, %p87
      %p89 = scmp.ne.s32.totalorder %s81, %s83
      %p90 = scmp.eq.s32.totalorder %s31, 1
      %p91 = por %p89, %p90
      %p92 = scmp.ne.s32.totalorder %s83, %s84
      %p93 = scmp.eq.s32.totalorder %s31, 0
      %p94 = por %p92, %p93
      %p95 = scmp.ne.s32.totalorder %s83, %s84
      %p96 = scmp.eq.s32.totalorder %s32, 1
      %p97 = por %p95, %p96
      %p99 = scmp.ne.s32.totalorder %s84, %s98
      %p100 = scmp.eq.s32.totalorder %s32, 0
      %p101 = por %p99, %p100
      %s103 = sadd.s32 %s102, 1
      %p106 = scmp.eq.s32.totalorder %s26, 1
      %p107 = scmp.ne.s32.totalorder %s102, %s104
      %p108 = scmp.eq.s32.totalorder %s26, 0
      %p109 = por %p107, %p108
      %p110 = scmp.ne.s32.totalorder %s102, %s104
      %p111 = scmp.eq.s32.totalorder %s31, 1
      %p112 = por %p110, %p111
      %p113 = scmp.ne.s32.totalorder %s104, %s105
      %p114 = scmp.eq.s32.totalorder %s31, 0
      %p115 = por %p113, %p114
      %p116 = scmp.ne.s32.totalorder %s104, %s105
      %p117 = scmp.eq.s32.totalorder %s32, 1
      %p118 = por %p116, %p117
      %p120 = scmp.ne.s32.totalorder %s105, %s119
      %p121 = scmp.eq.s32.totalorder %s32, 0
      %p122 = por %p120, %p121
      %s124 = sadd.s32 %s123, 1
      %p127 = scmp.eq.s32.totalorder %s26, 1
      %p128 = scmp.ne.s32.totalorder %s123, %s125
      %p129 = scmp.eq.s32.totalorder %s26, 0
      %p130 = por %p128, %p129
      %p131 = scmp.ne.s32.totalorder %s123, %s125
      %p132 = scmp.eq.s32.totalorder %s31, 1
      %p133 = por %p131, %p132
      %p134 = scmp.ne.s32.totalorder %s125, %s126
      %p135 = scmp.eq.s32.totalorder %s31, 0
      %p136 = por %p134, %p135
      %p137 = scmp.ne.s32.totalorder %s125, %s126
      %p138 = scmp.eq.s32.totalorder %s32, 1
      %p139 = por %p137, %p138
      %p141 = scmp.ne.s32.totalorder %s126, %s140
      %p142 = scmp.eq.s32.totalorder %s32, 0
      %p143 = por %p141, %p142
      %s145 = sadd.s32 %s144, 1
      %p148 = scmp.eq.s32.totalorder %s26, 1
      %p149 = scmp.ne.s32.totalorder %s144, %s146
      %p150 = scmp.eq.s32.totalorder %s26, 0
      %p151 = por %p149, %p150
      %p152 = scmp.ne.s32.totalorder %s144, %s146
      %p153 = scmp.eq.s32.totalorder %s31, 1
      %p154 = por %p152, %p153
      %p155 = scmp.ne.s32.totalorder %s146, %s147
      %p156 = scmp.eq.s32.totalorder %s31, 0
      %p157 = por %p155, %p156
      %p158 = scmp.ne.s32.totalorder %s146, %s147
      %p159 = scmp.eq.s32.totalorder %s32, 1
      %p160 = por %p158, %p159
      %p162 = scmp.ne.s32.totalorder %s147, %s161
      %p163 = scmp.eq.s32.totalorder %s32, 0
      %p164 = por %p162, %p163
      %s166 = sadd.s32 %s165, 1
      %p169 = scmp.eq.s32.totalorder %s26, 1
      %p170 = scmp.ne.s32.totalorder %s165, %s167
      %p171 = scmp.eq.s32.totalorder %s26, 0
      %p172 = por %p170, %p171
      %p173 = scmp.ne.s32.totalorder %s165, %s167
      %p174 = scmp.eq.s32.totalorder %s31, 1
      %p175 = por %p173, %p174
      %p176 = scmp.ne.s32.totalorder %s167, %s168
      %p177 = scmp.eq.s32.totalorder %s31, 0
      %p178 = por %p176, %p177
      %p179 = scmp.ne.s32.totalorder %s167, %s168
      %p180 = scmp.eq.s32.totalorder %s32, 1
      %p181 = por %p179, %p180
      %p183 = scmp.ne.s32.totalorder %s168, %s182
      %p184 = scmp.eq.s32.totalorder %s32, 0
      %p185 = por %p183, %p184
      %s187 = sadd.s32 %s186, 1
      %p190 = scmp.eq.s32.totalorder %s26, 1
      %p191 = scmp.ne.s32.totalorder %s186, %s188
      %p192 = scmp.eq.s32.totalorder %s26, 0
      %p193 = por %p191, %p192
      %p194 = scmp.ne.s32.totalorder %s186, %s188
      %p195 = scmp.eq.s32.totalorder %s31, 1
      %p196 = por %p194, %p195
      %p197 = scmp.ne.s32.totalorder %s188, %s189
      %p198 = scmp.eq.s32.totalorder %s31, 0
      %p199 = por %p197, %p198
      %p200 = scmp.ne.s32.totalorder %s188, %s189
      %p201 = scmp.eq.s32.totalorder %s32, 1
      %p202 = por %p200, %p201
      %p204 = scmp.ne.s32.totalorder %s189, %s203
      %p205 = scmp.eq.s32.totalorder %s32, 0
      %p206 = por %p204, %p205
      %s208 = sadd.s32 %s207, 1
      %p211 = scmp.eq.s32.totalorder %s26, 1
      %p212 = scmp.ne.s32.totalorder %s207, %s209
      %p213 = scmp.eq.s32.totalorder %s26, 0
      %p214 = por %p212, %p213
      %p215 = scmp.ne.s32.totalorder %s207, %s209
      %p216 = scmp.eq.s32.totalorder %s31, 1
      %p217 = por %p215, %p216
      %p218 = scmp.ne.s32.totalorder %s209, %s210
      %p219 = scmp.eq.s32.totalorder %s31, 0
      %p220 = por %p218, %p219
      %p221 = scmp.ne.s32.totalorder %s209, %s210
      %p222 = scmp.eq.s32.totalorder %s32, 1
      %p223 = por %p221, %p222
      %p225 = scmp.ne.s32.totalorder %s210, %s224
      %p226 = scmp.eq.s32.totalorder %s32, 0
      %p227 = por %p225, %p226
      %s229 = sadd.s32 %s228, 1
      %p232 = scmp.eq.s32.totalorder %s26, 1
      %p233 = scmp.ne.s32.totalorder %s228, %s230
      %p234 = scmp.eq.s32.totalorder %s26, 0
      %p235 = por %p233, %p234
      %p236 = scmp.ne.s32.totalorder %s228, %s230
      %p237 = scmp.eq.s32.totalorder %s31, 1
      %p238 = por %p236, %p237
      %p239 = scmp.ne.s32.totalorder %s230, %s231
      %p240 = scmp.eq.s32.totalorder %s31, 0
      %p241 = por %p239, %p240
      %p242 = scmp.ne.s32.totalorder %s230, %s231
      %p243 = scmp.eq.s32.totalorder %s32, 1
      %p244 = por %p242, %p243
      %p246 = scmp.ne.s32.totalorder %s231, %s245
      %p247 = scmp.eq.s32.totalorder %s32, 0
      %p248 = por %p246, %p247
      %s250 = sadd.s32 %s249, 1
      %p253 = scmp.eq.s32.totalorder %s26, 1
      %p254 = scmp.ne.s32.totalorder %s249, %s251
      %p255 = scmp.eq.s32.totalorder %s26, 0
      %p256 = por %p254, %p255
      %p257 = scmp.ne.s32.totalorder %s249, %s251
      %p258 = scmp.eq.s32.totalorder %s31, 1
      %p259 = por %p257, %p258
      %p260 = scmp.ne.s32.totalorder %s251, %s252
      %p261 = scmp.eq.s32.totalorder %s31, 0
      %p262 = por %p260, %p261
      %p263 = scmp.ne.s32.totalorder %s251, %s252
      %p264 = scmp.eq.s32.totalorder %s32, 1
      %p265 = por %p263, %p264
      %p267 = scmp.ne.s32.totalorder %s252, %s266
      %p268 = scmp.eq.s32.totalorder %s32, 0
      %p269 = por %p267, %p268
      %s271 = sadd.s32 %s270, 1
      %p274 = scmp.eq.s32.totalorder %s26, 1
      %p275 = scmp.ne.s32.totalorder %s270, %s272
      %p276 = scmp.eq.s32.totalorder %s26, 0
      %p277 = por %p275, %p276
      %p278 = scmp.ne.s32.totalorder %s270, %s272
      %p279 = scmp.eq.s32.totalorder %s31, 1
      %p280 = por %p278, %p279
      %p281 = scmp.ne.s32.totalorder %s272, %s273
      %p282 = scmp.eq.s32.totalorder %s31, 0
      %p283 = por %p281, %p282
      %p284 = scmp.ne.s32.totalorder %s272, %s273
      %p285 = scmp.eq.s32.totalorder %s32, 1
      %p286 = por %p284, %p285
      %p288 = scmp.ne.s32.totalorder %s273, %s287
      %p289 = scmp.eq.s32.totalorder %s32, 0
      %p290 = por %p288, %p289
      %s291 = ssub.s32 %s26, %s33
      %p292 = scmp.eq.s32.totalorder %s291, 0
      %s294 = sadd.s32 %s293, 1
      %s295 = scalar_select %p292, %s293, %s294
      %p298 = pneg %p292
      %p299 = scmp.eq.s32.totalorder %s26, 1
      %p300 = por %p298, %p299
      %p301 = scmp.ne.s32.totalorder %s293, %s296
      %p302 = scmp.eq.s32.totalorder %s26, 0
      %p303 = por %p301, %p302
      %p304 = scmp.ne.s32.totalorder %s293, %s296
      %p305 = scmp.eq.s32.totalorder %s31, 1
      %p306 = por %p304, %p305
      %p307 = scmp.ne.s32.totalorder %s296, %s297
      %p308 = scmp.eq.s32.totalorder %s31, 0
      %p309 = por %p307, %p308
      %p310 = scmp.ne.s32.totalorder %s296, %s297
      %p311 = scmp.eq.s32.totalorder %s32, 1
      %p312 = por %p310, %p311
      %p314 = scmp.ne.s32.totalorder %s297, %s313
      %p315 = scmp.eq.s32.totalorder %s32, 0
      %p316 = por %p314, %p315
      %s317 = ssub.s32 %s26, %s33
      %p318 = scmp.eq.s32.totalorder %s317, 0
      %s320 = sadd.s32 %s319, 1
      %s321 = scalar_select %p318, %s319, %s320
      %p324 = pneg %p318
      %p325 = scmp.eq.s32.totalorder %s26, 1
      %p326 = por %p324, %p325
      %p327 = scmp.ne.s32.totalorder %s319, %s322
      %p328 = scmp.eq.s32.totalorder %s26, 0
      %p329 = por %p327, %p328
      %p330 = scmp.ne.s32.totalorder %s319, %s322
      %p331 = scmp.eq.s32.totalorder %s31, 1
      %p332 = por %p330, %p331
      %p333 = scmp.ne.s32.totalorder %s322, %s323
      %p334 = scmp.eq.s32.totalorder %s31, 0
      %p335 = por %p333, %p334
      %p336 = scmp.ne.s32.totalorder %s322, %s323
      %p337 = scmp.eq.s32.totalorder %s32, 1
      %p338 = por %p336, %p337
      %p340 = scmp.ne.s32.totalorder %s323, %s339
      %p341 = scmp.eq.s32.totalorder %s32, 0
      %p342 = por %p340, %p341
      %p343 = scmp.le.s32.totalorder 1, %s26
      %p344 = scmp.lt.s32.totalorder %s26, 3
      %p345 = pnand %p343, %p344
      %p346 = pneg %p345
      // Predicated region
      $region9: #{tpu_custom_call.1} parent=5 // pred_check
        _
      $region10: #{tpu_custom_call.1} parent=5 // pred_check_branch
        %348 = sbr.rel (%p345) target = $region12
      $region11: #{tpu_custom_call.1} parent=5 // pred_region
        %s349 = ssub.s32 %s26, 1
        // Predicated region
        $region13: #{tpu_custom_call.1} parent=11 // pred_check
          %p350 = pneg %p73
        $region14: #{tpu_custom_call.1} parent=11 // pred_check_branch
          %352 = sbr.rel (%p350) target = $region16
        $region15: #{tpu_custom_call.1} parent=11 // pred_region
          _
        $region16: #{tpu_custom_call.1} parent=11 // pred_fallthru
          _
        // Predicated region
        $region17: #{tpu_custom_call.1} parent=11 // pred_check
          %p353 = pneg %p94
        $region18: #{tpu_custom_call.1} parent=11 // pred_check_branch
          %355 = sbr.rel (%p353) target = $region20
        $region19: #{tpu_custom_call.1} parent=11 // pred_region
          _
        $region20: #{tpu_custom_call.1} parent=11 // pred_fallthru
          _
        // Predicated region
        $region21: #{tpu_custom_call.1} parent=11 // pred_check
          %p356 = pneg %p115
        $region22: #{tpu_custom_call.1} parent=11 // pred_check_branch
          %358 = sbr.rel (%p356) target = $region24
        $region23: #{tpu_custom_call.1} parent=11 // pred_region
          _
        $region24: #{tpu_custom_call.1} parent=11 // pred_fallthru
          _
        // Predicated region
        $region25: #{tpu_custom_call.1} parent=11 // pred_check
          %p359 = pneg %p136
        $region26: #{tpu_custom_call.1} parent=11 // pred_check_branch
          %361 = sbr.rel (%p359) target = $region28
        $region27: #{tpu_custom_call.1} parent=11 // pred_region
          _
        $region28: #{tpu_custom_call.1} parent=11 // pred_fallthru
          _
        // Predicated region
        $region29: #{tpu_custom_call.1} parent=11 // pred_check
          %p362 = pneg %p157
        $region30: #{tpu_custom_call.1} parent=11 // pred_check_branch
          %364 = sbr.rel (%p362) target = $region32
        $region31: #{tpu_custom_call.1} parent=11 // pred_region
          _
        $region32: #{tpu_custom_call.1} parent=11 // pred_fallthru
          _
        // Predicated region
        $region33: #{tpu_custom_call.1} parent=11 // pred_check
          %p365 = pneg %p178
        $region34: #{tpu_custom_call.1} parent=11 // pred_check_branch
          %367 = sbr.rel (%p365) target = $region36
        $region35: #{tpu_custom_call.1} parent=11 // pred_region
          _
        $region36: #{tpu_custom_call.1} parent=11 // pred_fallthru
          _
        // Predicated region
        $region37: #{tpu_custom_call.1} parent=11 // pred_check
          %p368 = pneg %p199
        $region38: #{tpu_custom_call.1} parent=11 // pred_check_branch
          %370 = sbr.rel (%p368) target = $region40
        $region39: #{tpu_custom_call.1} parent=11 // pred_region
          _
        $region40: #{tpu_custom_call.1} parent=11 // pred_fallthru
          _
        // Predicated region
        $region41: #{tpu_custom_call.1} parent=11 // pred_check
          %p371 = pneg %p220
        $region42: #{tpu_custom_call.1} parent=11 // pred_check_branch
          %373 = sbr.rel (%p371) target = $region44
        $region43: #{tpu_custom_call.1} parent=11 // pred_region
          _
        $region44: #{tpu_custom_call.1} parent=11 // pred_fallthru
          _
        // Predicated region
        $region45: #{tpu_custom_call.1} parent=11 // pred_check
          %p374 = pneg %p241
        $region46: #{tpu_custom_call.1} parent=11 // pred_check_branch
          %376 = sbr.rel (%p374) target = $region48
        $region47: #{tpu_custom_call.1} parent=11 // pred_region
          _
        $region48: #{tpu_custom_call.1} parent=11 // pred_fallthru
          _
        // Predicated region
        $region49: #{tpu_custom_call.1} parent=11 // pred_check
          %p377 = pneg %p262
        $region50: #{tpu_custom_call.1} parent=11 // pred_check_branch
          %379 = sbr.rel (%p377) target = $region52
        $region51: #{tpu_custom_call.1} parent=11 // pred_region
          _
        $region52: #{tpu_custom_call.1} parent=11 // pred_fallthru
          _
        // Predicated region
        $region53: #{tpu_custom_call.1} parent=11 // pred_check
          %p380 = pneg %p283
        $region54: #{tpu_custom_call.1} parent=11 // pred_check_branch
          %382 = sbr.rel (%p380) target = $region56
        $region55: #{tpu_custom_call.1} parent=11 // pred_region
          _
        $region56: #{tpu_custom_call.1} parent=11 // pred_fallthru
          _
      $region12: #{tpu_custom_call.1} parent=5 // pred_fallthru
        _
      %p383 = scmp.lt.s32.totalorder %s26, 2
      // Predicated region
      $region57: #{tpu_custom_call.1} parent=5 // pred_check
        %p384 = pneg %p383
      $region58: #{tpu_custom_call.1} parent=5 // pred_check_branch
        %386 = sbr.rel (%p384) target = $region60
      $region59: #{tpu_custom_call.1} parent=5 // pred_region
        // Predicated region
        $region61: #{tpu_custom_call.1} parent=59 // pred_check
          %p387 = pneg %p46
        $region62: #{tpu_custom_call.1} parent=59 // pred_check_branch
          %389 = sbr.rel (%p387) target = $region64
        $region63: #{tpu_custom_call.1} parent=59 // pred_region
          %s390 = smul.u32 2, %s26
          %p391 = scmp.lt.s32.totalorder %s390, 3
          %s392 = scalar_select %p391, %s390, 3
          %s393 = smul.addr %s392, 8
          %s394 = scalar_lea.vmem %s0, %s393
          %s395 = smul.u32 2, %s26
        $region64: #{tpu_custom_call.1} parent=59 // pred_fallthru
          _
      $region60: #{tpu_custom_call.1} parent=5 // pred_fallthru
        _
      %p396 = scmp.le.s32.totalorder 1, %s26
      %p397 = scmp.lt.s32.totalorder %s26, 3
      %p398 = pnand %p396, %p397
      %p399 = pneg %p398
      // Predicated region
      $region65: #{tpu_custom_call.1} parent=5 // pred_check
        _
      $region66: #{tpu_custom_call.1} parent=5 // pred_check_branch
        %401 = sbr.rel (%p398) target = $region68
      $region67: #{tpu_custom_call.1} parent=5 // pred_region
        %s402 = ssub.s32 %s26, 1
        %s403 = smul.u32 2, %s31
        %p404 = scmp.lt.s32.totalorder %s403, 3
        %s405 = scalar_select %p404, %s403, 3
        %s406 = smul.addr %s405, 8
        %s407 = scalar_lea.vmem %s0, %s406
        %p408 = pneg %p52
        %p409 = pneg %p49
        %p410 = pneg %p73
        %p411 = pneg %p70
        %p412 = pneg %p94
        %p413 = pneg %p91
        %p414 = pneg %p115
        %p415 = pneg %p112
        %p416 = pneg %p136
        %p417 = pneg %p133
        %p418 = pneg %p157
        %p419 = pneg %p154
        %p420 = pneg %p178
        %p421 = pneg %p175
        %p422 = pneg %p199
        %p423 = pneg %p196
        %p424 = pneg %p220
        %p425 = pneg %p217
        %p426 = pneg %p241
        %p427 = pneg %p238
        %p428 = pneg %p262
        %p429 = pneg %p259
        %p430 = pneg %p283
        %p431 = pneg %p280
        %p432 = pneg %p309
        %p433 = pneg %p306
        %s434 = sand.u32 %s296, 1
        %s435 = scalar_lea.sflag [#allocation3], %s434
        %s436 = sand.u32 %s296, 1
        %s437 = smul.addr %s436, 16
        %s438 = scalar_lea.vmem [#allocation2], %s437
        %p439 = pneg %p335
        %p440 = pneg %p332
        %s441 = sand.u32 %s322, 1
        %s442 = scalar_lea.sflag [#allocation5], %s441
        %s443 = sand.u32 %s322, 1
        %s444 = smul.addr %s443, 8
        %s445 = scalar_lea.vmem [#allocation4], %s444
        %s446 = smul.u32 2, %s31
        %p447 = scmp.lt.s32.totalorder %s446, 3
        %s448 = scalar_select %p447, %s446, 3
        %s449 = smul.addr %s448, 8
        %s450 = scalar_lea.vmem %s0, %s449
        %s451 = smul.u32 2, %s31
        %s452 = smul.u32 2, %s31
        %s453 = smul.u32 2, %s31
        %v455 = vld [vmem:[%s450] sm:$0xff]
        %v456 = vld [vmem:[%s450 + $0x8] sm:$0xff]
        %v457 = vld [vmem:[%s1] sm:$0x1]
        %v458 = vld [vmem:[%s2] sm:$0x1]
        %vm459 = vcmask 261120
        %v460 = vsel %vm459, %v455, 0.0
        %461 = vadd.xlane.f32.xlu0 %v460
        %v462 = vpop.xlane.xlu0 %461
        %v463 = vsel %vm459, %v456, 0.0
        %464 = vadd.xlane.f32.xlu0 %v463
        %v465 = vpop.xlane.xlu0 %464
        %v466 = vrcp.pop 32.0
        %v467 = vmul.f32 %v462, %v466
        %v468 = vmul.f32 %v465, %v466
        %v469 = vsub.f32 %v455, %v467
        %v470 = vsub.f32 %v456, %v468
        %v471 = vmul.f32 %v469, %v469
        %v472 = vmul.f32 %v470, %v470
        %v473 = vsel %vm459, %v471, 0.0
        %474 = vadd.xlane.f32.xlu0 %v473
        %v475 = vpop.xlane.xlu0 %474
        %v476 = vsel %vm459, %v472, 0.0
        %477 = vadd.xlane.f32.xlu0 %v476
        %v478 = vpop.xlane.xlu0 %477
        %v479 = vmul.f32 %v475, %v466
        %v480 = vmul.f32 %v478, %v466
        %v481 = vadd.f32 %v479, 1e-05
        %v482 = vadd.f32 %v480, 1e-05
        %v483 = vrsqrt.pop %v481
        %v484 = vrsqrt.pop %v482
        %v485 = vmul.f32 %v469, %v483
        %v486 = vmul.f32 %v470, %v484
        %v488 = vlaneseq
        %v489 = vshrl.u32 %v488, 7
        %v490 = vsub.s32 0, %v489
        %v491 = vrot.slane %v457, %v490
        %v493 = vmul.f32 %v485, %v491
        %v494 = vmul.f32 %v486, %v491
        %v496 = vlaneseq
        %v497 = vshrl.u32 %v496, 7
        %v498 = vsub.s32 0, %v497
        %v499 = vrot.slane %v458, %v498
        %v501 = vadd.f32 %v493, %v499
        %v502 = vadd.f32 %v494, %v499
        %v503 = vpack.c.bf16 %v502, %v501
        %v504 = vld [vmem:[%s3] sm:$0xf]
        %v505 = vld [vmem:[%s3 + $0x4] sm:$0xf]
        %v506 = vld [vmem:[%s3 + $0x8] sm:$0xf]
        %v507 = vld [vmem:[%s3 + $0xc] sm:$0xf]
        %v512 = vunpack.c.l.b16 %v504
        %v513 = vunpack.c.l.b16 %v505
        %v514 = vunpack.c.l.b16 %v506
        %v515 = vunpack.c.l.b16 %v507
        %v516 = vpack.c.b16 %v513, %v512
        %v517 = vpack.c.b16 %v515, %v514
        %v521 = vsel %vm459, %v503, 0
        %523 = vmatprep.subr.bf16.mxu0 0
        %524 = vmatpush1.bf16.msra.mxu0 %v516
        %525 = vmatprep.subr.bf16.mxu0 0
        %526 = vmatpush1.bf16.msra.mxu0 %v517
        %527 = vmatprep.subr.bf16.mxu0 0
        %528 = vmatpush1.bf16.msra.mxu0 0
        %529 = vmatprep.subr.bf16.mxu0 0
        %530 = vmatpush1.bf16.msra.mxu0 0
        %531 = vmatprep.subr.bf16.mxu0 0
        %532 = vmatpush1.bf16.msra.mxu0 0
        %533 = vmatprep.subr.bf16.mxu0 0
        %534 = vmatpush1.bf16.msra.mxu0 0
        %535 = vmatprep.subr.bf16.mxu0 0
        %536 = vmatpush1.bf16.msra.mxu0 0
        %537 = vmatprep.subr.bf16.mxu0 0
        %538 = vmatpush1.bf16.msra.mxu0 0
        %539 = vmatprep.subr.bf16.mxu0 0
        %540 = vmatpush1.bf16.msra.mxu0 0
        %541 = vmatprep.subr.bf16.mxu0 0
        %542 = vmatpush1.bf16.msra.mxu0 0
        %543 = vmatprep.subr.bf16.mxu0 0
        %544 = vmatpush1.bf16.msra.mxu0 0
        %545 = vmatprep.subr.bf16.mxu0 0
        %546 = vmatpush1.bf16.msra.mxu0 0
        %547 = vmatprep.subr.bf16.mxu0 0
        %548 = vmatpush1.bf16.msra.mxu0 0
        %549 = vmatprep.subr.bf16.mxu0 0
        %550 = vmatpush1.bf16.msra.mxu0 0
        %551 = vmatprep.subr.bf16.mxu0 0
        %552 = vmatpush1.bf16.msra.mxu0 0
        %553 = vmatprep.subr.bf16.mxu0 0
        %554 = vmatpush1.bf16.msra.mxu0 0
        %555 = vmatprep.mubr.bf16.mxu0 0
        %556 = vmatmul.mubr.bf16.gmra.mrb[0].mxu0 %v521
        %v557 = vpop.f32.mrb[0].mxu0
        %v558 = vadd.f32 0.0, %v557
        %v559 = vpop.f32.mrb[0].mxu0
        %v560 = vpop.f32.mrb[0].mxu0
        %v561 = vadd.f32 0.0, %v560
        %v562 = vpop.f32.mrb[0].mxu0
        %563 = vdwg.mxu0
        %564 = vxpose.xlu0.b32.start [1/16] %v558, 128
        %565 = vxpose.xlu0.b32.cont [2/16] 0.0, 128
        %566 = vxpose.xlu0.b32.cont [3/16] 0.0, 128
        %567 = vxpose.xlu0.b32.cont [4/16] 0.0, 128
        %568 = vxpose.xlu0.b32.cont [5/16] 0.0, 128
        %569 = vxpose.xlu0.b32.cont [6/16] 0.0, 128
        %570 = vxpose.xlu0.b32.cont [7/16] 0.0, 128
        %571 = vxpose.xlu0.b32.cont [8/16] 0.0, 128
        %572 = vxpose.xlu0.b32.cont [9/16] 0.0, 128
        %573 = vxpose.xlu0.b32.cont [10/16] 0.0, 128
        %574 = vxpose.xlu0.b32.cont [11/16] 0.0, 128
        %575 = vxpose.xlu0.b32.cont [12/16] 0.0, 128
        %576 = vxpose.xlu0.b32.cont [13/16] 0.0, 128
        %577 = vxpose.xlu0.b32.cont [14/16] 0.0, 128
        %578 = vxpose.xlu0.b32.cont [15/16] 0.0, 128
        %579 = vxpose.xlu0.b32.end [16/16] 0.0, 128
        %v580 = vpop.trf.xlu0
        %v581 = vpop.trf.xlu0
        %v582 = vpop.trf.xlu0
        %v583 = vpop.trf.xlu0
        %v584 = vpop.trf.xlu0
        %v585 = vpop.trf.xlu0
        %v586 = vpop.trf.xlu0
        %v587 = vpop.trf.xlu0
        %v588 = vpop.trf.xlu0
        %v589 = vpop.trf.xlu0
        %v590 = vpop.trf.xlu0
        %v591 = vpop.trf.xlu0
        %v592 = vpop.trf.xlu0
        %v593 = vpop.trf.xlu0
        %v594 = vpop.trf.xlu0
        %v595 = vpop.trf.xlu0
        %596 = vxpose.xlu0.b32.start [1/16] %v561, 128
        %597 = vxpose.xlu0.b32.cont [2/16] 0.0, 128
        %598 = vxpose.xlu0.b32.cont [3/16] 0.0, 128
        %599 = vxpose.xlu0.b32.cont [4/16] 0.0, 128
        %600 = vxpose.xlu0.b32.cont [5/16] 0.0, 128
        %601 = vxpose.xlu0.b32.cont [6/16] 0.0, 128
        %602 = vxpose.xlu0.b32.cont [7/16] 0.0, 128
        %603 = vxpose.xlu0.b32.cont [8/16] 0.0, 128
        %604 = vxpose.xlu0.b32.cont [9/16] 0.0, 128
        %605 = vxpose.xlu0.b32.cont [10/16] 0.0, 128
        %606 = vxpose.xlu0.b32.cont [11/16] 0.0, 128
        %607 = vxpose.xlu0.b32.cont [12/16] 0.0, 128
        %608 = vxpose.xlu0.b32.cont [13/16] 0.0, 128
        %609 = vxpose.xlu0.b32.cont [14/16] 0.0, 128
        %610 = vxpose.xlu0.b32.cont [15/16] 0.0, 128
        %611 = vxpose.xlu0.b32.end [16/16] 0.0, 128
        %v612 = vpop.trf.xlu0
        %v613 = vpop.trf.xlu0
        %v614 = vpop.trf.xlu0
        %v615 = vpop.trf.xlu0
        %v616 = vpop.trf.xlu0
        %v617 = vpop.trf.xlu0
        %v618 = vpop.trf.xlu0
        %v619 = vpop.trf.xlu0
        %v620 = vpop.trf.xlu0
        %v621 = vpop.trf.xlu0
        %v622 = vpop.trf.xlu0
        %v623 = vpop.trf.xlu0
        %v624 = vpop.trf.xlu0
        %v625 = vpop.trf.xlu0
        %v626 = vpop.trf.xlu0
        %v627 = vpop.trf.xlu0
        %628 = vxpose.xlu0.b32.start [1/16] %v580, 128
        %629 = vxpose.xlu0.b32.cont [2/16] 0.0, 128
        %630 = vxpose.xlu0.b32.cont [3/16] 0.0, 128
        %631 = vxpose.xlu0.b32.cont [4/16] 0.0, 128
        %632 = vxpose.xlu0.b32.cont [5/16] 0.0, 128
        %633 = vxpose.xlu0.b32.cont [6/16] 0.0, 128
        %634 = vxpose.xlu0.b32.cont [7/16] 0.0, 128
        %635 = vxpose.xlu0.b32.cont [8/16] 0.0, 128
        %636 = vxpose.xlu0.b32.cont [9/16] 0.0, 128
        %637 = vxpose.xlu0.b32.cont [10/16] 0.0, 128
        %638 = vxpose.xlu0.b32.cont [11/16] 0.0, 128
        %639 = vxpose.xlu0.b32.cont [12/16] 0.0, 128
        %640 = vxpose.xlu0.b32.cont [13/16] 0.0, 128
        %641 = vxpose.xlu0.b32.cont [14/16] 0.0, 128
        %642 = vxpose.xlu0.b32.cont [15/16] 0.0, 128
        %643 = vxpose.xlu0.b32.end [16/16] 0.0, 128
        %v644 = vpop.trf.xlu0
        %v645 = vpop.trf.xlu0
        %v646 = vpop.trf.xlu0
        %v647 = vpop.trf.xlu0
        %v648 = vpop.trf.xlu0
        %v649 = vpop.trf.xlu0
        %v650 = vpop.trf.xlu0
        %v651 = vpop.trf.xlu0
        %v652 = vpop.trf.xlu0
        %v653 = vpop.trf.xlu0
        %v654 = vpop.trf.xlu0
        %v655 = vpop.trf.xlu0
        %v656 = vpop.trf.xlu0
        %v657 = vpop.trf.xlu0
        %v658 = vpop.trf.xlu0
        %v659 = vpop.trf.xlu0
        %660 = vxpose.xlu0.b32.start [1/16] %v581, 128
        %661 = vxpose.xlu0.b32.cont [2/16] 0.0, 128
        %662 = vxpose.xlu0.b32.cont [3/16] 0.0, 128
        %663 = vxpose.xlu0.b32.cont [4/16] 0.0, 128
        %664 = vxpose.xlu0.b32.cont [5/16] 0.0, 128
        %665 = vxpose.xlu0.b32.cont [6/16] 0.0, 128
        %666 = vxpose.xlu0.b32.cont [7/16] 0.0, 128
        %667 = vxpose.xlu0.b32.cont [8/16] 0.0, 128
        %668 = vxpose.xlu0.b32.cont [9/16] 0.0, 128
        %669 = vxpose.xlu0.b32.cont [10/16] 0.0, 128
        %670 = vxpose.xlu0.b32.cont [11/16] 0.0, 128
        %671 = vxpose.xlu0.b32.cont [12/16] 0.0, 128
        %672 = vxpose.xlu0.b32.cont [13/16] 0.0, 128
        %673 = vxpose.xlu0.b32.cont [14/16] 0.0, 128
        %674 = vxpose.xlu0.b32.cont [15/16] 0.0, 128
        %675 = vxpose.xlu0.b32.end [16/16] 0.0, 128
        %v676 = vpop.trf.xlu0
        %v677 = vpop.trf.xlu0
        %v678 = vpop.trf.xlu0
        %v679 = vpop.trf.xlu0
        %v680 = vpop.trf.xlu0
        %v681 = vpop.trf.xlu0
        %v682 = vpop.trf.xlu0
        %v683 = vpop.trf.xlu0
        %v684 = vpop.trf.xlu0
        %v685 = vpop.trf.xlu0
        %v686 = vpop.trf.xlu0
        %v687 = vpop.trf.xlu0
        %v688 = vpop.trf.xlu0
        %v689 = vpop.trf.xlu0
        %v690 = vpop.trf.xlu0
        %v691 = vpop.trf.xlu0
        %692 = vxpose.xlu0.b32.start [1/16] %v582, 128
        %693 = vxpose.xlu0.b32.cont [2/16] 0.0, 128
        %694 = vxpose.xlu0.b32.cont [3/16] 0.0, 128
        %695 = vxpose.xlu0.b32.cont [4/16] 0.0, 128
        %696 = vxpose.xlu0.b32.cont [5/16] 0.0, 128
        %697 = vxpose.xlu0.b32.cont [6/16] 0.0, 128
        %698 = vxpose.xlu0.b32.cont [7/16] 0.0, 128
        %699 = vxpose.xlu0.b32.cont [8/16] 0.0, 128
        %700 = vxpose.xlu0.b32.cont [9/16] 0.0, 128
        %701 = vxpose.xlu0.b32.cont [10/16] 0.0, 128
        %702 = vxpose.xlu0.b32.cont [11/16] 0.0, 128
        %703 = vxpose.xlu0.b32.cont [12/16] 0.0, 128
        %704 = vxpose.xlu0.b32.cont [13/16] 0.0, 128
        %705 = vxpose.xlu0.b32.cont [14/16] 0.0, 128
        %706 = vxpose.xlu0.b32.cont [15/16] 0.0, 128
        %707 = vxpose.xlu0.b32.end [16/16] 0.0, 128
        %v708 = vpop.trf.xlu0
        %v709 = vpop.trf.xlu0
        %v710 = vpop.trf.xlu0
        %v711 = vpop.trf.xlu0
        %v712 = vpop.trf.xlu0
        %v713 = vpop.trf.xlu0
        %v714 = vpop.trf.xlu0
        %v715 = vpop.trf.xlu0
        %v716 = vpop.trf.xlu0
        %v717 = vpop.trf.xlu0
        %v718 = vpop.trf.xlu0
        %v719 = vpop.trf.xlu0
        %v720 = vpop.trf.xlu0
        %v721 = vpop.trf.xlu0
        %v722 = vpop.trf.xlu0
        %v723 = vpop.trf.xlu0
        %724 = vxpose.xlu0.b32.start [1/16] %v583, 128
        %725 = vxpose.xlu0.b32.cont [2/16] 0.0, 128
        %726 = vxpose.xlu0.b32.cont [3/16] 0.0, 128
        %727 = vxpose.xlu0.b32.cont [4/16] 0.0, 128
        %728 = vxpose.xlu0.b32.cont [5/16] 0.0, 128
        %729 = vxpose.xlu0.b32.cont [6/16] 0.0, 128
        %730 = vxpose.xlu0.b32.cont [7/16] 0.0, 128
        %731 = vxpose.xlu0.b32.cont [8/16] 0.0, 128
        %732 = vxpose.xlu0.b32.cont [9/16] 0.0, 128
        %733 = vxpose.xlu0.b32.cont [10/16] 0.0, 128
        %734 = vxpose.xlu0.b32.cont [11/16] 0.0, 128
        %735 = vxpose.xlu0.b32.cont [12/16] 0.0, 128
        %736 = vxpose.xlu0.b32.cont [13/16] 0.0, 128
        %737 = vxpose.xlu0.b32.cont [14/16] 0.0, 128
        %738 = vxpose.xlu0.b32.cont [15/16] 0.0, 128
        %739 = vxpose.xlu0.b32.end [16/16] 0.0, 128
        %v740 = vpop.trf.xlu0
        %v741 = vpop.trf.xlu0
        %v742 = vpop.trf.xlu0
        %v743 = vpop.trf.xlu0
        %v744 = vpop.trf.xlu0
        %v745 = vpop.trf.xlu0
        %v746 = vpop.trf.xlu0
        %v747 = vpop.trf.xlu0
        %v748 = vpop.trf.xlu0
        %v749 = vpop.trf.xlu0
        %v750 = vpop.trf.xlu0
        %v751 = vpop.trf.xlu0
        %v752 = vpop.trf.xlu0
        %v753 = vpop.trf.xlu0
        %v754 = vpop.trf.xlu0
        %v755 = vpop.trf.xlu0
        %756 = vxpose.xlu0.b32.start [1/16] %v612, 128
        %757 = vxpose.xlu0.b32.cont [2/16] 0.0, 128
        %758 = vxpose.xlu0.b32.cont [3/16] 0.0, 128
        %759 = vxpose.xlu0.b32.cont [4/16] 0.0, 128
        %760 = vxpose.xlu0.b32.cont [5/16] 0.0, 128
        %761 = vxpose.xlu0.b32.cont [6/16] 0.0, 128
        %762 = vxpose.xlu0.b32.cont [7/16] 0.0, 128
        %763 = vxpose.xlu0.b32.cont [8/16] 0.0, 128
        %764 = vxpose.xlu0.b32.cont [9/16] 0.0, 128
        %765 = vxpose.xlu0.b32.cont [10/16] 0.0, 128
        %766 = vxpose.xlu0.b32.cont [11/16] 0.0, 128
        %767 = vxpose.xlu0.b32.cont [12/16] 0.0, 128
        %768 = vxpose.xlu0.b32.cont [13/16] 0.0, 128
        %769 = vxpose.xlu0.b32.cont [14/16] 0.0, 128
        %770 = vxpose.xlu0.b32.cont [15/16] 0.0, 128
        %771 = vxpose.xlu0.b32.end [16/16] 0.0, 128
        %v772 = vpop.trf.xlu0
        %v773 = vpop.trf.xlu0
        %v774 = vpop.trf.xlu0
        %v775 = vpop.trf.xlu0
        %v776 = vpop.trf.xlu0
        %v777 = vpop.trf.xlu0
        %v778 = vpop.trf.xlu0
        %v779 = vpop.trf.xlu0
        %v780 = vpop.trf.xlu0
        %v781 = vpop.trf.xlu0
        %v782 = vpop.trf.xlu0
        %v783 = vpop.trf.xlu0
        %v784 = vpop.trf.xlu0
        %v785 = vpop.trf.xlu0
        %v786 = vpop.trf.xlu0
        %v787 = vpop.trf.xlu0
        %788 = vxpose.xlu0.b32.start [1/16] %v613, 128
        %789 = vxpose.xlu0.b32.cont [2/16] 0.0, 128
        %790 = vxpose.xlu0.b32.cont [3/16] 0.0, 128
        %791 = vxpose.xlu0.b32.cont [4/16] 0.0, 128
        %792 = vxpose.xlu0.b32.cont [5/16] 0.0, 128
        %793 = vxpose.xlu0.b32.cont [6/16] 0.0, 128
        %794 = vxpose.xlu0.b32.cont [7/16] 0.0, 128
        %795 = vxpose.xlu0.b32.cont [8/16] 0.0, 128
        %796 = vxpose.xlu0.b32.cont [9/16] 0.0, 128
        %797 = vxpose.xlu0.b32.cont [10/16] 0.0, 128
        %798 = vxpose.xlu0.b32.cont [11/16] 0.0, 128
        %799 = vxpose.xlu0.b32.cont [12/16] 0.0, 128
        %800 = vxpose.xlu0.b32.cont [13/16] 0.0, 128
        %801 = vxpose.xlu0.b32.cont [14/16] 0.0, 128
        %802 = vxpose.xlu0.b32.cont [15/16] 0.0, 128
        %803 = vxpose.xlu0.b32.end [16/16] 0.0, 128
        %v804 = vpop.trf.xlu0
        %v805 = vpop.trf.xlu0
        %v806 = vpop.trf.xlu0
        %v807 = vpop.trf.xlu0
        %v808 = vpop.trf.xlu0
        %v809 = vpop.trf.xlu0
        %v810 = vpop.trf.xlu0
        %v811 = vpop.trf.xlu0
        %v812 = vpop.trf.xlu0
        %v813 = vpop.trf.xlu0
        %v814 = vpop.trf.xlu0
        %v815 = vpop.trf.xlu0
        %v816 = vpop.trf.xlu0
        %v817 = vpop.trf.xlu0
        %v818 = vpop.trf.xlu0
        %v819 = vpop.trf.xlu0
        %820 = vxpose.xlu0.b32.start [1/16] %v614, 128
        %821 = vxpose.xlu0.b32.cont [2/16] 0.0, 128
        %822 = vxpose.xlu0.b32.cont [3/16] 0.0, 128
        %823 = vxpose.xlu0.b32.cont [4/16] 0.0, 128
        %824 = vxpose.xlu0.b32.cont [5/16] 0.0, 128
        %825 = vxpose.xlu0.b32.cont [6/16] 0.0, 128
        %826 = vxpose.xlu0.b32.cont [7/16] 0.0, 128
        %827 = vxpose.xlu0.b32.cont [8/16] 0.0, 128
        %828 = vxpose.xlu0.b32.cont [9/16] 0.0, 128
        %829 = vxpose.xlu0.b32.cont [10/16] 0.0, 128
        %830 = vxpose.xlu0.b32.cont [11/16] 0.0, 128
        %831 = vxpose.xlu0.b32.cont [12/16] 0.0, 128
        %832 = vxpose.xlu0.b32.cont [13/16] 0.0, 128
        %833 = vxpose.xlu0.b32.cont [14/16] 0.0, 128
        %834 = vxpose.xlu0.b32.cont [15/16] 0.0, 128
        %835 = vxpose.xlu0.b32.end [16/16] 0.0, 128
        %v836 = vpop.trf.xlu0
        %v837 = vpop.trf.xlu0
        %v838 = vpop.trf.xlu0
        %v839 = vpop.trf.xlu0
        %v840 = vpop.trf.xlu0
        %v841 = vpop.trf.xlu0
        %v842 = vpop.trf.xlu0
        %v843 = vpop.trf.xlu0
        %v844 = vpop.trf.xlu0
        %v845 = vpop.trf.xlu0
        %v846 = vpop.trf.xlu0
        %v847 = vpop.trf.xlu0
        %v848 = vpop.trf.xlu0
        %v849 = vpop.trf.xlu0
        %v850 = vpop.trf.xlu0
        %v851 = vpop.trf.xlu0
        %852 = vxpose.xlu0.b32.start [1/16] %v615, 128
        %853 = vxpose.xlu0.b32.cont [2/16] 0.0, 128
        %854 = vxpose.xlu0.b32.cont [3/16] 0.0, 128
        %855 = vxpose.xlu0.b32.cont [4/16] 0.0, 128
        %856 = vxpose.xlu0.b32.cont [5/16] 0.0, 128
        %857 = vxpose.xlu0.b32.cont [6/16] 0.0, 128
        %858 = vxpose.xlu0.b32.cont [7/16] 0.0, 128
        %859 = vxpose.xlu0.b32.cont [8/16] 0.0, 128
        %860 = vxpose.xlu0.b32.cont [9/16] 0.0, 128
        %861 = vxpose.xlu0.b32.cont [10/16] 0.0, 128
        %862 = vxpose.xlu0.b32.cont [11/16] 0.0, 128
        %863 = vxpose.xlu0.b32.cont [12/16] 0.0, 128
        %864 = vxpose.xlu0.b32.cont [13/16] 0.0, 128
        %865 = vxpose.xlu0.b32.cont [14/16] 0.0, 128
        %866 = vxpose.xlu0.b32.cont [15/16] 0.0, 128
        %867 = vxpose.xlu0.b32.end [16/16] 0.0, 128
        %v868 = vpop.trf.xlu0
        %v869 = vpop.trf.xlu0
        %v870 = vpop.trf.xlu0
        %v871 = vpop.trf.xlu0
        %v872 = vpop.trf.xlu0
        %v873 = vpop.trf.xlu0
        %v874 = vpop.trf.xlu0
        %v875 = vpop.trf.xlu0
        %v876 = vpop.trf.xlu0
        %v877 = vpop.trf.xlu0
        %v878 = vpop.trf.xlu0
        %v879 = vpop.trf.xlu0
        %v880 = vpop.trf.xlu0
        %v881 = vpop.trf.xlu0
        %v882 = vpop.trf.xlu0
        %v883 = vpop.trf.xlu0
        %886 = vrot.lane.b32.xlu0 %v558, 96
        %v887 = vpop.permute.xlu0 %886
        %888 = vrot.lane.b32.xlu0 %v561, 96
        %v889 = vpop.permute.xlu0 %888
        %892 = vxpose.xlu0.b32.start [1/16] %v887, 128
        %893 = vxpose.xlu0.b32.cont [2/16] 0.0, 128
        %894 = vxpose.xlu0.b32.cont [3/16] 0.0, 128
        %895 = vxpose.xlu0.b32.cont [4/16] 0.0, 128
        %896 = vxpose.xlu0.b32.cont [5/16] 0.0, 128
        %897 = vxpose.xlu0.b32.cont [6/16] 0.0, 128
        %898 = vxpose.xlu0.b32.cont [7/16] 0.0, 128
        %899 = vxpose.xlu0.b32.cont [8/16] 0.0, 128
        %900 = vxpose.xlu0.b32.cont [9/16] 0.0, 128
        %901 = vxpose.xlu0.b32.cont [10/16] 0.0, 128
        %902 = vxpose.xlu0.b32.cont [11/16] 0.0, 128
        %903 = vxpose.xlu0.b32.cont [12/16] 0.0, 128
        %904 = vxpose.xlu0.b32.cont [13/16] 0.0, 128
        %905 = vxpose.xlu0.b32.cont [14/16] 0.0, 128
        %906 = vxpose.xlu0.b32.cont [15/16] 0.0, 128
        %907 = vxpose.xlu0.b32.end [16/16] 0.0, 128
        %v908 = vpop.trf.xlu0
        %v909 = vpop.trf.xlu0
        %v910 = vpop.trf.xlu0
        %v911 = vpop.trf.xlu0
        %v912 = vpop.trf.xlu0
        %v913 = vpop.trf.xlu0
        %v914 = vpop.trf.xlu0
        %v915 = vpop.trf.xlu0
        %v916 = vpop.trf.xlu0
        %v917 = vpop.trf.xlu0
        %v918 = vpop.trf.xlu0
        %v919 = vpop.trf.xlu0
        %v920 = vpop.trf.xlu0
        %v921 = vpop.trf.xlu0
        %v922 = vpop.trf.xlu0
        %v923 = vpop.trf.xlu0
        %924 = vxpose.xlu0.b32.start [1/16] %v889, 128
        %925 = vxpose.xlu0.b32.cont [2/16] 0.0, 128
        %926 = vxpose.xlu0.b32.cont [3/16] 0.0, 128
        %927 = vxpose.xlu0.b32.cont [4/16] 0.0, 128
        %928 = vxpose.xlu0.b32.cont [5/16] 0.0, 128
        %929 = vxpose.xlu0.b32.cont [6/16] 0.0, 128
        %930 = vxpose.xlu0.b32.cont [7/16] 0.0, 128
        %931 = vxpose.xlu0.b32.cont [8/16] 0.0, 128
        %932 = vxpose.xlu0.b32.cont [9/16] 0.0, 128
        %933 = vxpose.xlu0.b32.cont [10/16] 0.0, 128
        %934 = vxpose.xlu0.b32.cont [11/16] 0.0, 128
        %935 = vxpose.xlu0.b32.cont [12/16] 0.0, 128
        %936 = vxpose.xlu0.b32.cont [13/16] 0.0, 128
        %937 = vxpose.xlu0.b32.cont [14/16] 0.0, 128
        %938 = vxpose.xlu0.b32.cont [15/16] 0.0, 128
        %939 = vxpose.xlu0.b32.end [16/16] 0.0, 128
        %v940 = vpop.trf.xlu0
        %v941 = vpop.trf.xlu0
        %v942 = vpop.trf.xlu0
        %v943 = vpop.trf.xlu0
        %v944 = vpop.trf.xlu0
        %v945 = vpop.trf.xlu0
        %v946 = vpop.trf.xlu0
        %v947 = vpop.trf.xlu0
        %v948 = vpop.trf.xlu0
        %v949 = vpop.trf.xlu0
        %v950 = vpop.trf.xlu0
        %v951 = vpop.trf.xlu0
        %v952 = vpop.trf.xlu0
        %v953 = vpop.trf.xlu0
        %v954 = vpop.trf.xlu0
        %v955 = vpop.trf.xlu0
        %956 = vrot.lane.b32.xlu0 %v558, 64
        %v957 = vpop.permute.xlu0 %956
        %958 = vrot.lane.b32.xlu0 %v561, 64
        %v959 = vpop.permute.xlu0 %958
        %962 = vxpose.xlu0.b32.start [1/16] %v957, 128
        %963 = vxpose.xlu0.b32.cont [2/16] 0.0, 128
        %964 = vxpose.xlu0.b32.cont [3/16] 0.0, 128
        %965 = vxpose.xlu0.b32.cont [4/16] 0.0, 128
        %966 = vxpose.xlu0.b32.cont [5/16] 0.0, 128
        %967 = vxpose.xlu0.b32.cont [6/16] 0.0, 128
        %968 = vxpose.xlu0.b32.cont [7/16] 0.0, 128
        %969 = vxpose.xlu0.b32.cont [8/16] 0.0, 128
        %970 = vxpose.xlu0.b32.cont [9/16] 0.0, 128
        %971 = vxpose.xlu0.b32.cont [10/16] 0.0, 128
        %972 = vxpose.xlu0.b32.cont [11/16] 0.0, 128
        %973 = vxpose.xlu0.b32.cont [12/16] 0.0, 128
        %974 = vxpose.xlu0.b32.cont [13/16] 0.0, 128
        %975 = vxpose.xlu0.b32.cont [14/16] 0.0, 128
        %976 = vxpose.xlu0.b32.cont [15/16] 0.0, 128
        %977 = vxpose.xlu0.b32.end [16/16] 0.0, 128
        %v978 = vpop.trf.xlu0
        %v979 = vpop.trf.xlu0
        %v980 = vpop.trf.xlu0
        %v981 = vpop.trf.xlu0
        %v982 = vpop.trf.xlu0
        %v983 = vpop.trf.xlu0
        %v984 = vpop.trf.xlu0
        %v985 = vpop.trf.xlu0
        %v986 = vpop.trf.xlu0
        %v987 = vpop.trf.xlu0
        %v988 = vpop.trf.xlu0
        %v989 = vpop.trf.xlu0
        %v990 = vpop.trf.xlu0
        %v991 = vpop.trf.xlu0
        %v992 = vpop.trf.xlu0
        %v993 = vpop.trf.xlu0
        %994 = vxpose.xlu0.b32.start [1/16] %v959, 128
        %995 = vxpose.xlu0.b32.cont [2/16] 0.0, 128
        %996 = vxpose.xlu0.b32.cont [3/16] 0.0, 128
        %997 = vxpose.xlu0.b32.cont [4/16] 0.0, 128
        %998 = vxpose.xlu0.b32.cont [5/16] 0.0, 128
        %999 = vxpose.xlu0.b32.cont [6/16] 0.0, 128
        %1000 = vxpose.xlu0.b32.cont [7/16] 0.0, 128
        %1001 = vxpose.xlu0.b32.cont [8/16] 0.0, 128
        %1002 = vxpose.xlu0.b32.cont [9/16] 0.0, 128
        %1003 = vxpose.xlu0.b32.cont [10/16] 0.0, 128
        %1004 = vxpose.xlu0.b32.cont [11/16] 0.0, 128
        %1005 = vxpose.xlu0.b32.cont [12/16] 0.0, 128
        %1006 = vxpose.xlu0.b32.cont [13/16] 0.0, 128
        %1007 = vxpose.xlu0.b32.cont [14/16] 0.0, 128
        %1008 = vxpose.xlu0.b32.cont [15/16] 0.0, 128
        %1009 = vxpose.xlu0.b32.end [16/16] 0.0, 128
        %v1010 = vpop.trf.xlu0
        %v1011 = vpop.trf.xlu0
        %v1012 = vpop.trf.xlu0
        %v1013 = vpop.trf.xlu0
        %v1014 = vpop.trf.xlu0
        %v1015 = vpop.trf.xlu0
        %v1016 = vpop.trf.xlu0
        %v1017 = vpop.trf.xlu0
        %v1018 = vpop.trf.xlu0
        %v1019 = vpop.trf.xlu0
        %v1020 = vpop.trf.xlu0
        %v1021 = vpop.trf.xlu0
        %v1022 = vpop.trf.xlu0
        %v1023 = vpop.trf.xlu0
        %v1024 = vpop.trf.xlu0
        %v1025 = vpop.trf.xlu0
        %1026 = vxpose.xlu0.b32.start [1/16] %v978, 128
        %1027 = vxpose.xlu0.b32.cont [2/16] 0.0, 128
        %1028 = vxpose.xlu0.b32.cont [3/16] 0.0, 128
        %1029 = vxpose.xlu0.b32.cont [4/16] 0.0, 128
        %1030 = vxpose.xlu0.b32.cont [5/16] 0.0, 128
        %1031 = vxpose.xlu0.b32.cont [6/16] 0.0, 128
        %1032 = vxpose.xlu0.b32.cont [7/16] 0.0, 128
        %1033 = vxpose.xlu0.b32.cont [8/16] 0.0, 128
        %1034 = vxpose.xlu0.b32.cont [9/16] 0.0, 128
        %1035 = vxpose.xlu0.b32.cont [10/16] 0.0, 128
        %1036 = vxpose.xlu0.b32.cont [11/16] 0.0, 128
        %1037 = vxpose.xlu0.b32.cont [12/16] 0.0, 128
        %1038 = vxpose.xlu0.b32.cont [13/16] 0.0, 128
        %1039 = vxpose.xlu0.b32.cont [14/16] 0.0, 128
        %1040 = vxpose.xlu0.b32.cont [15/16] 0.0, 128
        %1041 = vxpose.xlu0.b32.end [16/16] 0.0, 128
        %v1042 = vpop.trf.xlu0
        %v1043 = vpop.trf.xlu0
        %v1044 = vpop.trf.xlu0
        %v1045 = vpop.trf.xlu0
        %v1046 = vpop.trf.xlu0
        %v1047 = vpop.trf.xlu0
        %v1048 = vpop.trf.xlu0
        %v1049 = vpop.trf.xlu0
        %v1050 = vpop.trf.xlu0
        %v1051 = vpop.trf.xlu0
        %v1052 = vpop.trf.xlu0
        %v1053 = vpop.trf.xlu0
        %v1054 = vpop.trf.xlu0
        %v1055 = vpop.trf.xlu0
        %v1056 = vpop.trf.xlu0
        %v1057 = vpop.trf.xlu0
        %1058 = vxpose.xlu0.b32.start [1/16] %v979, 128
        %1059 = vxpose.xlu0.b32.cont [2/16] 0.0, 128
        %1060 = vxpose.xlu0.b32.cont [3/16] 0.0, 128
        %1061 = vxpose.xlu0.b32.cont [4/16] 0.0, 128
        %1062 = vxpose.xlu0.b32.cont [5/16] 0.0, 128
        %1063 = vxpose.xlu0.b32.cont [6/16] 0.0, 128
        %1064 = vxpose.xlu0.b32.cont [7/16] 0.0, 128
        %1065 = vxpose.xlu0.b32.cont [8/16] 0.0, 128
        %1066 = vxpose.xlu0.b32.cont [9/16] 0.0, 128
        %1067 = vxpose.xlu0.b32.cont [10/16] 0.0, 128
        %1068 = vxpose.xlu0.b32.cont [11/16] 0.0, 128
        %1069 = vxpose.xlu0.b32.cont [12/16] 0.0, 128
        %1070 = vxpose.xlu0.b32.cont [13/16] 0.0, 128
        %1071 = vxpose.xlu0.b32.cont [14/16] 0.0, 128
        %1072 = vxpose.xlu0.b32.cont [15/16] 0.0, 128
        %1073 = vxpose.xlu0.b32.end [16/16] 0.0, 128
        %v1074 = vpop.trf.xlu0
        %v1075 = vpop.trf.xlu0
        %v1076 = vpop.trf.xlu0
        %v1077 = vpop.trf.xlu0
        %v1078 = vpop.trf.xlu0
        %v1079 = vpop.trf.xlu0
        %v1080 = vpop.trf.xlu0
        %v1081 = vpop.trf.xlu0
        %v1082 = vpop.trf.xlu0
        %v1083 = vpop.trf.xlu0
        %v1084 = vpop.trf.xlu0
        %v1085 = vpop.trf.xlu0
        %v1086 = vpop.trf.xlu0
        %v1087 = vpop.trf.xlu0
        %v1088 = vpop.trf.xlu0
        %v1089 = vpop.trf.xlu0
        %1090 = vxpose.xlu0.b32.start [1/16] %v980, 128
        %1091 = vxpose.xlu0.b32.cont [2/16] 0.0, 128
        %1092 = vxpose.xlu0.b32.cont [3/16] 0.0, 128
        %1093 = vxpose.xlu0.b32.cont [4/16] 0.0, 128
        %1094 = vxpose.xlu0.b32.cont [5/16] 0.0, 128
        %1095 = vxpose.xlu0.b32.cont [6/16] 0.0, 128
        %1096 = vxpose.xlu0.b32.cont [7/16] 0.0, 128
        %1097 = vxpose.xlu0.b32.cont [8/16] 0.0, 128
        %1098 = vxpose.xlu0.b32.cont [9/16] 0.0, 128
        %1099 = vxpose.xlu0.b32.cont [10/16] 0.0, 128
        %1100 = vxpose.xlu0.b32.cont [11/16] 0.0, 128
        %1101 = vxpose.xlu0.b32.cont [12/16] 0.0, 128
        %1102 = vxpose.xlu0.b32.cont [13/16] 0.0, 128
        %1103 = vxpose.xlu0.b32.cont [14/16] 0.0, 128
        %1104 = vxpose.xlu0.b32.cont [15/16] 0.0, 128
        %1105 = vxpose.xlu0.b32.end [16/16] 0.0, 128
        %v1106 = vpop.trf.xlu0
        %v1107 = vpop.trf.xlu0
        %v1108 = vpop.trf.xlu0
        %v1109 = vpop.trf.xlu0
        %v1110 = vpop.trf.xlu0
        %v1111 = vpop.trf.xlu0
        %v1112 = vpop.trf.xlu0
        %v1113 = vpop.trf.xlu0
        %v1114 = vpop.trf.xlu0
        %v1115 = vpop.trf.xlu0
        %v1116 = vpop.trf.xlu0
        %v1117 = vpop.trf.xlu0
        %v1118 = vpop.trf.xlu0
        %v1119 = vpop.trf.xlu0
        %v1120 = vpop.trf.xlu0
        %v1121 = vpop.trf.xlu0
        %1122 = vxpose.xlu0.b32.start [1/16] %v981, 128
        %1123 = vxpose.xlu0.b32.cont [2/16] 0.0, 128
        %1124 = vxpose.xlu0.b32.cont [3/16] 0.0, 128
        %1125 = vxpose.xlu0.b32.cont [4/16] 0.0, 128
        %1126 = vxpose.xlu0.b32.cont [5/16] 0.0, 128
        %1127 = vxpose.xlu0.b32.cont [6/16] 0.0, 128
        %1128 = vxpose.xlu0.b32.cont [7/16] 0.0, 128
        %1129 = vxpose.xlu0.b32.cont [8/16] 0.0, 128
        %1130 = vxpose.xlu0.b32.cont [9/16] 0.0, 128
        %1131 = vxpose.xlu0.b32.cont [10/16] 0.0, 128
        %1132 = vxpose.xlu0.b32.cont [11/16] 0.0, 128
        %1133 = vxpose.xlu0.b32.cont [12/16] 0.0, 128
        %1134 = vxpose.xlu0.b32.cont [13/16] 0.0, 128
        %1135 = vxpose.xlu0.b32.cont [14/16] 0.0, 128
        %1136 = vxpose.xlu0.b32.cont [15/16] 0.0, 128
        %1137 = vxpose.xlu0.b32.end [16/16] 0.0, 128
        %v1138 = vpop.trf.xlu0
        %v1139 = vpop.trf.xlu0
        %v1140 = vpop.trf.xlu0
        %v1141 = vpop.trf.xlu0
        %v1142 = vpop.trf.xlu0
        %v1143 = vpop.trf.xlu0
        %v1144 = vpop.trf.xlu0
        %v1145 = vpop.trf.xlu0
        %v1146 = vpop.trf.xlu0
        %v1147 = vpop.trf.xlu0
        %v1148 = vpop.trf.xlu0
        %v1149 = vpop.trf.xlu0
        %v1150 = vpop.trf.xlu0
        %v1151 = vpop.trf.xlu0
        %v1152 = vpop.trf.xlu0
        %v1153 = vpop.trf.xlu0
        %1154 = vxpose.xlu0.b32.start [1/16] %v1010, 128
        %1155 = vxpose.xlu0.b32.cont [2/16] 0.0, 128
        %1156 = vxpose.xlu0.b32.cont [3/16] 0.0, 128
        %1157 = vxpose.xlu0.b32.cont [4/16] 0.0, 128
        %1158 = vxpose.xlu0.b32.cont [5/16] 0.0, 128
        %1159 = vxpose.xlu0.b32.cont [6/16] 0.0, 128
        %1160 = vxpose.xlu0.b32.cont [7/16] 0.0, 128
        %1161 = vxpose.xlu0.b32.cont [8/16] 0.0, 128
        %1162 = vxpose.xlu0.b32.cont [9/16] 0.0, 128
        %1163 = vxpose.xlu0.b32.cont [10/16] 0.0, 128
        %1164 = vxpose.xlu0.b32.cont [11/16] 0.0, 128
        %1165 = vxpose.xlu0.b32.cont [12/16] 0.0, 128
        %1166 = vxpose.xlu0.b32.cont [13/16] 0.0, 128
        %1167 = vxpose.xlu0.b32.cont [14/16] 0.0, 128
        %1168 = vxpose.xlu0.b32.cont [15/16] 0.0, 128
        %1169 = vxpose.xlu0.b32.end [16/16] 0.0, 128
        %v1170 = vpop.trf.xlu0
        %v1171 = vpop.trf.xlu0
        %v1172 = vpop.trf.xlu0
        %v1173 = vpop.trf.xlu0
        %v1174 = vpop.trf.xlu0
        %v1175 = vpop.trf.xlu0
        %v1176 = vpop.trf.xlu0
        %v1177 = vpop.trf.xlu0
        %v1178 = vpop.trf.xlu0
        %v1179 = vpop.trf.xlu0
        %v1180 = vpop.trf.xlu0
        %v1181 = vpop.trf.xlu0
        %v1182 = vpop.trf.xlu0
        %v1183 = vpop.trf.xlu0
        %v1184 = vpop.trf.xlu0
        %v1185 = vpop.trf.xlu0
        %1186 = vxpose.xlu0.b32.start [1/16] %v1011, 128
        %1187 = vxpose.xlu0.b32.cont [2/16] 0.0, 128
        %1188 = vxpose.xlu0.b32.cont [3/16] 0.0, 128
        %1189 = vxpose.xlu0.b32.cont [4/16] 0.0, 128
        %1190 = vxpose.xlu0.b32.cont [5/16] 0.0, 128
        %1191 = vxpose.xlu0.b32.cont [6/16] 0.0, 128
        %1192 = vxpose.xlu0.b32.cont [7/16] 0.0, 128
        %1193 = vxpose.xlu0.b32.cont [8/16] 0.0, 128
        %1194 = vxpose.xlu0.b32.cont [9/16] 0.0, 128
        %1195 = vxpose.xlu0.b32.cont [10/16] 0.0, 128
        %1196 = vxpose.xlu0.b32.cont [11/16] 0.0, 128
        %1197 = vxpose.xlu0.b32.cont [12/16] 0.0, 128
        %1198 = vxpose.xlu0.b32.cont [13/16] 0.0, 128
        %1199 = vxpose.xlu0.b32.cont [14/16] 0.0, 128
        %1200 = vxpose.xlu0.b32.cont [15/16] 0.0, 128
        %1201 = vxpose.xlu0.b32.end [16/16] 0.0, 128
        %v1202 = vpop.trf.xlu0
        %v1203 = vpop.trf.xlu0
        %v1204 = vpop.trf.xlu0
        %v1205 = vpop.trf.xlu0
        %v1206 = vpop.trf.xlu0
        %v1207 = vpop.trf.xlu0
        %v1208 = vpop.trf.xlu0
        %v1209 = vpop.trf.xlu0
        %v1210 = vpop.trf.xlu0
        %v1211 = vpop.trf.xlu0
        %v1212 = vpop.trf.xlu0
        %v1213 = vpop.trf.xlu0
        %v1214 = vpop.trf.xlu0
        %v1215 = vpop.trf.xlu0
        %v1216 = vpop.trf.xlu0
        %v1217 = vpop.trf.xlu0
        %1218 = vxpose.xlu0.b32.start [1/16] %v1012, 128
        %1219 = vxpose.xlu0.b32.cont [2/16] 0.0, 128
        %1220 = vxpose.xlu0.b32.cont [3/16] 0.0, 128
        %1221 = vxpose.xlu0.b32.cont [4/16] 0.0, 128
        %1222 = vxpose.xlu0.b32.cont [5/16] 0.0, 128
        %1223 = vxpose.xlu0.b32.cont [6/16] 0.0, 128
        %1224 = vxpose.xlu0.b32.cont [7/16] 0.0, 128
        %1225 = vxpose.xlu0.b32.cont [8/16] 0.0, 128
        %1226 = vxpose.xlu0.b32.cont [9/16] 0.0, 128
        %1227 = vxpose.xlu0.b32.cont [10/16] 0.0, 128
        %1228 = vxpose.xlu0.b32.cont [11/16] 0.0, 128
        %1229 = vxpose.xlu0.b32.cont [12/16] 0.0, 128
        %1230 = vxpose.xlu0.b32.cont [13/16] 0.0, 128
        %1231 = vxpose.xlu0.b32.cont [14/16] 0.0, 128
        %1232 = vxpose.xlu0.b32.cont [15/16] 0.0, 128
        %1233 = vxpose.xlu0.b32.end [16/16] 0.0, 128
        %v1234 = vpop.trf.xlu0
        %v1235 = vpop.trf.xlu0
        %v1236 = vpop.trf.xlu0
        %v1237 = vpop.trf.xlu0
        %v1238 = vpop.trf.xlu0
        %v1239 = vpop.trf.xlu0
        %v1240 = vpop.trf.xlu0
        %v1241 = vpop.trf.xlu0
        %v1242 = vpop.trf.xlu0
        %v1243 = vpop.trf.xlu0
        %v1244 = vpop.trf.xlu0
        %v1245 = vpop.trf.xlu0
        %v1246 = vpop.trf.xlu0
        %v1247 = vpop.trf.xlu0
        %v1248 = vpop.trf.xlu0
        %v1249 = vpop.trf.xlu0
        %1250 = vxpose.xlu0.b32.start [1/16] %v1013, 128
        %1251 = vxpose.xlu0.b32.cont [2/16] 0.0, 128
        %1252 = vxpose.xlu0.b32.cont [3/16] 0.0, 128
        %1253 = vxpose.xlu0.b32.cont [4/16] 0.0, 128
        %1254 = vxpose.xlu0.b32.cont [5/16] 0.0, 128
        %1255 = vxpose.xlu0.b32.cont [6/16] 0.0, 128
        %1256 = vxpose.xlu0.b32.cont [7/16] 0.0, 128
        %1257 = vxpose.xlu0.b32.cont [8/16] 0.0, 128
        %1258 = vxpose.xlu0.b32.cont [9/16] 0.0, 128
        %1259 = vxpose.xlu0.b32.cont [10/16] 0.0, 128
        %1260 = vxpose.xlu0.b32.cont [11/16] 0.0, 128
        %1261 = vxpose.xlu0.b32.cont [12/16] 0.0, 128
        %1262 = vxpose.xlu0.b32.cont [13/16] 0.0, 128
        %1263 = vxpose.xlu0.b32.cont [14/16] 0.0, 128
        %1264 = vxpose.xlu0.b32.cont [15/16] 0.0, 128
        %1265 = vxpose.xlu0.b32.end [16/16] 0.0, 128
        %v1266 = vpop.trf.xlu0
        %v1267 = vpop.trf.xlu0
        %v1268 = vpop.trf.xlu0
        %v1269 = vpop.trf.xlu0
        %v1270 = vpop.trf.xlu0
        %v1271 = vpop.trf.xlu0
        %v1272 = vpop.trf.xlu0
        %v1273 = vpop.trf.xlu0
        %v1274 = vpop.trf.xlu0
        %v1275 = vpop.trf.xlu0
        %v1276 = vpop.trf.xlu0
        %v1277 = vpop.trf.xlu0
        %v1278 = vpop.trf.xlu0
        %v1279 = vpop.trf.xlu0
        %v1280 = vpop.trf.xlu0
        %v1281 = vpop.trf.xlu0
        %v1282 = vpack.c.bf16 %v644, %v644
        %v1283 = vpack.c.bf16 %v676, %v676
        %v1284 = vpack.c.bf16 %v708, %v708
        %v1285 = vpack.c.bf16 %v740, %v740
        %v1286 = vpack.c.bf16 %v772, %v772
        %v1287 = vpack.c.bf16 %v804, %v804
        %v1288 = vpack.c.bf16 %v836, %v836
        %v1289 = vpack.c.bf16 %v868, %v868
        %v1290 = vpack.c.bf16 %v908, %v908
        %v1291 = vpack.c.bf16 %v909, %v909
        %v1292 = vpack.c.bf16 %v910, %v910
        %v1293 = vpack.c.bf16 %v911, %v911
        %v1294 = vpack.c.bf16 %v940, %v940
        %v1295 = vpack.c.bf16 %v941, %v941
        %v1296 = vpack.c.bf16 %v942, %v942
        %v1297 = vpack.c.bf16 %v943, %v943
        %vm1298 = vcmask 64512
        %v1300 = vsel %vm1298, %v1282, 0
        %vm1302 = vcmask 1043456
        %v1304 = vsel %vm1302, %v1290, 0
        %1306 = vmatprep.subr.bf16.mxu0 0
        %1307 = vmatpush1.bf16.msra.mxu0 %v1304
        %1308 = vmatprep.subr.bf16.mxu0 0
        %1309 = vmatpush1.bf16.msra.mxu0 0
        %1310 = vmatprep.subr.bf16.mxu0 0
        %1311 = vmatpush1.bf16.msra.mxu0 0
        %1312 = vmatprep.subr.bf16.mxu0 0
        %1313 = vmatpush1.bf16.msra.mxu0 0
        %1314 = vmatprep.subr.bf16.mxu0 0
        %1315 = vmatpush1.bf16.msra.mxu0 0
        %1316 = vmatprep.subr.bf16.mxu0 0
        %1317 = vmatpush1.bf16.msra.mxu0 0
        %1318 = vmatprep.subr.bf16.mxu0 0
        %1319 = vmatpush1.bf16.msra.mxu0 0
        %1320 = vmatprep.subr.bf16.mxu0 0
        %1321 = vmatpush1.bf16.msra.mxu0 0
        %1322 = vmatprep.subr.bf16.mxu0 0
        %1323 = vmatpush1.bf16.msra.mxu0 0
        %1324 = vmatprep.subr.bf16.mxu0 0
        %1325 = vmatpush1.bf16.msra.mxu0 0
        %1326 = vmatprep.subr.bf16.mxu0 0
        %1327 = vmatpush1.bf16.msra.mxu0 0
        %1328 = vmatprep.subr.bf16.mxu0 0
        %1329 = vmatpush1.bf16.msra.mxu0 0
        %1330 = vmatprep.subr.bf16.mxu0 0
        %1331 = vmatpush1.bf16.msra.mxu0 0
        %1332 = vmatprep.subr.bf16.mxu0 0
        %1333 = vmatpush1.bf16.msra.mxu0 0
        %1334 = vmatprep.subr.bf16.mxu0 0
        %1335 = vmatpush1.bf16.msra.mxu0 0
        %1336 = vmatprep.subr.bf16.mxu0 0
        %1337 = vmatpush1.bf16.msra.mxu0 0
        %1338 = vmatprep.mubr.bf16.mxu0 0
        %1339 = vmatmul.mubr.bf16.gmra.mrb[0].mxu0 %v1300
        %v1340 = vpop.f32.mrb[0].mxu0
        %v1341 = vadd.f32 0.0, %v1340
        %v1342 = vpop.f32.mrb[0].mxu0
        %v1343 = vpop.f32.mrb[0].mxu0
        %v1344 = vpop.f32.mrb[0].mxu0
        %1345 = vdwg.mxu0
        %v1347 = vsel %vm1298, %v1283, 0
        %v1350 = vsel %vm1302, %v1291, 0
        %1352 = vmatprep.subr.bf16.mxu0 0
        %1353 = vmatpush1.bf16.msra.mxu0 %v1350
        %1354 = vmatprep.subr.bf16.mxu0 0
        %1355 = vmatpush1.bf16.msra.mxu0 0
        %1356 = vmatprep.subr.bf16.mxu0 0
        %1357 = vmatpush1.bf16.msra.mxu0 0
        %1358 = vmatprep.subr.bf16.mxu0 0
        %1359 = vmatpush1.bf16.msra.mxu0 0
        %1360 = vmatprep.subr.bf16.mxu0 0
        %1361 = vmatpush1.bf16.msra.mxu0 0
        %1362 = vmatprep.subr.bf16.mxu0 0
        %1363 = vmatpush1.bf16.msra.mxu0 0
        %1364 = vmatprep.subr.bf16.mxu0 0
        %1365 = vmatpush1.bf16.msra.mxu0 0
        %1366 = vmatprep.subr.bf16.mxu0 0
        %1367 = vmatpush1.bf16.msra.mxu0 0
        %1368 = vmatprep.subr.bf16.mxu0 0
        %1369 = vmatpush1.bf16.msra.mxu0 0
        %1370 = vmatprep.subr.bf16.mxu0 0
        %1371 = vmatpush1.bf16.msra.mxu0 0
        %1372 = vmatprep.subr.bf16.mxu0 0
        %1373 = vmatpush1.bf16.msra.mxu0 0
        %1374 = vmatprep.subr.bf16.mxu0 0
        %1375 = vmatpush1.bf16.msra.mxu0 0
        %1376 = vmatprep.subr.bf16.mxu0 0
        %1377 = vmatpush1.bf16.msra.mxu0 0
        %1378 = vmatprep.subr.bf16.mxu0 0
        %1379 = vmatpush1.bf16.msra.mxu0 0
        %1380 = vmatprep.subr.bf16.mxu0 0
        %1381 = vmatpush1.bf16.msra.mxu0 0
        %1382 = vmatprep.subr.bf16.mxu0 0
        %1383 = vmatpush1.bf16.msra.mxu0 0
        %1384 = vmatprep.mubr.bf16.mxu0 0
        %1385 = vmatmul.mubr.bf16.gmra.mrb[0].mxu0 %v1347
        %v1386 = vpop.f32.mrb[0].mxu0
        %v1387 = vadd.f32 0.0, %v1386
        %v1388 = vpop.f32.mrb[0].mxu0
        %v1389 = vpop.f32.mrb[0].mxu0
        %v1390 = vpop.f32.mrb[0].mxu0
        %1391 = vdwg.mxu0
        %v1393 = vsel %vm1298, %v1284, 0
        %v1396 = vsel %vm1302, %v1292, 0
        %1398 = vmatprep.subr.bf16.mxu0 0
        %1399 = vmatpush1.bf16.msra.mxu0 %v1396
        %1400 = vmatprep.subr.bf16.mxu0 0
        %1401 = vmatpush1.bf16.msra.mxu0 0
        %1402 = vmatprep.subr.bf16.mxu0 0
        %1403 = vmatpush1.bf16.msra.mxu0 0
        %1404 = vmatprep.subr.bf16.mxu0 0
        %1405 = vmatpush1.bf16.msra.mxu0 0
        %1406 = vmatprep.subr.bf16.mxu0 0
        %1407 = vmatpush1.bf16.msra.mxu0 0
        %1408 = vmatprep.subr.bf16.mxu0 0
        %1409 = vmatpush1.bf16.msra.mxu0 0
        %1410 = vmatprep.subr.bf16.mxu0 0
        %1411 = vmatpush1.bf16.msra.mxu0 0
        %1412 = vmatprep.subr.bf16.mxu0 0
        %1413 = vmatpush1.bf16.msra.mxu0 0
        %1414 = vmatprep.subr.bf16.mxu0 0
        %1415 = vmatpush1.bf16.msra.mxu0 0
        %1416 = vmatprep.subr.bf16.mxu0 0
        %1417 = vmatpush1.bf16.msra.mxu0 0
        %1418 = vmatprep.subr.bf16.mxu0 0
        %1419 = vmatpush1.bf16.msra.mxu0 0
        %1420 = vmatprep.subr.bf16.mxu0 0
        %1421 = vmatpush1.bf16.msra.mxu0 0
        %1422 = vmatprep.subr.bf16.mxu0 0
        %1423 = vmatpush1.bf16.msra.mxu0 0
        %1424 = vmatprep.subr.bf16.mxu0 0
        %1425 = vmatpush1.bf16.msra.mxu0 0
        %1426 = vmatprep.subr.bf16.mxu0 0
        %1427 = vmatpush1.bf16.msra.mxu0 0
        %1428 = vmatprep.subr.bf16.mxu0 0
        %1429 = vmatpush1.bf16.msra.mxu0 0
        %1430 = vmatprep.mubr.bf16.mxu0 0
        %1431 = vmatmul.mubr.bf16.gmra.mrb[0].mxu0 %v1393
        %v1432 = vpop.f32.mrb[0].mxu0
        %v1433 = vadd.f32 0.0, %v1432
        %v1434 = vpop.f32.mrb[0].mxu0
        %v1435 = vpop.f32.mrb[0].mxu0
        %v1436 = vpop.f32.mrb[0].mxu0
        %1437 = vdwg.mxu0
        %v1439 = vsel %vm1298, %v1285, 0
        %v1442 = vsel %vm1302, %v1293, 0
        %1444 = vmatprep.subr.bf16.mxu0 0
        %1445 = vmatpush1.bf16.msra.mxu0 %v1442
        %1446 = vmatprep.subr.bf16.mxu0 0
        %1447 = vmatpush1.bf16.msra.mxu0 0
        %1448 = vmatprep.subr.bf16.mxu0 0
        %1449 = vmatpush1.bf16.msra.mxu0 0
        %1450 = vmatprep.subr.bf16.mxu0 0
        %1451 = vmatpush1.bf16.msra.mxu0 0
        %1452 = vmatprep.subr.bf16.mxu0 0
        %1453 = vmatpush1.bf16.msra.mxu0 0
        %1454 = vmatprep.subr.bf16.mxu0 0
        %1455 = vmatpush1.bf16.msra.mxu0 0
        %1456 = vmatprep.subr.bf16.mxu0 0
        %1457 = vmatpush1.bf16.msra.mxu0 0
        %1458 = vmatprep.subr.bf16.mxu0 0
        %1459 = vmatpush1.bf16.msra.mxu0 0
        %1460 = vmatprep.subr.bf16.mxu0 0
        %1461 = vmatpush1.bf16.msra.mxu0 0
        %1462 = vmatprep.subr.bf16.mxu0 0
        %1463 = vmatpush1.bf16.msra.mxu0 0
        %1464 = vmatprep.subr.bf16.mxu0 0
        %1465 = vmatpush1.bf16.msra.mxu0 0
        %1466 = vmatprep.subr.bf16.mxu0 0
        %1467 = vmatpush1.bf16.msra.mxu0 0
        %1468 = vmatprep.subr.bf16.mxu0 0
        %1469 = vmatpush1.bf16.msra.mxu0 0
        %1470 = vmatprep.subr.bf16.mxu0 0
        %1471 = vmatpush1.bf16.msra.mxu0 0
        %1472 = vmatprep.subr.bf16.mxu0 0
        %1473 = vmatpush1.bf16.msra.mxu0 0
        %1474 = vmatprep.subr.bf16.mxu0 0
        %1475 = vmatpush1.bf16.msra.mxu0 0
        %1476 = vmatprep.mubr.bf16.mxu0 0
        %1477 = vmatmul.mubr.bf16.gmra.mrb[0].mxu0 %v1439
        %v1478 = vpop.f32.mrb[0].mxu0
        %v1479 = vadd.f32 0.0, %v1478
        %v1480 = vpop.f32.mrb[0].mxu0
        %v1481 = vpop.f32.mrb[0].mxu0
        %v1482 = vpop.f32.mrb[0].mxu0
        %1483 = vdwg.mxu0
        %v1485 = vsel %vm1298, %v1286, 0
        %v1488 = vsel %vm1302, %v1294, 0
        %1490 = vmatprep.subr.bf16.mxu0 0
        %1491 = vmatpush1.bf16.msra.mxu0 %v1488
        %1492 = vmatprep.subr.bf16.mxu0 0
        %1493 = vmatpush1.bf16.msra.mxu0 0
        %1494 = vmatprep.subr.bf16.mxu0 0
        %1495 = vmatpush1.bf16.msra.mxu0 0
        %1496 = vmatprep.subr.bf16.mxu0 0
        %1497 = vmatpush1.bf16.msra.mxu0 0
        %1498 = vmatprep.subr.bf16.mxu0 0
        %1499 = vmatpush1.bf16.msra.mxu0 0
        %1500 = vmatprep.subr.bf16.mxu0 0
        %1501 = vmatpush1.bf16.msra.mxu0 0
        %1502 = vmatprep.subr.bf16.mxu0 0
        %1503 = vmatpush1.bf16.msra.mxu0 0
        %1504 = vmatprep.subr.bf16.mxu0 0
        %1505 = vmatpush1.bf16.msra.mxu0 0
        %1506 = vmatprep.subr.bf16.mxu0 0
        %1507 = vmatpush1.bf16.msra.mxu0 0
        %1508 = vmatprep.subr.bf16.mxu0 0
        %1509 = vmatpush1.bf16.msra.mxu0 0
        %1510 = vmatprep.subr.bf16.mxu0 0
        %1511 = vmatpush1.bf16.msra.mxu0 0
        %1512 = vmatprep.subr.bf16.mxu0 0
        %1513 = vmatpush1.bf16.msra.mxu0 0
        %1514 = vmatprep.subr.bf16.mxu0 0
        %1515 = vmatpush1.bf16.msra.mxu0 0
        %1516 = vmatprep.subr.bf16.mxu0 0
        %1517 = vmatpush1.bf16.msra.mxu0 0
        %1518 = vmatprep.subr.bf16.mxu0 0
        %1519 = vmatpush1.bf16.msra.mxu0 0
        %1520 = vmatprep.subr.bf16.mxu0 0
        %1521 = vmatpush1.bf16.msra.mxu0 0
        %1522 = vmatprep.mubr.bf16.mxu0 0
        %1523 = vmatmul.mubr.bf16.gmra.mrb[0].mxu0 %v1485
        %v1524 = vpop.f32.mrb[0].mxu0
        %v1525 = vadd.f32 0.0, %v1524
        %v1526 = vpop.f32.mrb[0].mxu0
        %v1527 = vpop.f32.mrb[0].mxu0
        %v1528 = vpop.f32.mrb[0].mxu0
        %1529 = vdwg.mxu0
        %v1531 = vsel %vm1298, %v1287, 0
        %v1534 = vsel %vm1302, %v1295, 0
        %1536 = vmatprep.subr.bf16.mxu0 0
        %1537 = vmatpush1.bf16.msra.mxu0 %v1534
        %1538 = vmatprep.subr.bf16.mxu0 0
        %1539 = vmatpush1.bf16.msra.mxu0 0
        %1540 = vmatprep.subr.bf16.mxu0 0
        %1541 = vmatpush1.bf16.msra.mxu0 0
        %1542 = vmatprep.subr.bf16.mxu0 0
        %1543 = vmatpush1.bf16.msra.mxu0 0
        %1544 = vmatprep.subr.bf16.mxu0 0
        %1545 = vmatpush1.bf16.msra.mxu0 0
        %1546 = vmatprep.subr.bf16.mxu0 0
        %1547 = vmatpush1.bf16.msra.mxu0 0
        %1548 = vmatprep.subr.bf16.mxu0 0
        %1549 = vmatpush1.bf16.msra.mxu0 0
        %1550 = vmatprep.subr.bf16.mxu0 0
        %1551 = vmatpush1.bf16.msra.mxu0 0
        %1552 = vmatprep.subr.bf16.mxu0 0
        %1553 = vmatpush1.bf16.msra.mxu0 0
        %1554 = vmatprep.subr.bf16.mxu0 0
        %1555 = vmatpush1.bf16.msra.mxu0 0
        %1556 = vmatprep.subr.bf16.mxu0 0
        %1557 = vmatpush1.bf16.msra.mxu0 0
        %1558 = vmatprep.subr.bf16.mxu0 0
        %1559 = vmatpush1.bf16.msra.mxu0 0
        %1560 = vmatprep.subr.bf16.mxu0 0
        %1561 = vmatpush1.bf16.msra.mxu0 0
        %1562 = vmatprep.subr.bf16.mxu0 0
        %1563 = vmatpush1.bf16.msra.mxu0 0
        %1564 = vmatprep.subr.bf16.mxu0 0
        %1565 = vmatpush1.bf16.msra.mxu0 0
        %1566 = vmatprep.subr.bf16.mxu0 0
        %1567 = vmatpush1.bf16.msra.mxu0 0
        %1568 = vmatprep.mubr.bf16.mxu0 0
        %1569 = vmatmul.mubr.bf16.gmra.mrb[0].mxu0 %v1531
        %v1570 = vpop.f32.mrb[0].mxu0
        %v1571 = vadd.f32 0.0, %v1570
        %v1572 = vpop.f32.mrb[0].mxu0
        %v1573 = vpop.f32.mrb[0].mxu0
        %v1574 = vpop.f32.mrb[0].mxu0
        %1575 = vdwg.mxu0
        %v1577 = vsel %vm1298, %v1288, 0
        %v1580 = vsel %vm1302, %v1296, 0
        %1582 = vmatprep.subr.bf16.mxu0 0
        %1583 = vmatpush1.bf16.msra.mxu0 %v1580
        %1584 = vmatprep.subr.bf16.mxu0 0
        %1585 = vmatpush1.bf16.msra.mxu0 0
        %1586 = vmatprep.subr.bf16.mxu0 0
        %1587 = vmatpush1.bf16.msra.mxu0 0
        %1588 = vmatprep.subr.bf16.mxu0 0
        %1589 = vmatpush1.bf16.msra.mxu0 0
        %1590 = vmatprep.subr.bf16.mxu0 0
        %1591 = vmatpush1.bf16.msra.mxu0 0
        %1592 = vmatprep.subr.bf16.mxu0 0
        %1593 = vmatpush1.bf16.msra.mxu0 0
        %1594 = vmatprep.subr.bf16.mxu0 0
        %1595 = vmatpush1.bf16.msra.mxu0 0
        %1596 = vmatprep.subr.bf16.mxu0 0
        %1597 = vmatpush1.bf16.msra.mxu0 0
        %1598 = vmatprep.subr.bf16.mxu0 0
        %1599 = vmatpush1.bf16.msra.mxu0 0
        %1600 = vmatprep.subr.bf16.mxu0 0
        %1601 = vmatpush1.bf16.msra.mxu0 0
        %1602 = vmatprep.subr.bf16.mxu0 0
        %1603 = vmatpush1.bf16.msra.mxu0 0
        %1604 = vmatprep.subr.bf16.mxu0 0
        %1605 = vmatpush1.bf16.msra.mxu0 0
        %1606 = vmatprep.subr.bf16.mxu0 0
        %1607 = vmatpush1.bf16.msra.mxu0 0
        %1608 = vmatprep.subr.bf16.mxu0 0
        %1609 = vmatpush1.bf16.msra.mxu0 0
        %1610 = vmatprep.subr.bf16.mxu0 0
        %1611 = vmatpush1.bf16.msra.mxu0 0
        %1612 = vmatprep.subr.bf16.mxu0 0
        %1613 = vmatpush1.bf16.msra.mxu0 0
        %1614 = vmatprep.mubr.bf16.mxu0 0
        %1615 = vmatmul.mubr.bf16.gmra.mrb[0].mxu0 %v1577
        %v1616 = vpop.f32.mrb[0].mxu0
        %v1617 = vadd.f32 0.0, %v1616
        %v1618 = vpop.f32.mrb[0].mxu0
        %v1619 = vpop.f32.mrb[0].mxu0
        %v1620 = vpop.f32.mrb[0].mxu0
        %1621 = vdwg.mxu0
        %v1623 = vsel %vm1298, %v1289, 0
        %v1626 = vsel %vm1302, %v1297, 0
        %1628 = vmatprep.subr.bf16.mxu0 0
        %1629 = vmatpush1.bf16.msra.mxu0 %v1626
        %1630 = vmatprep.subr.bf16.mxu0 0
        %1631 = vmatpush1.bf16.msra.mxu0 0
        %1632 = vmatprep.subr.bf16.mxu0 0
        %1633 = vmatpush1.bf16.msra.mxu0 0
        %1634 = vmatprep.subr.bf16.mxu0 0
        %1635 = vmatpush1.bf16.msra.mxu0 0
        %1636 = vmatprep.subr.bf16.mxu0 0
        %1637 = vmatpush1.bf16.msra.mxu0 0
        %1638 = vmatprep.subr.bf16.mxu0 0
        %1639 = vmatpush1.bf16.msra.mxu0 0
        %1640 = vmatprep.subr.bf16.mxu0 0
        %1641 = vmatpush1.bf16.msra.mxu0 0
        %1642 = vmatprep.subr.bf16.mxu0 0
        %1643 = vmatpush1.bf16.msra.mxu0 0
        %1644 = vmatprep.subr.bf16.mxu0 0
        %1645 = vmatpush1.bf16.msra.mxu0 0
        %1646 = vmatprep.subr.bf16.mxu0 0
        %1647 = vmatpush1.bf16.msra.mxu0 0
        %1648 = vmatprep.subr.bf16.mxu0 0
        %1649 = vmatpush1.bf16.msra.mxu0 0
        %1650 = vmatprep.subr.bf16.mxu0 0
        %1651 = vmatpush1.bf16.msra.mxu0 0
        %1652 = vmatprep.subr.bf16.mxu0 0
        %1653 = vmatpush1.bf16.msra.mxu0 0
        %1654 = vmatprep.subr.bf16.mxu0 0
        %1655 = vmatpush1.bf16.msra.mxu0 0
        %1656 = vmatprep.subr.bf16.mxu0 0
        %1657 = vmatpush1.bf16.msra.mxu0 0
        %1658 = vmatprep.subr.bf16.mxu0 0
        %1659 = vmatpush1.bf16.msra.mxu0 0
        %1660 = vmatprep.mubr.bf16.mxu0 0
        %1661 = vmatmul.mubr.bf16.gmra.mrb[0].mxu0 %v1623
        %v1662 = vpop.f32.mrb[0].mxu0
        %v1663 = vadd.f32 0.0, %v1662
        %v1664 = vpop.f32.mrb[0].mxu0
        %v1665 = vpop.f32.mrb[0].mxu0
        %v1666 = vpop.f32.mrb[0].mxu0
        %1667 = vdwg.mxu0
        %v1676 = vrot.slane %v1387, 7
        %vm1677 = vcmask 1041409
        %v1678 = vsel %vm1677, %v1676, %v1341
        %v1679 = vrot.slane %v1433, 6
        %vm1680 = vcmask 1042434
        %v1681 = vsel %vm1680, %v1679, %v1678
        %v1682 = vrot.slane %v1479, 5
        %vm1683 = vcmask 1043459
        %v1684 = vsel %vm1683, %v1682, %v1681
        %v1685 = vrot.slane %v1571, 7
        %v1686 = vsel %vm1677, %v1685, %v1525
        %v1687 = vrot.slane %v1617, 6
        %v1688 = vsel %vm1680, %v1687, %v1686
        %v1689 = vrot.slane %v1663, 5
        %v1690 = vsel %vm1683, %v1689, %v1688
        %vm1693 = vcmask 60416
        %1694 = vst.msk [vmem:[%s445] sm:$0xf] %vm1693, %v1684
        %1695 = vst.msk [vmem:[%s445 + $0x4] sm:$0xf] %vm1693, %v1690
        %v1696 = vsel %vm1298, %v1341, -inf
        %1697 = vmax.xlane.f32.xlu0 %v1696
        %v1698 = vpop.xlane.xlu0 %1697
        %v1699 = vsel %vm1298, %v1387, -inf
        %1700 = vmax.xlane.f32.xlu0 %v1699
        %v1701 = vpop.xlane.xlu0 %1700
        %v1702 = vsel %vm1298, %v1433, -inf
        %1703 = vmax.xlane.f32.xlu0 %v1702
        %v1704 = vpop.xlane.xlu0 %1703
        %v1705 = vsel %vm1298, %v1479, -inf
        %1706 = vmax.xlane.f32.xlu0 %v1705
        %v1707 = vpop.xlane.xlu0 %1706
        %v1708 = vsel %vm1298, %v1525, -inf
        %1709 = vmax.xlane.f32.xlu0 %v1708
        %v1710 = vpop.xlane.xlu0 %1709
        %v1711 = vsel %vm1298, %v1571, -inf
        %1712 = vmax.xlane.f32.xlu0 %v1711
        %v1713 = vpop.xlane.xlu0 %1712
        %v1714 = vsel %vm1298, %v1617, -inf
        %1715 = vmax.xlane.f32.xlu0 %v1714
        %v1716 = vpop.xlane.xlu0 %1715
        %v1717 = vsel %vm1298, %v1663, -inf
        %1718 = vmax.xlane.f32.xlu0 %v1717
        %v1719 = vpop.xlane.xlu0 %1718
        %v1720 = vsub.f32 %v1341, %v1698
        %v1721 = vsub.f32 %v1387, %v1701
        %v1722 = vsub.f32 %v1433, %v1704
        %v1723 = vsub.f32 %v1479, %v1707
        %v1724 = vsub.f32 %v1525, %v1710
        %v1725 = vsub.f32 %v1571, %v1713
        %v1726 = vsub.f32 %v1617, %v1716
        %v1727 = vsub.f32 %v1663, %v1719
        %v1728 = vmul.f32 %v1720, 1.442695
        %v1729 = vpow.pop %v1728
        %v1730 = vmul.f32 %v1721, 1.442695
        %v1731 = vpow.pop %v1730
        %v1732 = vmul.f32 %v1722, 1.442695
        %v1733 = vpow.pop %v1732
        %v1734 = vmul.f32 %v1723, 1.442695
        %v1735 = vpow.pop %v1734
        %v1736 = vmul.f32 %v1724, 1.442695
        %v1737 = vpow.pop %v1736
        %v1738 = vmul.f32 %v1725, 1.442695
        %v1739 = vpow.pop %v1738
        %v1740 = vmul.f32 %v1726, 1.442695
        %v1741 = vpow.pop %v1740
        %v1742 = vmul.f32 %v1727, 1.442695
        %v1743 = vpow.pop %v1742
        %v1744 = vsel %vm1298, %v1729, 0.0
        %1745 = vadd.xlane.f32.xlu0 %v1744
        %v1746 = vpop.xlane.xlu0 %1745
        %v1747 = vsel %vm1298, %v1731, 0.0
        %1748 = vadd.xlane.f32.xlu0 %v1747
        %v1749 = vpop.xlane.xlu0 %1748
        %v1750 = vsel %vm1298, %v1733, 0.0
        %1751 = vadd.xlane.f32.xlu0 %v1750
        %v1752 = vpop.xlane.xlu0 %1751
        %v1753 = vsel %vm1298, %v1735, 0.0
        %1754 = vadd.xlane.f32.xlu0 %v1753
        %v1755 = vpop.xlane.xlu0 %1754
        %v1756 = vsel %vm1298, %v1737, 0.0
        %1757 = vadd.xlane.f32.xlu0 %v1756
        %v1758 = vpop.xlane.xlu0 %1757
        %v1759 = vsel %vm1298, %v1739, 0.0
        %1760 = vadd.xlane.f32.xlu0 %v1759
        %v1761 = vpop.xlane.xlu0 %1760
        %v1762 = vsel %vm1298, %v1741, 0.0
        %1763 = vadd.xlane.f32.xlu0 %v1762
        %v1764 = vpop.xlane.xlu0 %1763
        %v1765 = vsel %vm1298, %v1743, 0.0
        %1766 = vadd.xlane.f32.xlu0 %v1765
        %v1767 = vpop.xlane.xlu0 %1766
        %v1768 = vrcp.pop %v1746
        %v1769 = vrcp.pop %v1749
        %v1770 = vrcp.pop %v1752
        %v1771 = vrcp.pop %v1755
        %v1772 = vrcp.pop %v1758
        %v1773 = vrcp.pop %v1761
        %v1774 = vrcp.pop %v1764
        %v1775 = vrcp.pop %v1767
        %v1776 = vmul.f32 %v1729, %v1768
        %v1777 = vmul.f32 %v1731, %v1769
        %v1778 = vmul.f32 %v1733, %v1770
        %v1779 = vmul.f32 %v1735, %v1771
        %v1780 = vmul.f32 %v1737, %v1772
        %v1781 = vmul.f32 %v1739, %v1773
        %v1782 = vmul.f32 %v1741, %v1774
        %v1783 = vmul.f32 %v1743, %v1775
        %v1784 = vpack.c.bf16 %v1776, %v1776
        %v1785 = vpack.c.bf16 %v1777, %v1777
        %v1786 = vpack.c.bf16 %v1778, %v1778
        %v1787 = vpack.c.bf16 %v1779, %v1779
        %v1788 = vpack.c.bf16 %v1780, %v1780
        %v1789 = vpack.c.bf16 %v1781, %v1781
        %v1790 = vpack.c.bf16 %v1782, %v1782
        %v1791 = vpack.c.bf16 %v1783, %v1783
        %v1792 = vpack.c.bf16 %v1042, %v1042
        %v1793 = vpack.c.bf16 %v1074, %v1074
        %v1794 = vpack.c.bf16 %v1106, %v1106
        %v1795 = vpack.c.bf16 %v1138, %v1138
        %v1796 = vpack.c.bf16 %v1170, %v1170
        %v1797 = vpack.c.bf16 %v1202, %v1202
        %v1798 = vpack.c.bf16 %v1234, %v1234
        %v1799 = vpack.c.bf16 %v1266, %v1266
        %v1801 = vsel %vm1298, %v1784, 0
        %v1804 = vsel %vm1302, %v1792, 0
        %1806 = vmatprep.subr.bf16.mxu0 0
        %1807 = vmatpush1.bf16.msra.mxu0 %v1804
        %1808 = vmatprep.subr.bf16.mxu0 0
        %1809 = vmatpush1.bf16.msra.mxu0 0
        %1810 = vmatprep.subr.bf16.mxu0 0
        %1811 = vmatpush1.bf16.msra.mxu0 0
        %1812 = vmatprep.subr.bf16.mxu0 0
        %1813 = vmatpush1.bf16.msra.mxu0 0
        %1814 = vmatprep.subr.bf16.mxu0 0
        %1815 = vmatpush1.bf16.msra.mxu0 0
        %1816 = vmatprep.subr.bf16.mxu0 0
        %1817 = vmatpush1.bf16.msra.mxu0 0
        %1818 = vmatprep.subr.bf16.mxu0 0
        %1819 = vmatpush1.bf16.msra.mxu0 0
        %1820 = vmatprep.subr.bf16.mxu0 0
        %1821 = vmatpush1.bf16.msra.mxu0 0
        %1822 = vmatprep.subr.bf16.mxu0 0
        %1823 = vmatpush1.bf16.msra.mxu0 0
        %1824 = vmatprep.subr.bf16.mxu0 0
        %1825 = vmatpush1.bf16.msra.mxu0 0
        %1826 = vmatprep.subr.bf16.mxu0 0
        %1827 = vmatpush1.bf16.msra.mxu0 0
        %1828 = vmatprep.subr.bf16.mxu0 0
        %1829 = vmatpush1.bf16.msra.mxu0 0
        %1830 = vmatprep.subr.bf16.mxu0 0
        %1831 = vmatpush1.bf16.msra.mxu0 0
        %1832 = vmatprep.subr.bf16.mxu0 0
        %1833 = vmatpush1.bf16.msra.mxu0 0
        %1834 = vmatprep.subr.bf16.mxu0 0
        %1835 = vmatpush1.bf16.msra.mxu0 0
        %1836 = vmatprep.subr.bf16.mxu0 0
        %1837 = vmatpush1.bf16.msra.mxu0 0
        %1838 = vmatprep.mubr.bf16.mxu0 0
        %1839 = vmatmul.mubr.bf16.gmra.mrb[0].mxu0 %v1801
        %v1840 = vpop.f32.mrb[0].mxu0
        %v1841 = vadd.f32 0.0, %v1840
        %v1842 = vpop.f32.mrb[0].mxu0
        %v1843 = vpop.f32.mrb[0].mxu0
        %v1844 = vpop.f32.mrb[0].mxu0
        %1845 = vdwg.mxu0
        %v1847 = vsel %vm1298, %v1785, 0
        %v1850 = vsel %vm1302, %v1793, 0
        %1852 = vmatprep.subr.bf16.mxu0 0
        %1853 = vmatpush1.bf16.msra.mxu0 %v1850
        %1854 = vmatprep.subr.bf16.mxu0 0
        %1855 = vmatpush1.bf16.msra.mxu0 0
        %1856 = vmatprep.subr.bf16.mxu0 0
        %1857 = vmatpush1.bf16.msra.mxu0 0
        %1858 = vmatprep.subr.bf16.mxu0 0
        %1859 = vmatpush1.bf16.msra.mxu0 0
        %1860 = vmatprep.subr.bf16.mxu0 0
        %1861 = vmatpush1.bf16.msra.mxu0 0
        %1862 = vmatprep.subr.bf16.mxu0 0
        %1863 = vmatpush1.bf16.msra.mxu0 0
        %1864 = vmatprep.subr.bf16.mxu0 0
        %1865 = vmatpush1.bf16.msra.mxu0 0
        %1866 = vmatprep.subr.bf16.mxu0 0
        %1867 = vmatpush1.bf16.msra.mxu0 0
        %1868 = vmatprep.subr.bf16.mxu0 0
        %1869 = vmatpush1.bf16.msra.mxu0 0
        %1870 = vmatprep.subr.bf16.mxu0 0
        %1871 = vmatpush1.bf16.msra.mxu0 0
        %1872 = vmatprep.subr.bf16.mxu0 0
        %1873 = vmatpush1.bf16.msra.mxu0 0
        %1874 = vmatprep.subr.bf16.mxu0 0
        %1875 = vmatpush1.bf16.msra.mxu0 0
        %1876 = vmatprep.subr.bf16.mxu0 0
        %1877 = vmatpush1.bf16.msra.mxu0 0
        %1878 = vmatprep.subr.bf16.mxu0 0
        %1879 = vmatpush1.bf16.msra.mxu0 0
        %1880 = vmatprep.subr.bf16.mxu0 0
        %1881 = vmatpush1.bf16.msra.mxu0 0
        %1882 = vmatprep.subr.bf16.mxu0 0
        %1883 = vmatpush1.bf16.msra.mxu0 0
        %1884 = vmatprep.mubr.bf16.mxu0 0
        %1885 = vmatmul.mubr.bf16.gmra.mrb[0].mxu0 %v1847
        %v1886 = vpop.f32.mrb[0].mxu0
        %v1887 = vadd.f32 0.0, %v1886
        %v1888 = vpop.f32.mrb[0].mxu0
        %v1889 = vpop.f32.mrb[0].mxu0
        %v1890 = vpop.f32.mrb[0].mxu0
        %1891 = vdwg.mxu0
        %v1893 = vsel %vm1298, %v1786, 0
        %v1896 = vsel %vm1302, %v1794, 0
        %1898 = vmatprep.subr.bf16.mxu0 0
        %1899 = vmatpush1.bf16.msra.mxu0 %v1896
        %1900 = vmatprep.subr.bf16.mxu0 0
        %1901 = vmatpush1.bf16.msra.mxu0 0
        %1902 = vmatprep.subr.bf16.mxu0 0
        %1903 = vmatpush1.bf16.msra.mxu0 0
        %1904 = vmatprep.subr.bf16.mxu0 0
        %1905 = vmatpush1.bf16.msra.mxu0 0
        %1906 = vmatprep.subr.bf16.mxu0 0
        %1907 = vmatpush1.bf16.msra.mxu0 0
        %1908 = vmatprep.subr.bf16.mxu0 0
        %1909 = vmatpush1.bf16.msra.mxu0 0
        %1910 = vmatprep.subr.bf16.mxu0 0
        %1911 = vmatpush1.bf16.msra.mxu0 0
        %1912 = vmatprep.subr.bf16.mxu0 0
        %1913 = vmatpush1.bf16.msra.mxu0 0
        %1914 = vmatprep.subr.bf16.mxu0 0
        %1915 = vmatpush1.bf16.msra.mxu0 0
        %1916 = vmatprep.subr.bf16.mxu0 0
        %1917 = vmatpush1.bf16.msra.mxu0 0
        %1918 = vmatprep.subr.bf16.mxu0 0
        %1919 = vmatpush1.bf16.msra.mxu0 0
        %1920 = vmatprep.subr.bf16.mxu0 0
        %1921 = vmatpush1.bf16.msra.mxu0 0
        %1922 = vmatprep.subr.bf16.mxu0 0
        %1923 = vmatpush1.bf16.msra.mxu0 0
        %1924 = vmatprep.subr.bf16.mxu0 0
        %1925 = vmatpush1.bf16.msra.mxu0 0
        %1926 = vmatprep.subr.bf16.mxu0 0
        %1927 = vmatpush1.bf16.msra.mxu0 0
        %1928 = vmatprep.subr.bf16.mxu0 0
        %1929 = vmatpush1.bf16.msra.mxu0 0
        %1930 = vmatprep.mubr.bf16.mxu0 0
        %1931 = vmatmul.mubr.bf16.gmra.mrb[0].mxu0 %v1893
        %v1932 = vpop.f32.mrb[0].mxu0
        %v1933 = vadd.f32 0.0, %v1932
        %v1934 = vpop.f32.mrb[0].mxu0
        %v1935 = vpop.f32.mrb[0].mxu0
        %v1936 = vpop.f32.mrb[0].mxu0
        %1937 = vdwg.mxu0
        %v1939 = vsel %vm1298, %v1787, 0
        %v1942 = vsel %vm1302, %v1795, 0
        %1944 = vmatprep.subr.bf16.mxu0 0
        %1945 = vmatpush1.bf16.msra.mxu0 %v1942
        %1946 = vmatprep.subr.bf16.mxu0 0
        %1947 = vmatpush1.bf16.msra.mxu0 0
        %1948 = vmatprep.subr.bf16.mxu0 0
        %1949 = vmatpush1.bf16.msra.mxu0 0
        %1950 = vmatprep.subr.bf16.mxu0 0
        %1951 = vmatpush1.bf16.msra.mxu0 0
        %1952 = vmatprep.subr.bf16.mxu0 0
        %1953 = vmatpush1.bf16.msra.mxu0 0
        %1954 = vmatprep.subr.bf16.mxu0 0
        %1955 = vmatpush1.bf16.msra.mxu0 0
        %1956 = vmatprep.subr.bf16.mxu0 0
        %1957 = vmatpush1.bf16.msra.mxu0 0
        %1958 = vmatprep.subr.bf16.mxu0 0
        %1959 = vmatpush1.bf16.msra.mxu0 0
        %1960 = vmatprep.subr.bf16.mxu0 0
        %1961 = vmatpush1.bf16.msra.mxu0 0
        %1962 = vmatprep.subr.bf16.mxu0 0
        %1963 = vmatpush1.bf16.msra.mxu0 0
        %1964 = vmatprep.subr.bf16.mxu0 0
        %1965 = vmatpush1.bf16.msra.mxu0 0
        %1966 = vmatprep.subr.bf16.mxu0 0
        %1967 = vmatpush1.bf16.msra.mxu0 0
        %1968 = vmatprep.subr.bf16.mxu0 0
        %1969 = vmatpush1.bf16.msra.mxu0 0
        %1970 = vmatprep.subr.bf16.mxu0 0
        %1971 = vmatpush1.bf16.msra.mxu0 0
        %1972 = vmatprep.subr.bf16.mxu0 0
        %1973 = vmatpush1.bf16.msra.mxu0 0
        %1974 = vmatprep.subr.bf16.mxu0 0
        %1975 = vmatpush1.bf16.msra.mxu0 0
        %1976 = vmatprep.mubr.bf16.mxu0 0
        %1977 = vmatmul.mubr.bf16.gmra.mrb[0].mxu0 %v1939
        %v1978 = vpop.f32.mrb[0].mxu0
        %v1979 = vadd.f32 0.0, %v1978
        %v1980 = vpop.f32.mrb[0].mxu0
        %v1981 = vpop.f32.mrb[0].mxu0
        %v1982 = vpop.f32.mrb[0].mxu0
        %1983 = vdwg.mxu0
        %v1985 = vsel %vm1298, %v1788, 0
        %v1988 = vsel %vm1302, %v1796, 0
        %1990 = vmatprep.subr.bf16.mxu0 0
        %1991 = vmatpush1.bf16.msra.mxu0 %v1988
        %1992 = vmatprep.subr.bf16.mxu0 0
        %1993 = vmatpush1.bf16.msra.mxu0 0
        %1994 = vmatprep.subr.bf16.mxu0 0
        %1995 = vmatpush1.bf16.msra.mxu0 0
        %1996 = vmatprep.subr.bf16.mxu0 0
        %1997 = vmatpush1.bf16.msra.mxu0 0
        %1998 = vmatprep.subr.bf16.mxu0 0
        %1999 = vmatpush1.bf16.msra.mxu0 0
        %2000 = vmatprep.subr.bf16.mxu0 0
        %2001 = vmatpush1.bf16.msra.mxu0 0
        %2002 = vmatprep.subr.bf16.mxu0 0
        %2003 = vmatpush1.bf16.msra.mxu0 0
        %2004 = vmatprep.subr.bf16.mxu0 0
        %2005 = vmatpush1.bf16.msra.mxu0 0
        %2006 = vmatprep.subr.bf16.mxu0 0
        %2007 = vmatpush1.bf16.msra.mxu0 0
        %2008 = vmatprep.subr.bf16.mxu0 0
        %2009 = vmatpush1.bf16.msra.mxu0 0
        %2010 = vmatprep.subr.bf16.mxu0 0
        %2011 = vmatpush1.bf16.msra.mxu0 0
        %2012 = vmatprep.subr.bf16.mxu0 0
        %2013 = vmatpush1.bf16.msra.mxu0 0
        %2014 = vmatprep.subr.bf16.mxu0 0
        %2015 = vmatpush1.bf16.msra.mxu0 0
        %2016 = vmatprep.subr.bf16.mxu0 0
        %2017 = vmatpush1.bf16.msra.mxu0 0
        %2018 = vmatprep.subr.bf16.mxu0 0
        %2019 = vmatpush1.bf16.msra.mxu0 0
        %2020 = vmatprep.subr.bf16.mxu0 0
        %2021 = vmatpush1.bf16.msra.mxu0 0
        %2022 = vmatprep.mubr.bf16.mxu0 0
        %2023 = vmatmul.mubr.bf16.gmra.mrb[0].mxu0 %v1985
        %v2024 = vpop.f32.mrb[0].mxu0
        %v2025 = vadd.f32 0.0, %v2024
        %v2026 = vpop.f32.mrb[0].mxu0
        %v2027 = vpop.f32.mrb[0].mxu0
        %v2028 = vpop.f32.mrb[0].mxu0
        %2029 = vdwg.mxu0
        %v2031 = vsel %vm1298, %v1789, 0
        %v2034 = vsel %vm1302, %v1797, 0
        %2036 = vmatprep.subr.bf16.mxu0 0
        %2037 = vmatpush1.bf16.msra.mxu0 %v2034
        %2038 = vmatprep.subr.bf16.mxu0 0
        %2039 = vmatpush1.bf16.msra.mxu0 0
        %2040 = vmatprep.subr.bf16.mxu0 0
        %2041 = vmatpush1.bf16.msra.mxu0 0
        %2042 = vmatprep.subr.bf16.mxu0 0
        %2043 = vmatpush1.bf16.msra.mxu0 0
        %2044 = vmatprep.subr.bf16.mxu0 0
        %2045 = vmatpush1.bf16.msra.mxu0 0
        %2046 = vmatprep.subr.bf16.mxu0 0
        %2047 = vmatpush1.bf16.msra.mxu0 0
        %2048 = vmatprep.subr.bf16.mxu0 0
        %2049 = vmatpush1.bf16.msra.mxu0 0
        %2050 = vmatprep.subr.bf16.mxu0 0
        %2051 = vmatpush1.bf16.msra.mxu0 0
        %2052 = vmatprep.subr.bf16.mxu0 0
        %2053 = vmatpush1.bf16.msra.mxu0 0
        %2054 = vmatprep.subr.bf16.mxu0 0
        %2055 = vmatpush1.bf16.msra.mxu0 0
        %2056 = vmatprep.subr.bf16.mxu0 0
        %2057 = vmatpush1.bf16.msra.mxu0 0
        %2058 = vmatprep.subr.bf16.mxu0 0
        %2059 = vmatpush1.bf16.msra.mxu0 0
        %2060 = vmatprep.subr.bf16.mxu0 0
        %2061 = vmatpush1.bf16.msra.mxu0 0
        %2062 = vmatprep.subr.bf16.mxu0 0
        %2063 = vmatpush1.bf16.msra.mxu0 0
        %2064 = vmatprep.subr.bf16.mxu0 0
        %2065 = vmatpush1.bf16.msra.mxu0 0
        %2066 = vmatprep.subr.bf16.mxu0 0
        %2067 = vmatpush1.bf16.msra.mxu0 0
        %2068 = vmatprep.mubr.bf16.mxu0 0
        %2069 = vmatmul.mubr.bf16.gmra.mrb[0].mxu0 %v2031
        %v2070 = vpop.f32.mrb[0].mxu0
        %v2071 = vadd.f32 0.0, %v2070
        %v2072 = vpop.f32.mrb[0].mxu0
        %v2073 = vpop.f32.mrb[0].mxu0
        %v2074 = vpop.f32.mrb[0].mxu0
        %2075 = vdwg.mxu0
        %v2077 = vsel %vm1298, %v1790, 0
        %v2080 = vsel %vm1302, %v1798, 0
        %2082 = vmatprep.subr.bf16.mxu0 0
        %2083 = vmatpush1.bf16.msra.mxu0 %v2080
        %2084 = vmatprep.subr.bf16.mxu0 0
        %2085 = vmatpush1.bf16.msra.mxu0 0
        %2086 = vmatprep.subr.bf16.mxu0 0
        %2087 = vmatpush1.bf16.msra.mxu0 0
        %2088 = vmatprep.subr.bf16.mxu0 0
        %2089 = vmatpush1.bf16.msra.mxu0 0
        %2090 = vmatprep.subr.bf16.mxu0 0
        %2091 = vmatpush1.bf16.msra.mxu0 0
        %2092 = vmatprep.subr.bf16.mxu0 0
        %2093 = vmatpush1.bf16.msra.mxu0 0
        %2094 = vmatprep.subr.bf16.mxu0 0
        %2095 = vmatpush1.bf16.msra.mxu0 0
        %2096 = vmatprep.subr.bf16.mxu0 0
        %2097 = vmatpush1.bf16.msra.mxu0 0
        %2098 = vmatprep.subr.bf16.mxu0 0
        %2099 = vmatpush1.bf16.msra.mxu0 0
        %2100 = vmatprep.subr.bf16.mxu0 0
        %2101 = vmatpush1.bf16.msra.mxu0 0
        %2102 = vmatprep.subr.bf16.mxu0 0
        %2103 = vmatpush1.bf16.msra.mxu0 0
        %2104 = vmatprep.subr.bf16.mxu0 0
        %2105 = vmatpush1.bf16.msra.mxu0 0
        %2106 = vmatprep.subr.bf16.mxu0 0
        %2107 = vmatpush1.bf16.msra.mxu0 0
        %2108 = vmatprep.subr.bf16.mxu0 0
        %2109 = vmatpush1.bf16.msra.mxu0 0
        %2110 = vmatprep.subr.bf16.mxu0 0
        %2111 = vmatpush1.bf16.msra.mxu0 0
        %2112 = vmatprep.subr.bf16.mxu0 0
        %2113 = vmatpush1.bf16.msra.mxu0 0
        %2114 = vmatprep.mubr.bf16.mxu0 0
        %2115 = vmatmul.mubr.bf16.gmra.mrb[0].mxu0 %v2077
        %v2116 = vpop.f32.mrb[0].mxu0
        %v2117 = vadd.f32 0.0, %v2116
        %v2118 = vpop.f32.mrb[0].mxu0
        %v2119 = vpop.f32.mrb[0].mxu0
        %v2120 = vpop.f32.mrb[0].mxu0
        %2121 = vdwg.mxu0
        %v2123 = vsel %vm1298, %v1791, 0
        %v2126 = vsel %vm1302, %v1799, 0
        %2128 = vmatprep.subr.bf16.mxu0 0
        %2129 = vmatpush1.bf16.msra.mxu0 %v2126
        %2130 = vmatprep.subr.bf16.mxu0 0
        %2131 = vmatpush1.bf16.msra.mxu0 0
        %2132 = vmatprep.subr.bf16.mxu0 0
        %2133 = vmatpush1.bf16.msra.mxu0 0
        %2134 = vmatprep.subr.bf16.mxu0 0
        %2135 = vmatpush1.bf16.msra.mxu0 0
        %2136 = vmatprep.subr.bf16.mxu0 0
        %2137 = vmatpush1.bf16.msra.mxu0 0
        %2138 = vmatprep.subr.bf16.mxu0 0
        %2139 = vmatpush1.bf16.msra.mxu0 0
        %2140 = vmatprep.subr.bf16.mxu0 0
        %2141 = vmatpush1.bf16.msra.mxu0 0
        %2142 = vmatprep.subr.bf16.mxu0 0
        %2143 = vmatpush1.bf16.msra.mxu0 0
        %2144 = vmatprep.subr.bf16.mxu0 0
        %2145 = vmatpush1.bf16.msra.mxu0 0
        %2146 = vmatprep.subr.bf16.mxu0 0
        %2147 = vmatpush1.bf16.msra.mxu0 0
        %2148 = vmatprep.subr.bf16.mxu0 0
        %2149 = vmatpush1.bf16.msra.mxu0 0
        %2150 = vmatprep.subr.bf16.mxu0 0
        %2151 = vmatpush1.bf16.msra.mxu0 0
        %2152 = vmatprep.subr.bf16.mxu0 0
        %2153 = vmatpush1.bf16.msra.mxu0 0
        %2154 = vmatprep.subr.bf16.mxu0 0
        %2155 = vmatpush1.bf16.msra.mxu0 0
        %2156 = vmatprep.subr.bf16.mxu0 0
        %2157 = vmatpush1.bf16.msra.mxu0 0
        %2158 = vmatprep.subr.bf16.mxu0 0
        %2159 = vmatpush1.bf16.msra.mxu0 0
        %2160 = vmatprep.mubr.bf16.mxu0 0
        %2161 = vmatmul.mubr.bf16.gmra.mrb[0].mxu0 %v2123
        %v2162 = vpop.f32.mrb[0].mxu0
        %v2163 = vadd.f32 0.0, %v2162
        %v2164 = vpop.f32.mrb[0].mxu0
        %v2165 = vpop.f32.mrb[0].mxu0
        %v2166 = vpop.f32.mrb[0].mxu0
        %2167 = vdwg.mxu0
        %2168 = vxpose.xlu0.b32.start [1/16] %v1841, 128
        %2169 = vxpose.xlu0.b32.cont [2/16] 0.0, 128
        %2170 = vxpose.xlu0.b32.cont [3/16] 0.0, 128
        %2171 = vxpose.xlu0.b32.cont [4/16] 0.0, 128
        %2172 = vxpose.xlu0.b32.cont [5/16] 0.0, 128
        %2173 = vxpose.xlu0.b32.cont [6/16] 0.0, 128
        %2174 = vxpose.xlu0.b32.cont [7/16] 0.0, 128
        %2175 = vxpose.xlu0.b32.cont [8/16] 0.0, 128
        %2176 = vxpose.xlu0.b32.cont [9/16] 0.0, 128
        %2177 = vxpose.xlu0.b32.cont [10/16] 0.0, 128
        %2178 = vxpose.xlu0.b32.cont [11/16] 0.0, 128
        %2179 = vxpose.xlu0.b32.cont [12/16] 0.0, 128
        %2180 = vxpose.xlu0.b32.cont [13/16] 0.0, 128
        %2181 = vxpose.xlu0.b32.cont [14/16] 0.0, 128
        %2182 = vxpose.xlu0.b32.cont [15/16] 0.0, 128
        %2183 = vxpose.xlu0.b32.end [16/16] 0.0, 128
        %v2184 = vpop.trf.xlu0
        %v2185 = vpop.trf.xlu0
        %v2186 = vpop.trf.xlu0
        %v2187 = vpop.trf.xlu0
        %v2188 = vpop.trf.xlu0
        %v2189 = vpop.trf.xlu0
        %v2190 = vpop.trf.xlu0
        %v2191 = vpop.trf.xlu0
        %v2192 = vpop.trf.xlu0
        %v2193 = vpop.trf.xlu0
        %v2194 = vpop.trf.xlu0
        %v2195 = vpop.trf.xlu0
        %v2196 = vpop.trf.xlu0
        %v2197 = vpop.trf.xlu0
        %v2198 = vpop.trf.xlu0
        %v2199 = vpop.trf.xlu0
        %2200 = vxpose.xlu0.b32.start [1/16] %v1887, 128
        %2201 = vxpose.xlu0.b32.cont [2/16] 0.0, 128
        %2202 = vxpose.xlu0.b32.cont [3/16] 0.0, 128
        %2203 = vxpose.xlu0.b32.cont [4/16] 0.0, 128
        %2204 = vxpose.xlu0.b32.cont [5/16] 0.0, 128
        %2205 = vxpose.xlu0.b32.cont [6/16] 0.0, 128
        %2206 = vxpose.xlu0.b32.cont [7/16] 0.0, 128
        %2207 = vxpose.xlu0.b32.cont [8/16] 0.0, 128
        %2208 = vxpose.xlu0.b32.cont [9/16] 0.0, 128
        %2209 = vxpose.xlu0.b32.cont [10/16] 0.0, 128
        %2210 = vxpose.xlu0.b32.cont [11/16] 0.0, 128
        %2211 = vxpose.xlu0.b32.cont [12/16] 0.0, 128
        %2212 = vxpose.xlu0.b32.cont [13/16] 0.0, 128
        %2213 = vxpose.xlu0.b32.cont [14/16] 0.0, 128
        %2214 = vxpose.xlu0.b32.cont [15/16] 0.0, 128
        %2215 = vxpose.xlu0.b32.end [16/16] 0.0, 128
        %v2216 = vpop.trf.xlu0
        %v2217 = vpop.trf.xlu0
        %v2218 = vpop.trf.xlu0
        %v2219 = vpop.trf.xlu0
        %v2220 = vpop.trf.xlu0
        %v2221 = vpop.trf.xlu0
        %v2222 = vpop.trf.xlu0
        %v2223 = vpop.trf.xlu0
        %v2224 = vpop.trf.xlu0
        %v2225 = vpop.trf.xlu0
        %v2226 = vpop.trf.xlu0
        %v2227 = vpop.trf.xlu0
        %v2228 = vpop.trf.xlu0
        %v2229 = vpop.trf.xlu0
        %v2230 = vpop.trf.xlu0
        %v2231 = vpop.trf.xlu0
        %2232 = vxpose.xlu0.b32.start [1/16] %v1933, 128
        %2233 = vxpose.xlu0.b32.cont [2/16] 0.0, 128
        %2234 = vxpose.xlu0.b32.cont [3/16] 0.0, 128
        %2235 = vxpose.xlu0.b32.cont [4/16] 0.0, 128
        %2236 = vxpose.xlu0.b32.cont [5/16] 0.0, 128
        %2237 = vxpose.xlu0.b32.cont [6/16] 0.0, 128
        %2238 = vxpose.xlu0.b32.cont [7/16] 0.0, 128
        %2239 = vxpose.xlu0.b32.cont [8/16] 0.0, 128
        %2240 = vxpose.xlu0.b32.cont [9/16] 0.0, 128
        %2241 = vxpose.xlu0.b32.cont [10/16] 0.0, 128
        %2242 = vxpose.xlu0.b32.cont [11/16] 0.0, 128
        %2243 = vxpose.xlu0.b32.cont [12/16] 0.0, 128
        %2244 = vxpose.xlu0.b32.cont [13/16] 0.0, 128
        %2245 = vxpose.xlu0.b32.cont [14/16] 0.0, 128
        %2246 = vxpose.xlu0.b32.cont [15/16] 0.0, 128
        %2247 = vxpose.xlu0.b32.end [16/16] 0.0, 128
        %v2248 = vpop.trf.xlu0
        %v2249 = vpop.trf.xlu0
        %v2250 = vpop.trf.xlu0
        %v2251 = vpop.trf.xlu0
        %v2252 = vpop.trf.xlu0
        %v2253 = vpop.trf.xlu0
        %v2254 = vpop.trf.xlu0
        %v2255 = vpop.trf.xlu0
        %v2256 = vpop.trf.xlu0
        %v2257 = vpop.trf.xlu0
        %v2258 = vpop.trf.xlu0
        %v2259 = vpop.trf.xlu0
        %v2260 = vpop.trf.xlu0
        %v2261 = vpop.trf.xlu0
        %v2262 = vpop.trf.xlu0
        %v2263 = vpop.trf.xlu0
        %2264 = vxpose.xlu0.b32.start [1/16] %v1979, 128
        %2265 = vxpose.xlu0.b32.cont [2/16] 0.0, 128
        %2266 = vxpose.xlu0.b32.cont [3/16] 0.0, 128
        %2267 = vxpose.xlu0.b32.cont [4/16] 0.0, 128
        %2268 = vxpose.xlu0.b32.cont [5/16] 0.0, 128
        %2269 = vxpose.xlu0.b32.cont [6/16] 0.0, 128
        %2270 = vxpose.xlu0.b32.cont [7/16] 0.0, 128
        %2271 = vxpose.xlu0.b32.cont [8/16] 0.0, 128
        %2272 = vxpose.xlu0.b32.cont [9/16] 0.0, 128
        %2273 = vxpose.xlu0.b32.cont [10/16] 0.0, 128
        %2274 = vxpose.xlu0.b32.cont [11/16] 0.0, 128
        %2275 = vxpose.xlu0.b32.cont [12/16] 0.0, 128
        %2276 = vxpose.xlu0.b32.cont [13/16] 0.0, 128
        %2277 = vxpose.xlu0.b32.cont [14/16] 0.0, 128
        %2278 = vxpose.xlu0.b32.cont [15/16] 0.0, 128
        %2279 = vxpose.xlu0.b32.end [16/16] 0.0, 128
        %v2280 = vpop.trf.xlu0
        %v2281 = vpop.trf.xlu0
        %v2282 = vpop.trf.xlu0
        %v2283 = vpop.trf.xlu0
        %v2284 = vpop.trf.xlu0
        %v2285 = vpop.trf.xlu0
        %v2286 = vpop.trf.xlu0
        %v2287 = vpop.trf.xlu0
        %v2288 = vpop.trf.xlu0
        %v2289 = vpop.trf.xlu0
        %v2290 = vpop.trf.xlu0
        %v2291 = vpop.trf.xlu0
        %v2292 = vpop.trf.xlu0
        %v2293 = vpop.trf.xlu0
        %v2294 = vpop.trf.xlu0
        %v2295 = vpop.trf.xlu0
        %2296 = vxpose.xlu0.b32.start [1/16] %v2025, 128
        %2297 = vxpose.xlu0.b32.cont [2/16] 0.0, 128
        %2298 = vxpose.xlu0.b32.cont [3/16] 0.0, 128
        %2299 = vxpose.xlu0.b32.cont [4/16] 0.0, 128
        %2300 = vxpose.xlu0.b32.cont [5/16] 0.0, 128
        %2301 = vxpose.xlu0.b32.cont [6/16] 0.0, 128
        %2302 = vxpose.xlu0.b32.cont [7/16] 0.0, 128
        %2303 = vxpose.xlu0.b32.cont [8/16] 0.0, 128
        %2304 = vxpose.xlu0.b32.cont [9/16] 0.0, 128
        %2305 = vxpose.xlu0.b32.cont [10/16] 0.0, 128
        %2306 = vxpose.xlu0.b32.cont [11/16] 0.0, 128
        %2307 = vxpose.xlu0.b32.cont [12/16] 0.0, 128
        %2308 = vxpose.xlu0.b32.cont [13/16] 0.0, 128
        %2309 = vxpose.xlu0.b32.cont [14/16] 0.0, 128
        %2310 = vxpose.xlu0.b32.cont [15/16] 0.0, 128
        %2311 = vxpose.xlu0.b32.end [16/16] 0.0, 128
        %v2312 = vpop.trf.xlu0
        %v2313 = vpop.trf.xlu0
        %v2314 = vpop.trf.xlu0
        %v2315 = vpop.trf.xlu0
        %v2316 = vpop.trf.xlu0
        %v2317 = vpop.trf.xlu0
        %v2318 = vpop.trf.xlu0
        %v2319 = vpop.trf.xlu0
        %v2320 = vpop.trf.xlu0
        %v2321 = vpop.trf.xlu0
        %v2322 = vpop.trf.xlu0
        %v2323 = vpop.trf.xlu0
        %v2324 = vpop.trf.xlu0
        %v2325 = vpop.trf.xlu0
        %v2326 = vpop.trf.xlu0
        %v2327 = vpop.trf.xlu0
        %2328 = vxpose.xlu0.b32.start [1/16] %v2071, 128
        %2329 = vxpose.xlu0.b32.cont [2/16] 0.0, 128
        %2330 = vxpose.xlu0.b32.cont [3/16] 0.0, 128
        %2331 = vxpose.xlu0.b32.cont [4/16] 0.0, 128
        %2332 = vxpose.xlu0.b32.cont [5/16] 0.0, 128
        %2333 = vxpose.xlu0.b32.cont [6/16] 0.0, 128
        %2334 = vxpose.xlu0.b32.cont [7/16] 0.0, 128
        %2335 = vxpose.xlu0.b32.cont [8/16] 0.0, 128
        %2336 = vxpose.xlu0.b32.cont [9/16] 0.0, 128
        %2337 = vxpose.xlu0.b32.cont [10/16] 0.0, 128
        %2338 = vxpose.xlu0.b32.cont [11/16] 0.0, 128
        %2339 = vxpose.xlu0.b32.cont [12/16] 0.0, 128
        %2340 = vxpose.xlu0.b32.cont [13/16] 0.0, 128
        %2341 = vxpose.xlu0.b32.cont [14/16] 0.0, 128
        %2342 = vxpose.xlu0.b32.cont [15/16] 0.0, 128
        %2343 = vxpose.xlu0.b32.end [16/16] 0.0, 128
        %v2344 = vpop.trf.xlu0
        %v2345 = vpop.trf.xlu0
        %v2346 = vpop.trf.xlu0
        %v2347 = vpop.trf.xlu0
        %v2348 = vpop.trf.xlu0
        %v2349 = vpop.trf.xlu0
        %v2350 = vpop.trf.xlu0
        %v2351 = vpop.trf.xlu0
        %v2352 = vpop.trf.xlu0
        %v2353 = vpop.trf.xlu0
        %v2354 = vpop.trf.xlu0
        %v2355 = vpop.trf.xlu0
        %v2356 = vpop.trf.xlu0
        %v2357 = vpop.trf.xlu0
        %v2358 = vpop.trf.xlu0
        %v2359 = vpop.trf.xlu0
        %2360 = vxpose.xlu0.b32.start [1/16] %v2117, 128
        %2361 = vxpose.xlu0.b32.cont [2/16] 0.0, 128
        %2362 = vxpose.xlu0.b32.cont [3/16] 0.0, 128
        %2363 = vxpose.xlu0.b32.cont [4/16] 0.0, 128
        %2364 = vxpose.xlu0.b32.cont [5/16] 0.0, 128
        %2365 = vxpose.xlu0.b32.cont [6/16] 0.0, 128
        %2366 = vxpose.xlu0.b32.cont [7/16] 0.0, 128
        %2367 = vxpose.xlu0.b32.cont [8/16] 0.0, 128
        %2368 = vxpose.xlu0.b32.cont [9/16] 0.0, 128
        %2369 = vxpose.xlu0.b32.cont [10/16] 0.0, 128
        %2370 = vxpose.xlu0.b32.cont [11/16] 0.0, 128
        %2371 = vxpose.xlu0.b32.cont [12/16] 0.0, 128
        %2372 = vxpose.xlu0.b32.cont [13/16] 0.0, 128
        %2373 = vxpose.xlu0.b32.cont [14/16] 0.0, 128
        %2374 = vxpose.xlu0.b32.cont [15/16] 0.0, 128
        %2375 = vxpose.xlu0.b32.end [16/16] 0.0, 128
        %v2376 = vpop.trf.xlu0
        %v2377 = vpop.trf.xlu0
        %v2378 = vpop.trf.xlu0
        %v2379 = vpop.trf.xlu0
        %v2380 = vpop.trf.xlu0
        %v2381 = vpop.trf.xlu0
        %v2382 = vpop.trf.xlu0
        %v2383 = vpop.trf.xlu0
        %v2384 = vpop.trf.xlu0
        %v2385 = vpop.trf.xlu0
        %v2386 = vpop.trf.xlu0
        %v2387 = vpop.trf.xlu0
        %v2388 = vpop.trf.xlu0
        %v2389 = vpop.trf.xlu0
        %v2390 = vpop.trf.xlu0
        %v2391 = vpop.trf.xlu0
        %2392 = vxpose.xlu0.b32.start [1/16] %v2163, 128
        %2393 = vxpose.xlu0.b32.cont [2/16] 0.0, 128
        %2394 = vxpose.xlu0.b32.cont [3/16] 0.0, 128
        %2395 = vxpose.xlu0.b32.cont [4/16] 0.0, 128
        %2396 = vxpose.xlu0.b32.cont [5/16] 0.0, 128
        %2397 = vxpose.xlu0.b32.cont [6/16] 0.0, 128
        %2398 = vxpose.xlu0.b32.cont [7/16] 0.0, 128
        %2399 = vxpose.xlu0.b32.cont [8/16] 0.0, 128
        %2400 = vxpose.xlu0.b32.cont [9/16] 0.0, 128
        %2401 = vxpose.xlu0.b32.cont [10/16] 0.0, 128
        %2402 = vxpose.xlu0.b32.cont [11/16] 0.0, 128
        %2403 = vxpose.xlu0.b32.cont [12/16] 0.0, 128
        %2404 = vxpose.xlu0.b32.cont [13/16] 0.0, 128
        %2405 = vxpose.xlu0.b32.cont [14/16] 0.0, 128
        %2406 = vxpose.xlu0.b32.cont [15/16] 0.0, 128
        %2407 = vxpose.xlu0.b32.end [16/16] 0.0, 128
        %v2408 = vpop.trf.xlu0
        %v2409 = vpop.trf.xlu0
        %v2410 = vpop.trf.xlu0
        %v2411 = vpop.trf.xlu0
        %v2412 = vpop.trf.xlu0
        %v2413 = vpop.trf.xlu0
        %v2414 = vpop.trf.xlu0
        %v2415 = vpop.trf.xlu0
        %v2416 = vpop.trf.xlu0
        %v2417 = vpop.trf.xlu0
        %v2418 = vpop.trf.xlu0
        %v2419 = vpop.trf.xlu0
        %v2420 = vpop.trf.xlu0
        %v2421 = vpop.trf.xlu0
        %v2422 = vpop.trf.xlu0
        %v2423 = vpop.trf.xlu0
        %2424 = vxpose.xlu0.b32.start [1/16] %v2184, 128
        %2425 = vxpose.xlu0.b32.cont [2/16] %v2216, 128
        %2426 = vxpose.xlu0.b32.cont [3/16] %v2248, 128
        %2427 = vxpose.xlu0.b32.cont [4/16] %v2280, 128
        %2428 = vxpose.xlu0.b32.cont [5/16] 0.0, 128
        %2429 = vxpose.xlu0.b32.cont [6/16] 0.0, 128
        %2430 = vxpose.xlu0.b32.cont [7/16] 0.0, 128
        %2431 = vxpose.xlu0.b32.cont [8/16] 0.0, 128
        %2432 = vxpose.xlu0.b32.cont [9/16] 0.0, 128
        %2433 = vxpose.xlu0.b32.cont [10/16] 0.0, 128
        %2434 = vxpose.xlu0.b32.cont [11/16] 0.0, 128
        %2435 = vxpose.xlu0.b32.cont [12/16] 0.0, 128
        %2436 = vxpose.xlu0.b32.cont [13/16] 0.0, 128
        %2437 = vxpose.xlu0.b32.cont [14/16] 0.0, 128
        %2438 = vxpose.xlu0.b32.cont [15/16] 0.0, 128
        %2439 = vxpose.xlu0.b32.end [16/16] 0.0, 128
        %v2440 = vpop.trf.xlu0
        %v2441 = vpop.trf.xlu0
        %v2442 = vpop.trf.xlu0
        %v2443 = vpop.trf.xlu0
        %v2444 = vpop.trf.xlu0
        %v2445 = vpop.trf.xlu0
        %v2446 = vpop.trf.xlu0
        %v2447 = vpop.trf.xlu0
        %v2448 = vpop.trf.xlu0
        %v2449 = vpop.trf.xlu0
        %v2450 = vpop.trf.xlu0
        %v2451 = vpop.trf.xlu0
        %v2452 = vpop.trf.xlu0
        %v2453 = vpop.trf.xlu0
        %v2454 = vpop.trf.xlu0
        %v2455 = vpop.trf.xlu0
        %2456 = vxpose.xlu0.b32.start [1/16] %v2312, 128
        %2457 = vxpose.xlu0.b32.cont [2/16] %v2344, 128
        %2458 = vxpose.xlu0.b32.cont [3/16] %v2376, 128
        %2459 = vxpose.xlu0.b32.cont [4/16] %v2408, 128
        %2460 = vxpose.xlu0.b32.cont [5/16] 0.0, 128
        %2461 = vxpose.xlu0.b32.cont [6/16] 0.0, 128
        %2462 = vxpose.xlu0.b32.cont [7/16] 0.0, 128
        %2463 = vxpose.xlu0.b32.cont [8/16] 0.0, 128
        %2464 = vxpose.xlu0.b32.cont [9/16] 0.0, 128
        %2465 = vxpose.xlu0.b32.cont [10/16] 0.0, 128
        %2466 = vxpose.xlu0.b32.cont [11/16] 0.0, 128
        %2467 = vxpose.xlu0.b32.cont [12/16] 0.0, 128
        %2468 = vxpose.xlu0.b32.cont [13/16] 0.0, 128
        %2469 = vxpose.xlu0.b32.cont [14/16] 0.0, 128
        %2470 = vxpose.xlu0.b32.cont [15/16] 0.0, 128
        %2471 = vxpose.xlu0.b32.end [16/16] 0.0, 128
        %v2472 = vpop.trf.xlu0
        %v2473 = vpop.trf.xlu0
        %v2474 = vpop.trf.xlu0
        %v2475 = vpop.trf.xlu0
        %v2476 = vpop.trf.xlu0
        %v2477 = vpop.trf.xlu0
        %v2478 = vpop.trf.xlu0
        %v2479 = vpop.trf.xlu0
        %v2480 = vpop.trf.xlu0
        %v2481 = vpop.trf.xlu0
        %v2482 = vpop.trf.xlu0
        %v2483 = vpop.trf.xlu0
        %v2484 = vpop.trf.xlu0
        %v2485 = vpop.trf.xlu0
        %v2486 = vpop.trf.xlu0
        %v2487 = vpop.trf.xlu0
        %v2488 = vpack.c.bf16 %v2472, %v2440
        %v2489 = vld [vmem:[%s4] sm:$0xf]
        %v2490 = vld [vmem:[%s4 + $0x4] sm:$0xf]
        %v2491 = vld [vmem:[%s4 + $0x8] sm:$0xf]
        %v2492 = vld [vmem:[%s4 + $0xc] sm:$0xf]
        %v2493 = vld [vmem:[%s5] sm:$0x1]
        %v2495 = vlaneseq
        %v2496 = vshrl.u32 %v2495, 7
        %v2497 = vsub.s32 0, %v2496
        %v2498 = vrot.slane %v2493, %v2497
        %v2504 = vunpack.c.l.b16 %v2489
        %v2505 = vunpack.c.l.b16 %v2490
        %v2506 = vunpack.c.l.b16 %v2491
        %v2507 = vunpack.c.l.b16 %v2492
        %v2508 = vpack.c.b16 %v2505, %v2504
        %v2509 = vpack.c.b16 %v2507, %v2506
        %v2513 = vsel %vm459, %v2488, 0
        %2515 = vmatprep.subr.bf16.mxu0 0
        %2516 = vmatpush1.bf16.msra.mxu0 %v2508
        %2517 = vmatprep.subr.bf16.mxu0 0
        %2518 = vmatpush1.bf16.msra.mxu0 %v2509
        %2519 = vmatprep.subr.bf16.mxu0 0
        %2520 = vmatpush1.bf16.msra.mxu0 0
        %2521 = vmatprep.subr.bf16.mxu0 0
        %2522 = vmatpush1.bf16.msra.mxu0 0
        %2523 = vmatprep.subr.bf16.mxu0 0
        %2524 = vmatpush1.bf16.msra.mxu0 0
        %2525 = vmatprep.subr.bf16.mxu0 0
        %2526 = vmatpush1.bf16.msra.mxu0 0
        %2527 = vmatprep.subr.bf16.mxu0 0
        %2528 = vmatpush1.bf16.msra.mxu0 0
        %2529 = vmatprep.subr.bf16.mxu0 0
        %2530 = vmatpush1.bf16.msra.mxu0 0
        %2531 = vmatprep.subr.bf16.mxu0 0
        %2532 = vmatpush1.bf16.msra.mxu0 0
        %2533 = vmatprep.subr.bf16.mxu0 0
        %2534 = vmatpush1.bf16.msra.mxu0 0
        %2535 = vmatprep.subr.bf16.mxu0 0
        %2536 = vmatpush1.bf16.msra.mxu0 0
        %2537 = vmatprep.subr.bf16.mxu0 0
        %2538 = vmatpush1.bf16.msra.mxu0 0
        %2539 = vmatprep.subr.bf16.mxu0 0
        %2540 = vmatpush1.bf16.msra.mxu0 0
        %2541 = vmatprep.subr.bf16.mxu0 0
        %2542 = vmatpush1.bf16.msra.mxu0 0
        %2543 = vmatprep.subr.bf16.mxu0 0
        %2544 = vmatpush1.bf16.msra.mxu0 0
        %2545 = vmatprep.subr.bf16.mxu0 0
        %2546 = vmatpush1.bf16.msra.mxu0 0
        %2547 = vmatprep.mubr.bf16.mxu0 0
        %2548 = vmatmul.mubr.bf16.gmra.mrb[0].mxu0 %v2513
        %v2549 = vpop.f32.mrb[0].mxu0
        %v2550 = vadd.f32 %v2498, %v2549
        %v2551 = vpop.f32.mrb[0].mxu0
        %v2552 = vpop.f32.mrb[0].mxu0
        %v2553 = vadd.f32 %v2498, %v2552
        %v2554 = vpop.f32.mrb[0].mxu0
        %2555 = vdwg.mxu0
        %v2556 = vadd.f32 %v455, %v2550
        %v2557 = vadd.f32 %v456, %v2553
        %v2558 = vld [vmem:[%s6] sm:$0x1]
        %v2559 = vld [vmem:[%s7] sm:$0x1]
        %v2560 = vsel %vm459, %v2556, 0.0
        %2561 = vadd.xlane.f32.xlu0 %v2560
        %v2562 = vpop.xlane.xlu0 %2561
        %v2563 = vsel %vm459, %v2557, 0.0
        %2564 = vadd.xlane.f32.xlu0 %v2563
        %v2565 = vpop.xlane.xlu0 %2564
        %v2566 = vmul.f32 %v2562, %v466
        %v2567 = vmul.f32 %v2565, %v466
        %v2568 = vsub.f32 %v2556, %v2566
        %v2569 = vsub.f32 %v2557, %v2567
        %v2570 = vmul.f32 %v2568, %v2568
        %v2571 = vmul.f32 %v2569, %v2569
        %v2572 = vsel %vm459, %v2570, 0.0
        %2573 = vadd.xlane.f32.xlu0 %v2572
        %v2574 = vpop.xlane.xlu0 %2573
        %v2575 = vsel %vm459, %v2571, 0.0
        %2576 = vadd.xlane.f32.xlu0 %v2575
        %v2577 = vpop.xlane.xlu0 %2576
        %v2578 = vmul.f32 %v2574, %v466
        %v2579 = vmul.f32 %v2577, %v466
        %v2580 = vadd.f32 %v2578, 1e-05
        %v2581 = vadd.f32 %v2579, 1e-05
        %v2582 = vrsqrt.pop %v2580
        %v2583 = vrsqrt.pop %v2581
        %v2584 = vmul.f32 %v2568, %v2582
        %v2585 = vmul.f32 %v2569, %v2583
        %v2587 = vlaneseq
        %v2588 = vshrl.u32 %v2587, 7
        %v2589 = vsub.s32 0, %v2588
        %v2590 = vrot.slane %v2558, %v2589
        %v2592 = vmul.f32 %v2584, %v2590
        %v2593 = vmul.f32 %v2585, %v2590
        %v2595 = vlaneseq
        %v2596 = vshrl.u32 %v2595, 7
        %v2597 = vsub.s32 0, %v2596
        %v2598 = vrot.slane %v2559, %v2597
        %v2600 = vadd.f32 %v2592, %v2598
        %v2601 = vadd.f32 %v2593, %v2598
        %v2602 = vpack.c.bf16 %v2601, %v2600
        %v2603 = vld [vmem:[%s8] sm:$0xf]
        %v2604 = vld [vmem:[%s8 + $0x4] sm:$0xf]
        %v2605 = vld [vmem:[%s8 + $0x8] sm:$0xf]
        %v2606 = vld [vmem:[%s8 + $0xc] sm:$0xf]
        %v2607 = vld [vmem:[%s9] sm:$0x1]
        %v2609 = vlaneseq
        %v2610 = vshrl.u32 %v2609, 7
        %v2611 = vsub.s32 0, %v2610
        %v2612 = vrot.slane %v2607, %v2611
        %v2618 = vunpack.c.l.b16 %v2603
        %v2619 = vunpack.c.l.b16 %v2604
        %v2620 = vunpack.c.l.b16 %v2605
        %v2621 = vunpack.c.l.b16 %v2606
        %v2622 = vpack.c.b16 %v2619, %v2618
        %v2623 = vpack.c.b16 %v2621, %v2620
        %v2627 = vsel %vm459, %v2602, 0
        %2629 = vmatprep.subr.bf16.mxu0 0
        %2630 = vmatpush1.bf16.msra.mxu0 %v2622
        %2631 = vmatprep.subr.bf16.mxu0 0
        %2632 = vmatpush1.bf16.msra.mxu0 %v2623
        %2633 = vmatprep.subr.bf16.mxu0 0
        %2634 = vmatpush1.bf16.msra.mxu0 0
        %2635 = vmatprep.subr.bf16.mxu0 0
        %2636 = vmatpush1.bf16.msra.mxu0 0
        %2637 = vmatprep.subr.bf16.mxu0 0
        %2638 = vmatpush1.bf16.msra.mxu0 0
        %2639 = vmatprep.subr.bf16.mxu0 0
        %2640 = vmatpush1.bf16.msra.mxu0 0
        %2641 = vmatprep.subr.bf16.mxu0 0
        %2642 = vmatpush1.bf16.msra.mxu0 0
        %2643 = vmatprep.subr.bf16.mxu0 0
        %2644 = vmatpush1.bf16.msra.mxu0 0
        %2645 = vmatprep.subr.bf16.mxu0 0
        %2646 = vmatpush1.bf16.msra.mxu0 0
        %2647 = vmatprep.subr.bf16.mxu0 0
        %2648 = vmatpush1.bf16.msra.mxu0 0
        %2649 = vmatprep.subr.bf16.mxu0 0
        %2650 = vmatpush1.bf16.msra.mxu0 0
        %2651 = vmatprep.subr.bf16.mxu0 0
        %2652 = vmatpush1.bf16.msra.mxu0 0
        %2653 = vmatprep.subr.bf16.mxu0 0
        %2654 = vmatpush1.bf16.msra.mxu0 0
        %2655 = vmatprep.subr.bf16.mxu0 0
        %2656 = vmatpush1.bf16.msra.mxu0 0
        %2657 = vmatprep.subr.bf16.mxu0 0
        %2658 = vmatpush1.bf16.msra.mxu0 0
        %2659 = vmatprep.subr.bf16.mxu0 0
        %2660 = vmatpush1.bf16.msra.mxu0 0
        %2661 = vmatprep.mubr.bf16.mxu0 0
        %2662 = vmatmul.mubr.bf16.gmra.mrb[0].mxu0 %v2627
        %v2663 = vpop.f32.mrb[0].mxu0
        %v2664 = vadd.f32 %v2612, %v2663
        %v2665 = vpop.f32.mrb[0].mxu0
        %v2666 = vpop.f32.mrb[0].mxu0
        %v2667 = vadd.f32 %v2612, %v2666
        %v2668 = vpop.f32.mrb[0].mxu0
        %2669 = vdwg.mxu0
        %v2670 = vmul.f32 %v2664, 0.5
        %v2671 = vmul.f32 %v2667, 0.5
        %v2672 = vmul.f32 %v2664, 0.70710677
        %v2673 = vmul.f32 %v2667, 0.70710677
        %vm2674 = vcmp.ge.f32.partialorder %v2672, 0.0
        %vm2675 = vcmp.ge.f32.partialorder %v2673, 0.0
        %v2676 = vsel %vm2674, 1.0, -1.0
        %v2677 = vsel %vm2675, 1.0, -1.0
        %v2678 = vand.u32 2147483647, %v2672
        %v2679 = vand.u32 2147483647, %v2673
        %v2680 = vmul.f32 %v2678, 0.3275911
        %v2681 = vmul.f32 %v2679, 0.3275911
        %v2682 = vadd.f32 %v2680, 1.0
        %v2683 = vadd.f32 %v2681, 1.0
        %v2684 = vrcp.pop %v2682
        %v2685 = vmul.f32 1.0, %v2684
        %v2686 = vrcp.pop %v2683
        %v2687 = vmul.f32 1.0, %v2686
        %v2688 = vmul.f32 %v2685, 1.0614054
        %v2689 = vmul.f32 %v2687, 1.0614054
        %v2690 = vadd.f32 %v2688, -1.4531521
        %v2691 = vadd.f32 %v2689, -1.4531521
        %v2692 = vmul.f32 %v2690, %v2685
        %v2693 = vmul.f32 %v2691, %v2687
        %v2694 = vadd.f32 %v2692, 1.4214138
        %v2695 = vadd.f32 %v2693, 1.4214138
        %v2696 = vmul.f32 %v2694, %v2685
        %v2697 = vmul.f32 %v2695, %v2687
        %v2698 = vadd.f32 %v2696, -0.28449672
        %v2699 = vadd.f32 %v2697, -0.28449672
        %v2700 = vmul.f32 %v2698, %v2685
        %v2701 = vmul.f32 %v2699, %v2687
        %v2702 = vadd.f32 %v2700, 0.2548296
        %v2703 = vadd.f32 %v2701, 0.2548296
        %v2704 = vmul.f32 %v2702, %v2685
        %v2705 = vmul.f32 %v2703, %v2687
        %v2706 = vsub.f32 0.0, %v2678
        %v2707 = vsub.f32 0.0, %v2679
        %v2708 = vmul.f32 %v2706, %v2678
        %v2709 = vmul.f32 %v2707, %v2679
        %v2710 = vmul.f32 %v2708, 1.442695
        %v2711 = vpow.pop %v2710
        %v2712 = vmul.f32 %v2709, 1.442695
        %v2713 = vpow.pop %v2712
        %v2714 = vmul.f32 %v2704, %v2711
        %v2715 = vmul.f32 %v2705, %v2713
        %v2716 = vsub.f32 1.0, %v2714
        %v2717 = vsub.f32 1.0, %v2715
        %v2718 = vmul.f32 %v2676, %v2716
        %v2719 = vmul.f32 %v2677, %v2717
        %v2720 = vadd.f32 %v2718, 1.0
        %v2721 = vadd.f32 %v2719, 1.0
        %v2722 = vmul.f32 %v2670, %v2720
        %v2723 = vmul.f32 %v2671, %v2721
        %v2724 = vpack.c.bf16 %v2723, %v2722
        %v2725 = vld [vmem:[%s10] sm:$0xf]
        %v2726 = vld [vmem:[%s10 + $0x4] sm:$0xf]
        %v2727 = vld [vmem:[%s10 + $0x8] sm:$0xf]
        %v2728 = vld [vmem:[%s10 + $0xc] sm:$0xf]
        %v2729 = vld [vmem:[%s10 + $0x10] sm:$0xf]
        %v2730 = vld [vmem:[%s10 + $0x14] sm:$0xf]
        %v2731 = vld [vmem:[%s10 + $0x18] sm:$0xf]
        %v2732 = vld [vmem:[%s10 + $0x1c] sm:$0xf]
        %v2733 = vld [vmem:[%s10 + $0x20] sm:$0xf]
        %v2734 = vld [vmem:[%s10 + $0x24] sm:$0xf]
        %v2735 = vld [vmem:[%s10 + $0x28] sm:$0xf]
        %v2736 = vld [vmem:[%s10 + $0x2c] sm:$0xf]
        %v2737 = vld [vmem:[%s10 + $0x30] sm:$0xf]
        %v2738 = vld [vmem:[%s10 + $0x34] sm:$0xf]
        %v2739 = vld [vmem:[%s10 + $0x38] sm:$0xf]
        %v2740 = vld [vmem:[%s10 + $0x3c] sm:$0xf]
        %v2741 = vld [vmem:[%s11] sm:$0x1]
        %v2743 = vlaneseq
        %v2744 = vshrl.u32 %v2743, 7
        %v2745 = vsub.s32 0, %v2744
        %v2746 = vrot.slane %v2741, %v2745
        %v2764 = vunpack.c.l.b16 %v2725
        %v2765 = vunpack.c.l.b16 %v2726
        %v2766 = vunpack.c.l.b16 %v2727
        %v2767 = vunpack.c.l.b16 %v2728
        %v2768 = vunpack.c.l.b16 %v2729
        %v2769 = vunpack.c.l.b16 %v2730
        %v2770 = vunpack.c.l.b16 %v2731
        %v2771 = vunpack.c.l.b16 %v2732
        %v2772 = vunpack.c.l.b16 %v2733
        %v2773 = vunpack.c.l.b16 %v2734
        %v2774 = vunpack.c.l.b16 %v2735
        %v2775 = vunpack.c.l.b16 %v2736
        %v2776 = vunpack.c.l.b16 %v2737
        %v2777 = vunpack.c.l.b16 %v2738
        %v2778 = vunpack.c.l.b16 %v2739
        %v2779 = vunpack.c.l.b16 %v2740
        %v2780 = vpack.c.b16 %v2765, %v2764
        %v2781 = vpack.c.b16 %v2767, %v2766
        %v2782 = vpack.c.b16 %v2769, %v2768
        %v2783 = vpack.c.b16 %v2771, %v2770
        %v2784 = vpack.c.b16 %v2773, %v2772
        %v2785 = vpack.c.b16 %v2775, %v2774
        %v2786 = vpack.c.b16 %v2777, %v2776
        %v2787 = vpack.c.b16 %v2779, %v2778
        %2796 = vmatprep.subr.bf16.mxu0 0
        %2797 = vmatpush1.bf16.msra.mxu0 %v2780
        %2798 = vmatprep.subr.bf16.mxu0 0
        %2799 = vmatpush1.bf16.msra.mxu0 %v2781
        %2800 = vmatprep.subr.bf16.mxu0 0
        %2801 = vmatpush1.bf16.msra.mxu0 %v2782
        %2802 = vmatprep.subr.bf16.mxu0 0
        %2803 = vmatpush1.bf16.msra.mxu0 %v2783
        %2804 = vmatprep.subr.bf16.mxu0 0
        %2805 = vmatpush1.bf16.msra.mxu0 %v2784
        %2806 = vmatprep.subr.bf16.mxu0 0
        %2807 = vmatpush1.bf16.msra.mxu0 %v2785
        %2808 = vmatprep.subr.bf16.mxu0 0
        %2809 = vmatpush1.bf16.msra.mxu0 %v2786
        %2810 = vmatprep.subr.bf16.mxu0 0
        %2811 = vmatpush1.bf16.msra.mxu0 %v2787
        %2812 = vmatprep.subr.bf16.mxu0 0
        %2813 = vmatpush1.bf16.msra.mxu0 0
        %2814 = vmatprep.subr.bf16.mxu0 0
        %2815 = vmatpush1.bf16.msra.mxu0 0
        %2816 = vmatprep.subr.bf16.mxu0 0
        %2817 = vmatpush1.bf16.msra.mxu0 0
        %2818 = vmatprep.subr.bf16.mxu0 0
        %2819 = vmatpush1.bf16.msra.mxu0 0
        %2820 = vmatprep.subr.bf16.mxu0 0
        %2821 = vmatpush1.bf16.msra.mxu0 0
        %2822 = vmatprep.subr.bf16.mxu0 0
        %2823 = vmatpush1.bf16.msra.mxu0 0
        %2824 = vmatprep.subr.bf16.mxu0 0
        %2825 = vmatpush1.bf16.msra.mxu0 0
        %2826 = vmatprep.subr.bf16.mxu0 0
        %2827 = vmatpush1.bf16.msra.mxu0 0
        %2828 = vmatprep.mubr.bf16.mxu0 0
        %2829 = vmatmul.mubr.bf16.gmra.mrb[0].mxu0 %v2724
        %v2830 = vpop.f32.mrb[0].mxu0
        %v2831 = vadd.f32 %v2746, %v2830
        %v2832 = vpop.f32.mrb[0].mxu0
        %v2833 = vpop.f32.mrb[0].mxu0
        %v2834 = vadd.f32 %v2746, %v2833
        %v2835 = vpop.f32.mrb[0].mxu0
        %2836 = vdwg.mxu0
        %v2837 = vadd.f32 %v2556, %v2831
        %v2838 = vadd.f32 %v2557, %v2834
        %2839 = vst.msk [vmem:[%s438] sm:$0xff] %vm459, %v2837
        %2840 = vst.msk [vmem:[%s438 + $0x8] sm:$0xff] %vm459, %v2838
        %s2841 = sand.u32 %s296, 1
        %s2842 = scalar_lea.sflag [#allocation3], %s2841
        %s2843 = sand.u32 %s296, 1
        %s2844 = smul.addr %s2843, 16
        %s2845 = scalar_lea.vmem [#allocation2], %s2844
        %s2846 = sand.u32 %s322, 1
        %s2847 = scalar_lea.sflag [#allocation5], %s2846
        %s2848 = sand.u32 %s322, 1
        %s2849 = smul.addr %s2848, 8
        %s2850 = scalar_lea.vmem [#allocation4], %s2849
        // Predicated region
        $region69: #{tpu_custom_call.1} parent=67 // pred_check
          %p2851 = pneg %p306
        $region70: #{tpu_custom_call.1} parent=67 // pred_check_branch
          %2853 = sbr.rel (%p2851) target = $region72
        $region71: #{tpu_custom_call.1} parent=67 // pred_region
          %s2854 = smul.u32 2, %s31
          %s2856 = ssub.s32 256, 256
          %2857 = vsyncadd %s2842, %s2856
          %s2858 = smul.addr %s2854, 128
          %s2859 = scalar_lea.hbm %s12, %s2858
          %s2860 = sshll.u32 %s2845, 4
          %s2861 = int_to_ptr.vmem [resolvable:$true] %s2860
          %2866 = dma.vmem_to_hbm [thread:$0]  %s2861, 256, %s2859, %s2842, 128, 128, 8
        $region72: #{tpu_custom_call.1} parent=67 // pred_fallthru
          _
        // Predicated region
        $region73: #{tpu_custom_call.1} parent=67 // pred_check
          %p2867 = pneg %p332
        $region74: #{tpu_custom_call.1} parent=67 // pred_check_branch
          %2869 = sbr.rel (%p2867) target = $region76
        $region75: #{tpu_custom_call.1} parent=67 // pred_region
          %s2870 = smul.u32 2, %s31
          %s2872 = ssub.s32 128, 128
          %2873 = vsyncadd %s2847, %s2872
          %s2874 = smul.addr %s2870, 64
          %s2875 = scalar_lea.hbm %s13, %s2874
          %s2876 = sshll.u32 %s2850, 4
          %s2877 = int_to_ptr.vmem [resolvable:$true] %s2876
          %2882 = dma.vmem_to_hbm [thread:$0]  %s2877, 128, %s2875, %s2847, 64, 64, 4
        $region76: #{tpu_custom_call.1} parent=67 // pred_fallthru
          _
      $region68: #{tpu_custom_call.1} parent=5 // pred_fallthru
        _
      %p2883 = scmp.le.s32.totalorder 2, %s26
      // Predicated region
      $region77: #{tpu_custom_call.1} parent=5 // pred_check
        %p2884 = pneg %p2883
      $region78: #{tpu_custom_call.1} parent=5 // pred_check_branch
        %2886 = sbr.rel (%p2884) target = $region80
      $region79: #{tpu_custom_call.1} parent=5 // pred_region
        %s2887 = ssub.s32 %s26, 2
        // Predicated region
        $region81: #{tpu_custom_call.1} parent=79 // pred_check
          %p2888 = pneg %p312
        $region82: #{tpu_custom_call.1} parent=79 // pred_check_branch
          %2890 = sbr.rel (%p2888) target = $region84
        $region83: #{tpu_custom_call.1} parent=79 // pred_region
          %s2891 = sand.u32 %s297, 1
          %s2892 = scalar_lea.sflag [#allocation3], %s2891
          %s2893 = sand.u32 %s297, 1
          %s2894 = smul.addr %s2893, 16
          %s2895 = scalar_lea.vmem [#allocation2], %s2894
          %2896 = dma.done %s2892, 256
        $region84: #{tpu_custom_call.1} parent=79 // pred_fallthru
          _
        // Predicated region
        $region85: #{tpu_custom_call.1} parent=79 // pred_check
          %p2897 = pneg %p338
        $region86: #{tpu_custom_call.1} parent=79 // pred_check_branch
          %2899 = sbr.rel (%p2897) target = $region88
        $region87: #{tpu_custom_call.1} parent=79 // pred_region
          %s2900 = sand.u32 %s323, 1
          %s2901 = scalar_lea.sflag [#allocation5], %s2900
          %s2902 = sand.u32 %s323, 1
          %s2903 = smul.addr %s2902, 8
          %s2904 = scalar_lea.vmem [#allocation4], %s2903
          %2905 = dma.done %s2901, 128
        $region88: #{tpu_custom_call.1} parent=79 // pred_fallthru
          _
      $region80: #{tpu_custom_call.1} parent=5 // pred_fallthru
        _
    $region6: #{tpu_custom_call.1} parent=1 // loop_footer
      %s30 = sadd.s32 1, %s26
    $region7: #{tpu_custom_call.1} parent=1 // loop_footer_branch
      %25 = sbr.rel target = $region3
    $region8: #{tpu_custom_call.1} parent=1 // loop_exit
      _
    %2906 = vsyncpa [#allocation3], 1
    %s2907 = scalar_lea.sflag [#allocation3], 1
    %2908 = vsyncpa %s2907, 1
    %2909 = vsyncpa [#allocation5], 1
    %s2910 = scalar_lea.sflag [#allocation5], 1
    %2911 = vsyncpa %s2910, 1

</llo_original>
